<compile_context>
chip_gen: v6e
topology: v6e:2x2x1
jax: 0.10.0
libtpu: 0.0.40
codegen_flags: <defaults>
</compile_context>

<pallas_src>
import jax
import jax.numpy as jnp
from jax import lax
from jax.experimental import pallas as pl
from jax.experimental.pallas import tpu as pltpu


def _im2col(xp_ref, H, W, C):
    """(H*W, 9*C) patch matrix from a zero-padded (H+2, W+2, C) VMEM scratch."""
    cols = []
    for kh in range(3):
        for kw in range(3):
            win = xp_ref[kh:kh + H, kw:kw + W, :]       # (H, W, C)
            cols.append(win.reshape(H * W, C))          # minor-dim-preserving reshape
    return jnp.concatenate(cols, axis=-1)               # (H*W, 9*C)


def fused_encoder_kernel(x_ref, w1_ref, b1_ref, w2_ref, b2_ref, o_ref,
                         xp1_ref, y1p_ref, y_scr, m_scr):
    # x_ref : (1, H, W, Cin)            unpadded input image
    # w1_ref: (9*Cin, C1)  b1_ref: (1, C1)
    # w2_ref: (9*C1, C2)   b2_ref: (1, C2)
    # o_ref : (1, H//2, (W//2)*C2)      lane-dense pooled output block
    # xp1_ref: (H+2, W+2, Cin) f32      conv1 padded input (in-kernel padding)
    # y1p_ref: (H+2, W+2, C1)  f32      conv1 output, padded, stays in VMEM (fusion)
    # y_scr  : (H*W, C2) f32            pooling scratch (W direction)
    # m_scr  : (H, W//2, C2) f32        pooling scratch (H direction)
    H, W, Cin = x_ref.shape[1], x_ref.shape[2], x_ref.shape[3]
    C1 = w1_ref.shape[1]
    C2 = w2_ref.shape[1]

    # ---- stage 1: conv1 (3x3, pad=1) as ONE K=9*Cin matmul, + bias + ReLU ----
    xp1_ref[...] = jnp.zeros_like(xp1_ref)                       # zero halo (cheap, per-image: safe under megacore)
    xp1_ref[pl.ds(1, H), pl.ds(1, W), :] = x_ref[0].astype(jnp.float32)
    p1 = _im2col(xp1_ref, H, W, Cin)                             # (H*W, 9*Cin)
    y1 = jnp.dot(p1, w1_ref[...], preferred_element_type=jnp.float32)
    y1 = jnp.maximum(y1 + b1_ref[...], 0.0)                      # (H*W, C1)

    # ---- stage 2: conv2 (3x3, pad=1); intermediate never leaves VMEM ----
    y1p_ref[...] = jnp.zeros_like(y1p_ref)
    y1p_ref[pl.ds(1, H), pl.ds(1, W), :] = y1.reshape(H, W, C1)
    p2 = _im2col(y1p_ref, H, W, C1)                              # (H*W, 9*C1)
    y2 = jnp.dot(p2, w2_ref[...], preferred_element_type=jnp.float32)
    y2 = jnp.maximum(y2 + b2_ref[...], 0.0)                      # (H*W, C2), rows = h*W + w

    # ---- 2x2 / stride-2 max pool (ReLU already applied, matching reference order) ----
    y_scr[...] = y2
    a = y_scr[pl.ds(0, (H * W) // 2, stride=2)]                  # (h, even w)
    b = y_scr[pl.ds(1, (H * W) // 2, stride=2)]                  # (h, odd  w)
    m1 = jnp.maximum(a, b)                                       # rows = h*(W//2) + wp
    m_scr[...] = m1.reshape(H, W // 2, C2)
    top = m_scr[pl.ds(0, H // 2, stride=2)]                      # even h
    bot = m_scr[pl.ds(1, H // 2, stride=2)]                      # odd  h
    pooled = jnp.maximum(top, bot)                               # (H//2, W//2, C2)

    # ---- lane-dense store: pack (wp, c) onto the 128-lane axis -> one dense (8,128) store ----
    o_ref[0] = jnp.concatenate(
        [pooled[:, wp, :] for wp in range(W // 2)], axis=-1
    ).astype(o_ref.dtype)


def testnet_encoder_forward(x_nhwc, params):
    """Mirrors TestNetEncoder.forward: conv1+relu1 -> conv2+relu2+pool, fused in one kernel."""
    w1, b1, w2, b2 = params
    B, H, W, Cin = x_nhwc.shape
    C1 = w1.shape[-1]
    C2 = w2.shape[-1]
    assert H % 2 == 0 and W % 2 == 0, "2x2/2 max-pool assumes even H and W"
    assert w1.shape[:2] == (3, 3) and w2.shape[:2] == (3, 3)

    w1r = w1.reshape(9 * Cin, C1)          # im2col weight layout (free, wrapper-side)
    w2r = w2.reshape(9 * C1, C2)

    out = pl.pallas_call(
        fused_encoder_kernel,
        out_shape=jax.ShapeDtypeStruct((B, H // 2, (W // 2) * C2), x_nhwc.dtype),
        grid_spec=pltpu.PrefetchScalarGridSpec(
            num_scalar_prefetch=0,
            grid=(B,),
            in_specs=[
                pl.BlockSpec((1, H, W, Cin), lambda i: (i, 0, 0, 0)),
                pl.BlockSpec((9 * Cin, C1), lambda i: (0, 0)),
                pl.BlockSpec((1, C1), lambda i: (0, 0)),
                pl.BlockSpec((9 * C1, C2), lambda i: (0, 0)),
                pl.BlockSpec((1, C2), lambda i: (0, 0)),
            ],
            out_specs=pl.BlockSpec((1, H // 2, (W // 2) * C2), lambda i: (i, 0, 0)),
            scratch_shapes=[
                pltpu.VMEM((H + 2, W + 2, Cin), jnp.float32),
                pltpu.VMEM((H + 2, W + 2, C1), jnp.float32),
                pltpu.VMEM((H * W, C2), jnp.float32),
                pltpu.VMEM((H, W // 2, C2), jnp.float32),
            ],
        ),
        compiler_params=pltpu.CompilerParams(dimension_semantics=("parallel",)),
    )(x_nhwc, w1r, b1.reshape(1, C1), w2r, b2.reshape(1, C2))

    # Free metadata reshape back to NHWC (B, H//2, W//2, C2).
    return out.reshape(B, H // 2, W // 2, C2)


def reference_forward(x_nhwc, params):
    w1, b1, w2, b2 = params
    dn1 = lax.conv_dimension_numbers(x_nhwc.shape, w1.shape, ("NHWC", "HWIO", "NHWC"))
    y = lax.conv_general_dilated(x_nhwc, w1, (1, 1), "SAME", dimension_numbers=dn1)
    y = jnp.maximum(y + b1, 0.0)
    dn2 = lax.conv_dimension_numbers(y.shape, w2.shape, ("NHWC", "HWIO", "NHWC"))
    z = lax.conv_general_dilated(y, w2, (1, 1), "SAME", dimension_numbers=dn2)
    z = jnp.maximum(z + b2, 0.0)
    z = lax.reduce_window(z, -jnp.inf, lax.max, (1, 2, 2, 1), (1, 2, 2, 1), "VALID")
    return z


if __name__ == "__main__":
    B, Cin, H, W = 2, 4, 16, 16
    C1, C2 = 8, 16

    key = jax.random.PRNGKey(0)
    kx, kw1, kb1, kw2, kb2 = jax.random.split(key, 5)

    # PyTorch-style NCHW input, transposed to NHWC for the kernel (glue only).
    x_nchw = jax.random.normal(kx, (B, Cin, H, W), jnp.float32)
    x_nhwc = jnp.transpose(x_nchw, (0, 2, 3, 1))

    # Deterministic synthetic parameters (HWIO conv weights).
    w1 = 0.1 * jax.random.normal(kw1, (3, 3, Cin, C1), jnp.float32)
    b1 = 0.1 * jax.random.normal(kb1, (C1,), jnp.float32)
    w2 = 0.1 * jax.random.normal(kw2, (3, 3, C1, C2), jnp.float32)
    b2 = 0.1 * jax.random.normal(kb2, (C2,), jnp.float32)
    params = (w1, b1, w2, b2)

    out = jax.block_until_ready(testnet_encoder_forward(x_nhwc, params))
    ref = jax.block_until_ready(reference_forward(x_nhwc, params))

    assert out.shape == (B, H // 2, W // 2, C2)
    if not jnp.allclose(out, ref, atol=1e-4, rtol=1e-4):
        raise AssertionError("Pallas output does not match JAX reference")

    print("KERNEL_OK")
</pallas_src>

<mosaic_0001>
module attributes {stable_mosaic.version = 11 : i64} {
  func.func @fused_encoder_kernel(%arg0: i32, %arg1: memref<1x16x16x4xf32, #tpu.memory_space<vmem>>, %arg2: memref<36x8xf32, #tpu.memory_space<vmem>>, %arg3: memref<1x8xf32, #tpu.memory_space<vmem>>, %arg4: memref<72x16xf32, #tpu.memory_space<vmem>>, %arg5: memref<1x16xf32, #tpu.memory_space<vmem>>, %arg6: memref<1x8x128xf32, #tpu.memory_space<vmem>>, %arg7: memref<18x18x4xf32, #tpu.memory_space<vmem>>, %arg8: memref<18x18x8xf32, #tpu.memory_space<vmem>>, %arg9: memref<256x16xf32, #tpu.memory_space<vmem>>, %arg10: memref<16x8x16xf32, #tpu.memory_space<vmem>>) attributes {dimension_semantics = [#tpu.dimension_semantics<parallel>], iteration_bounds = array<i64: 2>, scalar_prefetch = 0 : i64, scratch_operands = 4 : i64, tpu.core_type = #tpu.core_type<tc>, window_params = [{transform_indices = @transform_0, window_bounds = array<i64: 1, 16, 16, 4>}, {pipeline_mode = #tpu.pipeline_mode<synchronous>, transform_indices = @transform_1, window_bounds = array<i64: 36, 8>}, {pipeline_mode = #tpu.pipeline_mode<synchronous>, transform_indices = @transform_2, window_bounds = array<i64: 1, 8>}, {pipeline_mode = #tpu.pipeline_mode<synchronous>, transform_indices = @transform_3, window_bounds = array<i64: 72, 16>}, {pipeline_mode = #tpu.pipeline_mode<synchronous>, transform_indices = @transform_4, window_bounds = array<i64: 1, 16>}, {transform_indices = @transform_5, window_bounds = array<i64: 1, 8, 128>}]} {
    %cst = arith.constant 0.000000e+00 : f32
    %0 = vector.broadcast %cst : f32 to vector<18x18x4xf32>
    %c0 = arith.constant 0 : index
    %c0_0 = arith.constant 0 : index
    %c0_1 = arith.constant 0 : index
    %1 = vector.load %arg7[%c0, %c0_0, %c0_1] : memref<18x18x4xf32, #tpu.memory_space<vmem>>, vector<18x18x4xf32>
    tpu.vector_store %arg7[%c0, %c0_0, %c0_1], %0 {strides = array<i32>} : memref<18x18x4xf32, #tpu.memory_space<vmem>>, vector<18x18x4xf32>,
    %c0_2 = arith.constant 0 : index
    %c0_3 = arith.constant 0 : index
    %c0_4 = arith.constant 0 : index
    %c0_5 = arith.constant 0 : index
    %2 = vector.load %arg1[%c0_2, %c0_3, %c0_4, %c0_5] : memref<1x16x16x4xf32, #tpu.memory_space<vmem>>, vector<1x16x16x4xf32>
    %3 = vector.shape_cast %2 : vector<1x16x16x4xf32> to vector<16x16x4xf32>
    %c1 = arith.constant 1 : index
    %c1_6 = arith.constant 1 : index
    %c0_7 = arith.constant 0 : index
    %4 = vector.load %arg7[%c1, %c1_6, %c0_7] : memref<18x18x4xf32, #tpu.memory_space<vmem>>, vector<16x16x4xf32>
    tpu.vector_store %arg7[%c1, %c1_6, %c0_7], %3 {strides = array<i32>} : memref<18x18x4xf32, #tpu.memory_space<vmem>>, vector<16x16x4xf32>,
    %c0_8 = arith.constant 0 : index
    %c0_9 = arith.constant 0 : index
    %c0_10 = arith.constant 0 : index
    %5 = vector.load %arg7[%c0_8, %c0_9, %c0_10] : memref<18x18x4xf32, #tpu.memory_space<vmem>>, vector<16x16x4xf32>
    %6 = vector.shape_cast %5 : vector<16x16x4xf32> to vector<256x4xf32>
    %c0_11 = arith.constant 0 : index
    %c1_12 = arith.constant 1 : index
    %c0_13 = arith.constant 0 : index
    %7 = vector.load %arg7[%c0_11, %c1_12, %c0_13] : memref<18x18x4xf32, #tpu.memory_space<vmem>>, vector<16x16x4xf32>
    %8 = vector.shape_cast %7 : vector<16x16x4xf32> to vector<256x4xf32>
    %c0_14 = arith.constant 0 : index
    %c2 = arith.constant 2 : index
    %c0_15 = arith.constant 0 : index
    %9 = vector.load %arg7[%c0_14, %c2, %c0_15] : memref<18x18x4xf32, #tpu.memory_space<vmem>>, vector<16x16x4xf32>
    %10 = vector.shape_cast %9 : vector<16x16x4xf32> to vector<256x4xf32>
    %c1_16 = arith.constant 1 : index
    %c0_17 = arith.constant 0 : index
    %c0_18 = arith.constant 0 : index
    %11 = vector.load %arg7[%c1_16, %c0_17, %c0_18] : memref<18x18x4xf32, #tpu.memory_space<vmem>>, vector<16x16x4xf32>
    %12 = vector.shape_cast %11 : vector<16x16x4xf32> to vector<256x4xf32>
    %c1_19 = arith.constant 1 : index
    %c1_20 = arith.constant 1 : index
    %c0_21 = arith.constant 0 : index
    %13 = vector.load %arg7[%c1_19, %c1_20, %c0_21] : memref<18x18x4xf32, #tpu.memory_space<vmem>>, vector<16x16x4xf32>
    %14 = vector.shape_cast %13 : vector<16x16x4xf32> to vector<256x4xf32>
    %c1_22 = arith.constant 1 : index
    %c2_23 = arith.constant 2 : index
    %c0_24 = arith.constant 0 : index
    %15 = vector.load %arg7[%c1_22, %c2_23, %c0_24] : memref<18x18x4xf32, #tpu.memory_space<vmem>>, vector<16x16x4xf32>
    %16 = vector.shape_cast %15 : vector<16x16x4xf32> to vector<256x4xf32>
    %c2_25 = arith.constant 2 : index
    %c0_26 = arith.constant 0 : index
    %c0_27 = arith.constant 0 : index
    %17 = vector.load %arg7[%c2_25, %c0_26, %c0_27] : memref<18x18x4xf32, #tpu.memory_space<vmem>>, vector<16x16x4xf32>
    %18 = vector.shape_cast %17 : vector<16x16x4xf32> to vector<256x4xf32>
    %c2_28 = arith.constant 2 : index
    %c1_29 = arith.constant 1 : index
    %c0_30 = arith.constant 0 : index
    %19 = vector.load %arg7[%c2_28, %c1_29, %c0_30] : memref<18x18x4xf32, #tpu.memory_space<vmem>>, vector<16x16x4xf32>
    %20 = vector.shape_cast %19 : vector<16x16x4xf32> to vector<256x4xf32>
    %c2_31 = arith.constant 2 : index
    %c2_32 = arith.constant 2 : index
    %c0_33 = arith.constant 0 : index
    %21 = vector.load %arg7[%c2_31, %c2_32, %c0_33] : memref<18x18x4xf32, #tpu.memory_space<vmem>>, vector<16x16x4xf32>
    %22 = vector.shape_cast %21 : vector<16x16x4xf32> to vector<256x4xf32>
    %23 = tpu.concatenate %6, %8, %10, %12, %14, %16, %18, %20, %22 in 1 : vector<256x4xf32>, vector<256x4xf32>, vector<256x4xf32>, vector<256x4xf32>, vector<256x4xf32>, vector<256x4xf32>, vector<256x4xf32>, vector<256x4xf32>, vector<256x4xf32> -> vector<256x36xf32>
    %c0_34 = arith.constant 0 : index
    %c0_35 = arith.constant 0 : index
    %24 = vector.load %arg2[%c0_34, %c0_35] : memref<36x8xf32, #tpu.memory_space<vmem>>, vector<36x8xf32>
    %cst_36 = arith.constant dense<0.000000e+00> : vector<256x8xf32>
    %25 = tpu.matmul %23, %24, %cst_36 {dimension_numbers = #tpu.dot_dimension_numbers<[1], [0], [0], [1], [0, 0, 1, 1], [], []>} : vector<256x36xf32>, vector<36x8xf32>, vector<256x8xf32> -> vector<256x8xf32>
    %c0_37 = arith.constant 0 : index
    %c0_38 = arith.constant 0 : index
    %26 = vector.load %arg3[%c0_37, %c0_38] : memref<1x8xf32, #tpu.memory_space<vmem>>, vector<1x8xf32>
    %27 = vector.broadcast %26 : vector<1x8xf32> to vector<256x8xf32>
    %28 = arith.addf %25, %27 : vector<256x8xf32>
    %cst_39 = arith.constant 0.000000e+00 : f32
    %29 = vector.broadcast %cst_39 : f32 to vector<256x8xf32>
    %30 = arith.maximumf %28, %29 : vector<256x8xf32>
    %cst_40 = arith.constant 0.000000e+00 : f32
    %31 = vector.broadcast %cst_40 : f32 to vector<18x18x8xf32>
    %c0_41 = arith.constant 0 : index
    %c0_42 = arith.constant 0 : index
    %c0_43 = arith.constant 0 : index
    %32 = vector.load %arg8[%c0_41, %c0_42, %c0_43] : memref<18x18x8xf32, #tpu.memory_space<vmem>>, vector<18x18x8xf32>
    tpu.vector_store %arg8[%c0_41, %c0_42, %c0_43], %31 {strides = array<i32>} : memref<18x18x8xf32, #tpu.memory_space<vmem>>, vector<18x18x8xf32>,
    %33 = vector.shape_cast %30 : vector<256x8xf32> to vector<16x16x8xf32>
    %c1_44 = arith.constant 1 : index
    %c1_45 = arith.constant 1 : index
    %c0_46 = arith.constant 0 : index
    %34 = vector.load %arg8[%c1_44, %c1_45, %c0_46] : memref<18x18x8xf32, #tpu.memory_space<vmem>>, vector<16x16x8xf32>
    tpu.vector_store %arg8[%c1_44, %c1_45, %c0_46], %33 {strides = array<i32>} : memref<18x18x8xf32, #tpu.memory_space<vmem>>, vector<16x16x8xf32>,
    %c0_47 = arith.constant 0 : index
    %c0_48 = arith.constant 0 : index
    %c0_49 = arith.constant 0 : index
    %35 = vector.load %arg8[%c0_47, %c0_48, %c0_49] : memref<18x18x8xf32, #tpu.memory_space<vmem>>, vector<16x16x8xf32>
    %36 = vector.shape_cast %35 : vector<16x16x8xf32> to vector<256x8xf32>
    %c0_50 = arith.constant 0 : index
    %c1_51 = arith.constant 1 : index
    %c0_52 = arith.constant 0 : index
    %37 = vector.load %arg8[%c0_50, %c1_51, %c0_52] : memref<18x18x8xf32, #tpu.memory_space<vmem>>, vector<16x16x8xf32>
    %38 = vector.shape_cast %37 : vector<16x16x8xf32> to vector<256x8xf32>
    %c0_53 = arith.constant 0 : index
    %c2_54 = arith.constant 2 : index
    %c0_55 = arith.constant 0 : index
    %39 = vector.load %arg8[%c0_53, %c2_54, %c0_55] : memref<18x18x8xf32, #tpu.memory_space<vmem>>, vector<16x16x8xf32>
    %40 = vector.shape_cast %39 : vector<16x16x8xf32> to vector<256x8xf32>
    %c1_56 = arith.constant 1 : index
    %c0_57 = arith.constant 0 : index
    %c0_58 = arith.constant 0 : index
    %41 = vector.load %arg8[%c1_56, %c0_57, %c0_58] : memref<18x18x8xf32, #tpu.memory_space<vmem>>, vector<16x16x8xf32>
    %42 = vector.shape_cast %41 : vector<16x16x8xf32> to vector<256x8xf32>
    %c1_59 = arith.constant 1 : index
    %c1_60 = arith.constant 1 : index
    %c0_61 = arith.constant 0 : index
    %43 = vector.load %arg8[%c1_59, %c1_60, %c0_61] : memref<18x18x8xf32, #tpu.memory_space<vmem>>, vector<16x16x8xf32>
    %44 = vector.shape_cast %43 : vector<16x16x8xf32> to vector<256x8xf32>
    %c1_62 = arith.constant 1 : index
    %c2_63 = arith.constant 2 : index
    %c0_64 = arith.constant 0 : index
    %45 = vector.load %arg8[%c1_62, %c2_63, %c0_64] : memref<18x18x8xf32, #tpu.memory_space<vmem>>, vector<16x16x8xf32>
    %46 = vector.shape_cast %45 : vector<16x16x8xf32> to vector<256x8xf32>
    %c2_65 = arith.constant 2 : index
    %c0_66 = arith.constant 0 : index
    %c0_67 = arith.constant 0 : index
    %47 = vector.load %arg8[%c2_65, %c0_66, %c0_67] : memref<18x18x8xf32, #tpu.memory_space<vmem>>, vector<16x16x8xf32>
    %48 = vector.shape_cast %47 : vector<16x16x8xf32> to vector<256x8xf32>
    %c2_68 = arith.constant 2 : index
    %c1_69 = arith.constant 1 : index
    %c0_70 = arith.constant 0 : index
    %49 = vector.load %arg8[%c2_68, %c1_69, %c0_70] : memref<18x18x8xf32, #tpu.memory_space<vmem>>, vector<16x16x8xf32>
    %50 = vector.shape_cast %49 : vector<16x16x8xf32> to vector<256x8xf32>
    %c2_71 = arith.constant 2 : index
    %c2_72 = arith.constant 2 : index
    %c0_73 = arith.constant 0 : index
    %51 = vector.load %arg8[%c2_71, %c2_72, %c0_73] : memref<18x18x8xf32, #tpu.memory_space<vmem>>, vector<16x16x8xf32>
    %52 = vector.shape_cast %51 : vector<16x16x8xf32> to vector<256x8xf32>
    %53 = tpu.concatenate %36, %38, %40, %42, %44, %46, %48, %50, %52 in 1 : vector<256x8xf32>, vector<256x8xf32>, vector<256x8xf32>, vector<256x8xf32>, vector<256x8xf32>, vector<256x8xf32>, vector<256x8xf32>, vector<256x8xf32>, vector<256x8xf32> -> vector<256x72xf32>
    %c0_74 = arith.constant 0 : index
    %c0_75 = arith.constant 0 : index
    %54 = vector.load %arg4[%c0_74, %c0_75] : memref<72x16xf32, #tpu.memory_space<vmem>>, vector<72x16xf32>
    %cst_76 = arith.constant dense<0.000000e+00> : vector<256x16xf32>
    %55 = tpu.matmul %53, %54, %cst_76 {dimension_numbers = #tpu.dot_dimension_numbers<[1], [0], [0], [1], [0, 0, 1, 1], [], []>} : vector<256x72xf32>, vector<72x16xf32>, vector<256x16xf32> -> vector<256x16xf32>
    %c0_77 = arith.constant 0 : index
    %c0_78 = arith.constant 0 : index
    %56 = vector.load %arg5[%c0_77, %c0_78] : memref<1x16xf32, #tpu.memory_space<vmem>>, vector<1x16xf32>
    %57 = vector.broadcast %56 : vector<1x16xf32> to vector<256x16xf32>
    %58 = arith.addf %55, %57 : vector<256x16xf32>
    %cst_79 = arith.constant 0.000000e+00 : f32
    %59 = vector.broadcast %cst_79 : f32 to vector<256x16xf32>
    %60 = arith.maximumf %58, %59 : vector<256x16xf32>
    %c0_80 = arith.constant 0 : index
    %c0_81 = arith.constant 0 : index
    %61 = vector.load %arg9[%c0_80, %c0_81] : memref<256x16xf32, #tpu.memory_space<vmem>>, vector<256x16xf32>
    tpu.vector_store %arg9[%c0_80, %c0_81], %60 {strides = array<i32>} : memref<256x16xf32, #tpu.memory_space<vmem>>, vector<256x16xf32>,
    %c0_82 = arith.constant 0 : index
    %c0_83 = arith.constant 0 : index
    %62 = tpu.strided_load %arg9[%c0_82, %c0_83] {strides = array<i32: 2, 1>} : memref<256x16xf32, #tpu.memory_space<vmem>>, vector<128x16xf32>
    %c1_84 = arith.constant 1 : index
    %c0_85 = arith.constant 0 : index
    %63 = tpu.strided_load %arg9[%c1_84, %c0_85] {strides = array<i32: 2, 1>} : memref<256x16xf32, #tpu.memory_space<vmem>>, vector<128x16xf32>
    %64 = arith.maximumf %62, %63 : vector<128x16xf32>
    %65 = vector.shape_cast %64 : vector<128x16xf32> to vector<16x8x16xf32>
    %c0_86 = arith.constant 0 : index
    %c0_87 = arith.constant 0 : index
    %c0_88 = arith.constant 0 : index
    %66 = vector.load %arg10[%c0_86, %c0_87, %c0_88] : memref<16x8x16xf32, #tpu.memory_space<vmem>>, vector<16x8x16xf32>
    tpu.vector_store %arg10[%c0_86, %c0_87, %c0_88], %65 {strides = array<i32>} : memref<16x8x16xf32, #tpu.memory_space<vmem>>, vector<16x8x16xf32>,
    %c0_89 = arith.constant 0 : index
    %c0_90 = arith.constant 0 : index
    %c0_91 = arith.constant 0 : index
    %67 = tpu.strided_load %arg10[%c0_89, %c0_90, %c0_91] {strides = array<i32: 2, 1, 1>} : memref<16x8x16xf32, #tpu.memory_space<vmem>>, vector<8x8x16xf32>
    %c1_92 = arith.constant 1 : index
    %c0_93 = arith.constant 0 : index
    %c0_94 = arith.constant 0 : index
    %68 = tpu.strided_load %arg10[%c1_92, %c0_93, %c0_94] {strides = array<i32: 2, 1, 1>} : memref<16x8x16xf32, #tpu.memory_space<vmem>>, vector<8x8x16xf32>
    %69 = arith.maximumf %67, %68 : vector<8x8x16xf32>
    %70 = vector.extract_strided_slice %69 {offsets = [0, 0, 0], sizes = [8, 1, 16], strides = [1, 1, 1]} : vector<8x8x16xf32> to vector<8x1x16xf32>
    %71 = vector.shape_cast %70 : vector<8x1x16xf32> to vector<8x16xf32>
    %72 = vector.extract_strided_slice %69 {offsets = [0, 1, 0], sizes = [8, 1, 16], strides = [1, 1, 1]} : vector<8x8x16xf32> to vector<8x1x16xf32>
    %73 = vector.shape_cast %72 : vector<8x1x16xf32> to vector<8x16xf32>
    %74 = vector.extract_strided_slice %69 {offsets = [0, 2, 0], sizes = [8, 1, 16], strides = [1, 1, 1]} : vector<8x8x16xf32> to vector<8x1x16xf32>
    %75 = vector.shape_cast %74 : vector<8x1x16xf32> to vector<8x16xf32>
    %76 = vector.extract_strided_slice %69 {offsets = [0, 3, 0], sizes = [8, 1, 16], strides = [1, 1, 1]} : vector<8x8x16xf32> to vector<8x1x16xf32>
    %77 = vector.shape_cast %76 : vector<8x1x16xf32> to vector<8x16xf32>
    %78 = vector.extract_strided_slice %69 {offsets = [0, 4, 0], sizes = [8, 1, 16], strides = [1, 1, 1]} : vector<8x8x16xf32> to vector<8x1x16xf32>
    %79 = vector.shape_cast %78 : vector<8x1x16xf32> to vector<8x16xf32>
    %80 = vector.extract_strided_slice %69 {offsets = [0, 5, 0], sizes = [8, 1, 16], strides = [1, 1, 1]} : vector<8x8x16xf32> to vector<8x1x16xf32>
    %81 = vector.shape_cast %80 : vector<8x1x16xf32> to vector<8x16xf32>
    %82 = vector.extract_strided_slice %69 {offsets = [0, 6, 0], sizes = [8, 1, 16], strides = [1, 1, 1]} : vector<8x8x16xf32> to vector<8x1x16xf32>
    %83 = vector.shape_cast %82 : vector<8x1x16xf32> to vector<8x16xf32>
    %84 = vector.extract_strided_slice %69 {offsets = [0, 7, 0], sizes = [8, 1, 16], strides = [1, 1, 1]} : vector<8x8x16xf32> to vector<8x1x16xf32>
    %85 = vector.shape_cast %84 : vector<8x1x16xf32> to vector<8x16xf32>
    %86 = tpu.concatenate %71, %73, %75, %77, %79, %81, %83, %85 in 1 : vector<8x16xf32>, vector<8x16xf32>, vector<8x16xf32>, vector<8x16xf32>, vector<8x16xf32>, vector<8x16xf32>, vector<8x16xf32>, vector<8x16xf32> -> vector<8x128xf32>
    %c0_95 = arith.constant 0 : index
    %c0_96 = arith.constant 0 : index
    %c0_97 = arith.constant 0 : index
    %87 = vector.load %arg6[%c0_95, %c0_96, %c0_97] : memref<1x8x128xf32, #tpu.memory_space<vmem>>, vector<1x8x128xf32>
    %88 = vector.shape_cast %87 : vector<1x8x128xf32> to vector<8x128xf32>
    %89 = vector.shape_cast %86 : vector<8x128xf32> to vector<1x8x128xf32>
    tpu.vector_store %arg6[%c0_95, %c0_96, %c0_97], %89 {strides = array<i32>} : memref<1x8x128xf32, #tpu.memory_space<vmem>>, vector<1x8x128xf32>,
    return
  }
  func.func @transform_0(%arg0: i32) -> (i32, i32, i32, i32) {
    %c0_i32 = arith.constant 0 : i32
    %c0_i32_0 = arith.constant 0 : i32
    %c0_i32_1 = arith.constant 0 : i32
    %c0_i32_2 = arith.constant 0 : i32
    return %arg0, %c0_i32, %c0_i32_0, %c0_i32_1 : i32, i32, i32, i32
  }
  func.func @transform_1(%arg0: i32) -> (i32, i32) {
    %c0_i32 = arith.constant 0 : i32
    %c0_i32_0 = arith.constant 0 : i32
    %c0_i32_1 = arith.constant 0 : i32
    return %c0_i32, %c0_i32_0 : i32, i32
  }
  func.func @transform_2(%arg0: i32) -> (i32, i32) {
    %c0_i32 = arith.constant 0 : i32
    %c0_i32_0 = arith.constant 0 : i32
    %c0_i32_1 = arith.constant 0 : i32
    return %c0_i32, %c0_i32_0 : i32, i32
  }
  func.func @transform_3(%arg0: i32) -> (i32, i32) {
    %c0_i32 = arith.constant 0 : i32
    %c0_i32_0 = arith.constant 0 : i32
    %c0_i32_1 = arith.constant 0 : i32
    return %c0_i32, %c0_i32_0 : i32, i32
  }
  func.func @transform_4(%arg0: i32) -> (i32, i32) {
    %c0_i32 = arith.constant 0 : i32
    %c0_i32_0 = arith.constant 0 : i32
    %c0_i32_1 = arith.constant 0 : i32
    return %c0_i32, %c0_i32_0 : i32, i32
  }
  func.func @transform_5(%arg0: i32) -> (i32, i32, i32) {
    %c0_i32 = arith.constant 0 : i32
    %c0_i32_0 = arith.constant 0 : i32
    %c0_i32_1 = arith.constant 0 : i32
    return %arg0, %c0_i32, %c0_i32_0 : i32, i32, i32
  }
}

</mosaic_0001>

<llo_original>
// kernel: tpu_custom_call.1
$region0: #{tpu_custom_call.1}
  #allocation0 [shape = 'u32[]', space=smem, size = 0x4, offset = 0x4, fixed_abs, tag = 'smem constant byte address 0x4 - core index']
  #allocation1 [shape = 'u32[144,128]{1,0:T(1,128)}', space=vmem, size = 0x12000, scoped, tag = 'internal scratch']
  #allocation2 [shape = 'f32[18,18,4]{2,1,0:T(8,128)}', space=vmem, size = 0x36000, scoped, tag = 'scratch operand']
  #allocation3 [shape = 'f32[18,18,8]{2,1,0:T(8,128)}', space=vmem, size = 0x36000, scoped, tag = 'scratch operand']
  #allocation4 [shape = 'f32[256,16]{1,0:T(8,128)}', space=vmem, size = 0x20000, scoped, tag = 'scratch operand']
  #allocation5 [shape = 'f32[16,8,16]{2,1,0:T(8,128)}', space=vmem, size = 0x10000, scoped, tag = 'scratch operand']
  %s0 = inlined_call_operand.vmem [shape: f32[2,16,16,4], index: 0, kind: input, shape index: {}]
  %s1 = inlined_call_operand.vmem [shape: f32[36,8], index: 1, kind: input, shape index: {}]
  %s2 = inlined_call_operand.vmem [shape: f32[1,8], index: 2, kind: input, shape index: {}]
  %s3 = inlined_call_operand.vmem [shape: f32[72,16], index: 3, kind: input, shape index: {}]
  %s4 = inlined_call_operand.vmem [shape: f32[1,16], index: 4, kind: input, shape index: {}]
  %s5 = inlined_call_operand.hbm [shape: f32[2,8,128], index: 5, kind: output, shape index: {}]
  %s6 = sld [smem:[#allocation0]]
  $region53: #{tpu_custom_call.1} parent=0
    _
  %s8 = ssub.s32 1, %s6
  %s9 = scalar_select 0, %s8, %s6
  $region1: #{tpu_custom_call.1} parent=0
    #allocation6 [shape = 'u8[8192]{0}', space=vmem, size = 0x2000, scoped, tag = 'output window, operand 0']
    #allocation7 [shape = 's32[2]{0}', space=sflag, size = 0x8, scoped, tag = 'scoped memory for tpu_custom_call.1']
    %10 = vsyncpa [#allocation7], 0
    %s11 = scalar_lea.sflag [#allocation7], 1
    %12 = vsyncpa %s11, 0
    loop: start=0, step=1, limit=4
    $region2: #{tpu_custom_call.1} parent=1 // loop_pre_header
      _
    $region3: #{tpu_custom_call.1} parent=1 // loop_header
      %s14 = sphi 0, %s18
      %p15 = scmp.ge.s32.totalorder %s14, 4
      %s24 = sphi 0, %s26
      %s27 = sphi 0, %s24
      %s28 = sphi 0, %s27
      %s44 = sphi 0, %s28
      %s48 = sphi 0, %s48
      %s50 = sphi 0, %s48
      %s51 = sphi 0, %s50
      %s65 = sphi 0, %s51
      %s69 = sphi 0, %s69
      %s71 = sphi 0, %s69
      %s72 = sphi 0, %s71
      %s86 = sphi 0, %s72
      %s90 = sphi 0, %s90
      %s92 = sphi 0, %s90
      %s93 = sphi 0, %s92
      %s107 = sphi 0, %s93
      %s111 = sphi 0, %s111
      %s113 = sphi 0, %s111
      %s114 = sphi 0, %s113
      %s128 = sphi 0, %s114
      %s134 = sphi 0, %s136
      %s137 = sphi 0, %s134
      %s138 = sphi 0, %s137
      %s154 = sphi 0, %s138
    $region4: #{tpu_custom_call.1} parent=1 // loop_header_branch
      %17 = sbr.rel (%p15) target = $region8
    $region5: #{tpu_custom_call.1} parent=1 // loop_body
      %s19 = ssub.s32 %s14, 1
      %s20 = ssub.s32 %s14, 2
      %s21 = sadd.s32 %s14, 1
      %s22 = ssub.s32 %s14, %s21
      %p23 = scmp.eq.s32.totalorder %s22, 0
      %s25 = sadd.s32 %s24, 1
      %s26 = scalar_select %p23, %s24, %s25
      %p29 = pneg %p23
      %p30 = scmp.eq.s32.totalorder %s14, 1
      %p31 = por %p29, %p30
      %p32 = scmp.ne.s32.totalorder %s24, %s27
      %p33 = scmp.eq.s32.totalorder %s14, 0
      %p34 = por %p32, %p33
      %p35 = scmp.ne.s32.totalorder %s24, %s27
      %p36 = scmp.eq.s32.totalorder %s19, 1
      %p37 = por %p35, %p36
      %p38 = scmp.ne.s32.totalorder %s27, %s28
      %p39 = scmp.eq.s32.totalorder %s19, 0
      %p40 = por %p38, %p39
      %p41 = scmp.ne.s32.totalorder %s27, %s28
      %p42 = scmp.eq.s32.totalorder %s20, 1
      %p43 = por %p41, %p42
      %p45 = scmp.ne.s32.totalorder %s28, %s44
      %p46 = scmp.eq.s32.totalorder %s20, 0
      %p47 = por %p45, %p46
      %s49 = sadd.s32 %s48, 1
      %p52 = scmp.eq.s32.totalorder %s14, 1
      %p53 = scmp.ne.s32.totalorder %s48, %s50
      %p54 = scmp.eq.s32.totalorder %s14, 0
      %p55 = por %p53, %p54
      %p56 = scmp.ne.s32.totalorder %s48, %s50
      %p57 = scmp.eq.s32.totalorder %s19, 1
      %p58 = por %p56, %p57
      %p59 = scmp.ne.s32.totalorder %s50, %s51
      %p60 = scmp.eq.s32.totalorder %s19, 0
      %p61 = por %p59, %p60
      %p62 = scmp.ne.s32.totalorder %s50, %s51
      %p63 = scmp.eq.s32.totalorder %s20, 1
      %p64 = por %p62, %p63
      %p66 = scmp.ne.s32.totalorder %s51, %s65
      %p67 = scmp.eq.s32.totalorder %s20, 0
      %p68 = por %p66, %p67
      %s70 = sadd.s32 %s69, 1
      %p73 = scmp.eq.s32.totalorder %s14, 1
      %p74 = scmp.ne.s32.totalorder %s69, %s71
      %p75 = scmp.eq.s32.totalorder %s14, 0
      %p76 = por %p74, %p75
      %p77 = scmp.ne.s32.totalorder %s69, %s71
      %p78 = scmp.eq.s32.totalorder %s19, 1
      %p79 = por %p77, %p78
      %p80 = scmp.ne.s32.totalorder %s71, %s72
      %p81 = scmp.eq.s32.totalorder %s19, 0
      %p82 = por %p80, %p81
      %p83 = scmp.ne.s32.totalorder %s71, %s72
      %p84 = scmp.eq.s32.totalorder %s20, 1
      %p85 = por %p83, %p84
      %p87 = scmp.ne.s32.totalorder %s72, %s86
      %p88 = scmp.eq.s32.totalorder %s20, 0
      %p89 = por %p87, %p88
      %s91 = sadd.s32 %s90, 1
      %p94 = scmp.eq.s32.totalorder %s14, 1
      %p95 = scmp.ne.s32.totalorder %s90, %s92
      %p96 = scmp.eq.s32.totalorder %s14, 0
      %p97 = por %p95, %p96
      %p98 = scmp.ne.s32.totalorder %s90, %s92
      %p99 = scmp.eq.s32.totalorder %s19, 1
      %p100 = por %p98, %p99
      %p101 = scmp.ne.s32.totalorder %s92, %s93
      %p102 = scmp.eq.s32.totalorder %s19, 0
      %p103 = por %p101, %p102
      %p104 = scmp.ne.s32.totalorder %s92, %s93
      %p105 = scmp.eq.s32.totalorder %s20, 1
      %p106 = por %p104, %p105
      %p108 = scmp.ne.s32.totalorder %s93, %s107
      %p109 = scmp.eq.s32.totalorder %s20, 0
      %p110 = por %p108, %p109
      %s112 = sadd.s32 %s111, 1
      %p115 = scmp.eq.s32.totalorder %s14, 1
      %p116 = scmp.ne.s32.totalorder %s111, %s113
      %p117 = scmp.eq.s32.totalorder %s14, 0
      %p118 = por %p116, %p117
      %p119 = scmp.ne.s32.totalorder %s111, %s113
      %p120 = scmp.eq.s32.totalorder %s19, 1
      %p121 = por %p119, %p120
      %p122 = scmp.ne.s32.totalorder %s113, %s114
      %p123 = scmp.eq.s32.totalorder %s19, 0
      %p124 = por %p122, %p123
      %p125 = scmp.ne.s32.totalorder %s113, %s114
      %p126 = scmp.eq.s32.totalorder %s20, 1
      %p127 = por %p125, %p126
      %p129 = scmp.ne.s32.totalorder %s114, %s128
      %p130 = scmp.eq.s32.totalorder %s20, 0
      %p131 = por %p129, %p130
      %s132 = ssub.s32 %s14, %s21
      %p133 = scmp.eq.s32.totalorder %s132, 0
      %s135 = sadd.s32 %s134, 1
      %s136 = scalar_select %p133, %s134, %s135
      %p139 = pneg %p133
      %p140 = scmp.eq.s32.totalorder %s14, 1
      %p141 = por %p139, %p140
      %p142 = scmp.ne.s32.totalorder %s134, %s137
      %p143 = scmp.eq.s32.totalorder %s14, 0
      %p144 = por %p142, %p143
      %p145 = scmp.ne.s32.totalorder %s134, %s137
      %p146 = scmp.eq.s32.totalorder %s19, 1
      %p147 = por %p145, %p146
      %p148 = scmp.ne.s32.totalorder %s137, %s138
      %p149 = scmp.eq.s32.totalorder %s19, 0
      %p150 = por %p148, %p149
      %p151 = scmp.ne.s32.totalorder %s137, %s138
      %p152 = scmp.eq.s32.totalorder %s20, 1
      %p153 = por %p151, %p152
      %p155 = scmp.ne.s32.totalorder %s138, %s154
      %p156 = scmp.eq.s32.totalorder %s20, 0
      %p157 = por %p155, %p156
      %p158 = scmp.le.s32.totalorder 1, %s14
      %p159 = scmp.lt.s32.totalorder %s14, 3
      %p160 = pnand %p158, %p159
      %p161 = pneg %p160
      // Predicated region
      $region9: #{tpu_custom_call.1} parent=5 // pred_check
        _
      $region10: #{tpu_custom_call.1} parent=5 // pred_check_branch
        %163 = sbr.rel (%p160) target = $region12
      $region11: #{tpu_custom_call.1} parent=5 // pred_region
        %s164 = ssub.s32 %s14, 1
        // Predicated region
        $region13: #{tpu_custom_call.1} parent=11 // pred_check
          %p165 = pneg %p61
        $region14: #{tpu_custom_call.1} parent=11 // pred_check_branch
          %167 = sbr.rel (%p165) target = $region16
        $region15: #{tpu_custom_call.1} parent=11 // pred_region
          _
        $region16: #{tpu_custom_call.1} parent=11 // pred_fallthru
          _
        // Predicated region
        $region17: #{tpu_custom_call.1} parent=11 // pred_check
          %p168 = pneg %p82
        $region18: #{tpu_custom_call.1} parent=11 // pred_check_branch
          %170 = sbr.rel (%p168) target = $region20
        $region19: #{tpu_custom_call.1} parent=11 // pred_region
          _
        $region20: #{tpu_custom_call.1} parent=11 // pred_fallthru
          _
        // Predicated region
        $region21: #{tpu_custom_call.1} parent=11 // pred_check
          %p171 = pneg %p103
        $region22: #{tpu_custom_call.1} parent=11 // pred_check_branch
          %173 = sbr.rel (%p171) target = $region24
        $region23: #{tpu_custom_call.1} parent=11 // pred_region
          _
        $region24: #{tpu_custom_call.1} parent=11 // pred_fallthru
          _
        // Predicated region
        $region25: #{tpu_custom_call.1} parent=11 // pred_check
          %p174 = pneg %p124
        $region26: #{tpu_custom_call.1} parent=11 // pred_check_branch
          %176 = sbr.rel (%p174) target = $region28
        $region27: #{tpu_custom_call.1} parent=11 // pred_region
          _
        $region28: #{tpu_custom_call.1} parent=11 // pred_fallthru
          _
      $region12: #{tpu_custom_call.1} parent=5 // pred_fallthru
        _
      %p177 = scmp.lt.s32.totalorder %s14, 2
      // Predicated region
      $region29: #{tpu_custom_call.1} parent=5 // pred_check
        %p178 = pneg %p177
      $region30: #{tpu_custom_call.1} parent=5 // pred_check_branch
        %180 = sbr.rel (%p178) target = $region32
      $region31: #{tpu_custom_call.1} parent=5 // pred_region
        // Predicated region
        $region33: #{tpu_custom_call.1} parent=31 // pred_check
          %p181 = pneg %p34
        $region34: #{tpu_custom_call.1} parent=31 // pred_check_branch
          %183 = sbr.rel (%p181) target = $region36
        $region35: #{tpu_custom_call.1} parent=31 // pred_region
          %p184 = scmp.lt.s32.totalorder %s14, 1
          %s185 = scalar_select %p184, %s14, 1
          %s186 = smul.addr %s185, 32
          %s187 = smul.addr %s186, 8
          %s188 = scalar_lea.vmem %s0, %s187
        $region36: #{tpu_custom_call.1} parent=31 // pred_fallthru
          _
      $region32: #{tpu_custom_call.1} parent=5 // pred_fallthru
        _
      %p189 = scmp.le.s32.totalorder 1, %s14
      %p190 = scmp.lt.s32.totalorder %s14, 3
      %p191 = pnand %p189, %p190
      %p192 = pneg %p191
      // Predicated region
      $region37: #{tpu_custom_call.1} parent=5 // pred_check
        _
      $region38: #{tpu_custom_call.1} parent=5 // pred_check_branch
        %194 = sbr.rel (%p191) target = $region40
      $region39: #{tpu_custom_call.1} parent=5 // pred_region
        %s195 = ssub.s32 %s14, 1
        %p196 = scmp.lt.s32.totalorder %s19, 1
        %s197 = scalar_select %p196, %s19, 1
        %s198 = smul.addr %s197, 32
        %s199 = smul.addr %s198, 8
        %s200 = scalar_lea.vmem %s0, %s199
        %p201 = pneg %p40
        %p202 = pneg %p37
        %p203 = pneg %p61
        %p204 = pneg %p58
        %p205 = pneg %p82
        %p206 = pneg %p79
        %p207 = pneg %p103
        %p208 = pneg %p100
        %p209 = pneg %p124
        %p210 = pneg %p121
        %p211 = pneg %p150
        %p212 = pneg %p147
        %s213 = sand.u32 %s137, 1
        %s214 = scalar_lea.sflag [#allocation7], %s213
        %s215 = sand.u32 %s137, 1
        %s216 = smul.addr %s215, 8
        %s217 = scalar_lea.vmem [#allocation6], %s216
        %p218 = scmp.lt.s32.totalorder %s19, 1
        %s219 = scalar_select %p218, %s19, 1
        %s220 = smul.addr %s219, 32
        %s221 = smul.addr %s220, 8
        %s222 = scalar_lea.vmem %s0, %s221
        %vm223 = vcmask 31744
        %224 = vst.msk [vmem:[#allocation2] sm:$0xff] %vm223, 0.0
        %225 = vst.msk [vmem:[#allocation2 + $0x8] sm:$0xff] %vm223, 0.0
        %vm226 = vcmask 25600
        %227 = vst.msk [vmem:[#allocation2 + $0x10] sm:$0x3] %vm226, 0.0
        %228 = vst.msk [vmem:[#allocation2 + $0x18] sm:$0xff] %vm223, 0.0
        %229 = vst.msk [vmem:[#allocation2 + $0x20] sm:$0xff] %vm223, 0.0
        %230 = vst.msk [vmem:[#allocation2 + $0x28] sm:$0x3] %vm226, 0.0
        %231 = vst.msk [vmem:[#allocation2 + $0x30] sm:$0xff] %vm223, 0.0
        %232 = vst.msk [vmem:[#allocation2 + $0x38] sm:$0xff] %vm223, 0.0
        %233 = vst.msk [vmem:[#allocation2 + $0x40] sm:$0x3] %vm226, 0.0
        %234 = vst.msk [vmem:[#allocation2 + $0x48] sm:$0xff] %vm223, 0.0
        %235 = vst.msk [vmem:[#allocation2 + $0x50] sm:$0xff] %vm223, 0.0
        %236 = vst.msk [vmem:[#allocation2 + $0x58] sm:$0x3] %vm226, 0.0
        %237 = vst.msk [vmem:[#allocation2 + $0x60] sm:$0xff] %vm223, 0.0
        %238 = vst.msk [vmem:[#allocation2 + $0x68] sm:$0xff] %vm223, 0.0
        %239 = vst.msk [vmem:[#allocation2 + $0x70] sm:$0x3] %vm226, 0.0
        %240 = vst.msk [vmem:[#allocation2 + $0x78] sm:$0xff] %vm223, 0.0
        %241 = vst.msk [vmem:[#allocation2 + $0x80] sm:$0xff] %vm223, 0.0
        %242 = vst.msk [vmem:[#allocation2 + $0x88] sm:$0x3] %vm226, 0.0
        %243 = vst.msk [vmem:[#allocation2 + $0x90] sm:$0xff] %vm223, 0.0
        %244 = vst.msk [vmem:[#allocation2 + $0x98] sm:$0xff] %vm223, 0.0
        %245 = vst.msk [vmem:[#allocation2 + $0xa0] sm:$0x3] %vm226, 0.0
        %246 = vst.msk [vmem:[#allocation2 + $0xa8] sm:$0xff] %vm223, 0.0
        %247 = vst.msk [vmem:[#allocation2 + $0xb0] sm:$0xff] %vm223, 0.0
        %248 = vst.msk [vmem:[#allocation2 + $0xb8] sm:$0x3] %vm226, 0.0
        %249 = vst.msk [vmem:[#allocation2 + $0xc0] sm:$0xff] %vm223, 0.0
        %250 = vst.msk [vmem:[#allocation2 + $0xc8] sm:$0xff] %vm223, 0.0
        %251 = vst.msk [vmem:[#allocation2 + $0xd0] sm:$0x3] %vm226, 0.0
        %252 = vst.msk [vmem:[#allocation2 + $0xd8] sm:$0xff] %vm223, 0.0
        %253 = vst.msk [vmem:[#allocation2 + $0xe0] sm:$0xff] %vm223, 0.0
        %254 = vst.msk [vmem:[#allocation2 + $0xe8] sm:$0x3] %vm226, 0.0
        %255 = vst.msk [vmem:[#allocation2 + $0xf0] sm:$0xff] %vm223, 0.0
        %256 = vst.msk [vmem:[#allocation2 + $0xf8] sm:$0xff] %vm223, 0.0
        %257 = vst.msk [vmem:[#allocation2 + $0x100] sm:$0x3] %vm226, 0.0
        %258 = vst.msk [vmem:[#allocation2 + $0x108] sm:$0xff] %vm223, 0.0
        %259 = vst.msk [vmem:[#allocation2 + $0x110] sm:$0xff] %vm223, 0.0
        %260 = vst.msk [vmem:[#allocation2 + $0x118] sm:$0x3] %vm226, 0.0
        %261 = vst.msk [vmem:[#allocation2 + $0x120] sm:$0xff] %vm223, 0.0
        %262 = vst.msk [vmem:[#allocation2 + $0x128] sm:$0xff] %vm223, 0.0
        %263 = vst.msk [vmem:[#allocation2 + $0x130] sm:$0x3] %vm226, 0.0
        %264 = vst.msk [vmem:[#allocation2 + $0x138] sm:$0xff] %vm223, 0.0
        %265 = vst.msk [vmem:[#allocation2 + $0x140] sm:$0xff] %vm223, 0.0
        %266 = vst.msk [vmem:[#allocation2 + $0x148] sm:$0x3] %vm226, 0.0
        %267 = vst.msk [vmem:[#allocation2 + $0x150] sm:$0xff] %vm223, 0.0
        %268 = vst.msk [vmem:[#allocation2 + $0x158] sm:$0xff] %vm223, 0.0
        %269 = vst.msk [vmem:[#allocation2 + $0x160] sm:$0x3] %vm226, 0.0
        %270 = vst.msk [vmem:[#allocation2 + $0x168] sm:$0xff] %vm223, 0.0
        %271 = vst.msk [vmem:[#allocation2 + $0x170] sm:$0xff] %vm223, 0.0
        %272 = vst.msk [vmem:[#allocation2 + $0x178] sm:$0x3] %vm226, 0.0
        %273 = vst.msk [vmem:[#allocation2 + $0x180] sm:$0xff] %vm223, 0.0
        %274 = vst.msk [vmem:[#allocation2 + $0x188] sm:$0xff] %vm223, 0.0
        %275 = vst.msk [vmem:[#allocation2 + $0x190] sm:$0x3] %vm226, 0.0
        %276 = vst.msk [vmem:[#allocation2 + $0x198] sm:$0xff] %vm223, 0.0
        %277 = vst.msk [vmem:[#allocation2 + $0x1a0] sm:$0xff] %vm223, 0.0
        %278 = vst.msk [vmem:[#allocation2 + $0x1a8] sm:$0x3] %vm226, 0.0
        %v279 = vld [vmem:[%s222] sm:$0xff]
        %v280 = vld [vmem:[%s222 + $0x8] sm:$0xff]
        %v281 = vld [vmem:[%s222 + $0x10] sm:$0xff]
        %v282 = vld [vmem:[%s222 + $0x18] sm:$0xff]
        %v283 = vld [vmem:[%s222 + $0x20] sm:$0xff]
        %v284 = vld [vmem:[%s222 + $0x28] sm:$0xff]
        %v285 = vld [vmem:[%s222 + $0x30] sm:$0xff]
        %v286 = vld [vmem:[%s222 + $0x38] sm:$0xff]
        %v287 = vld [vmem:[%s222 + $0x40] sm:$0xff]
        %v288 = vld [vmem:[%s222 + $0x48] sm:$0xff]
        %v289 = vld [vmem:[%s222 + $0x50] sm:$0xff]
        %v290 = vld [vmem:[%s222 + $0x58] sm:$0xff]
        %v291 = vld [vmem:[%s222 + $0x60] sm:$0xff]
        %v292 = vld [vmem:[%s222 + $0x68] sm:$0xff]
        %v293 = vld [vmem:[%s222 + $0x70] sm:$0xff]
        %v294 = vld [vmem:[%s222 + $0x78] sm:$0xff]
        %v295 = vld [vmem:[%s222 + $0x80] sm:$0xff]
        %v296 = vld [vmem:[%s222 + $0x88] sm:$0xff]
        %v297 = vld [vmem:[%s222 + $0x90] sm:$0xff]
        %v298 = vld [vmem:[%s222 + $0x98] sm:$0xff]
        %v299 = vld [vmem:[%s222 + $0xa0] sm:$0xff]
        %v300 = vld [vmem:[%s222 + $0xa8] sm:$0xff]
        %v301 = vld [vmem:[%s222 + $0xb0] sm:$0xff]
        %v302 = vld [vmem:[%s222 + $0xb8] sm:$0xff]
        %v303 = vld [vmem:[%s222 + $0xc0] sm:$0xff]
        %v304 = vld [vmem:[%s222 + $0xc8] sm:$0xff]
        %v305 = vld [vmem:[%s222 + $0xd0] sm:$0xff]
        %v306 = vld [vmem:[%s222 + $0xd8] sm:$0xff]
        %v307 = vld [vmem:[%s222 + $0xe0] sm:$0xff]
        %v308 = vld [vmem:[%s222 + $0xe8] sm:$0xff]
        %v309 = vld [vmem:[%s222 + $0xf0] sm:$0xff]
        %v310 = vld [vmem:[%s222 + $0xf8] sm:$0xff]
        %s311 = scalar_lea.vmem [#allocation2], 24
        %312 = vst.msk [vmem:[%s311 + $0x1] sm:$0xff] %vm223, %v279
        %313 = vst.msk [vmem:[%s311 + $0x9] sm:$0xff] %vm223, %v280
        %314 = vst.msk [vmem:[%s311 + $0x19] sm:$0xff] %vm223, %v281
        %315 = vst.msk [vmem:[%s311 + $0x21] sm:$0xff] %vm223, %v282
        %316 = vst.msk [vmem:[%s311 + $0x31] sm:$0xff] %vm223, %v283
        %317 = vst.msk [vmem:[%s311 + $0x39] sm:$0xff] %vm223, %v284
        %318 = vst.msk [vmem:[%s311 + $0x49] sm:$0xff] %vm223, %v285
        %319 = vst.msk [vmem:[%s311 + $0x51] sm:$0xff] %vm223, %v286
        %320 = vst.msk [vmem:[%s311 + $0x61] sm:$0xff] %vm223, %v287
        %321 = vst.msk [vmem:[%s311 + $0x69] sm:$0xff] %vm223, %v288
        %322 = vst.msk [vmem:[%s311 + $0x79] sm:$0xff] %vm223, %v289
        %323 = vst.msk [vmem:[%s311 + $0x81] sm:$0xff] %vm223, %v290
        %324 = vst.msk [vmem:[%s311 + $0x91] sm:$0xff] %vm223, %v291
        %325 = vst.msk [vmem:[%s311 + $0x99] sm:$0xff] %vm223, %v292
        %326 = vst.msk [vmem:[%s311 + $0xa9] sm:$0xff] %vm223, %v293
        %327 = vst.msk [vmem:[%s311 + $0xb1] sm:$0xff] %vm223, %v294
        %328 = vst.msk [vmem:[%s311 + $0xc1] sm:$0xff] %vm223, %v295
        %329 = vst.msk [vmem:[%s311 + $0xc9] sm:$0xff] %vm223, %v296
        %330 = vst.msk [vmem:[%s311 + $0xd9] sm:$0xff] %vm223, %v297
        %331 = vst.msk [vmem:[%s311 + $0xe1] sm:$0xff] %vm223, %v298
        %332 = vst.msk [vmem:[%s311 + $0xf1] sm:$0xff] %vm223, %v299
        %333 = vst.msk [vmem:[%s311 + $0xf9] sm:$0xff] %vm223, %v300
        %334 = vst.msk [vmem:[%s311 + $0x109] sm:$0xff] %vm223, %v301
        %335 = vst.msk [vmem:[%s311 + $0x111] sm:$0xff] %vm223, %v302
        %336 = vst.msk [vmem:[%s311 + $0x121] sm:$0xff] %vm223, %v303
        %337 = vst.msk [vmem:[%s311 + $0x129] sm:$0xff] %vm223, %v304
        %338 = vst.msk [vmem:[%s311 + $0x139] sm:$0xff] %vm223, %v305
        %339 = vst.msk [vmem:[%s311 + $0x141] sm:$0xff] %vm223, %v306
        %340 = vst.msk [vmem:[%s311 + $0x151] sm:$0xff] %vm223, %v307
        %341 = vst.msk [vmem:[%s311 + $0x159] sm:$0xff] %vm223, %v308
        %342 = vst.msk [vmem:[%s311 + $0x169] sm:$0xff] %vm223, %v309
        %343 = vst.msk [vmem:[%s311 + $0x171] sm:$0xff] %vm223, %v310
        %v344 = vld [vmem:[#allocation2] sm:$0xff]
        %v345 = vld [vmem:[#allocation2 + $0x8] sm:$0xff]
        %v346 = vld [vmem:[#allocation2 + $0x18] sm:$0xff]
        %v347 = vld [vmem:[#allocation2 + $0x20] sm:$0xff]
        %v348 = vld [vmem:[#allocation2 + $0x30] sm:$0xff]
        %v349 = vld [vmem:[#allocation2 + $0x38] sm:$0xff]
        %v350 = vld [vmem:[#allocation2 + $0x48] sm:$0xff]
        %v351 = vld [vmem:[#allocation2 + $0x50] sm:$0xff]
        %v352 = vld [vmem:[#allocation2 + $0x60] sm:$0xff]
        %v353 = vld [vmem:[#allocation2 + $0x68] sm:$0xff]
        %v354 = vld [vmem:[#allocation2 + $0x78] sm:$0xff]
        %v355 = vld [vmem:[#allocation2 + $0x80] sm:$0xff]
        %v356 = vld [vmem:[#allocation2 + $0x90] sm:$0xff]
        %v357 = vld [vmem:[#allocation2 + $0x98] sm:$0xff]
        %v358 = vld [vmem:[#allocation2 + $0xa8] sm:$0xff]
        %v359 = vld [vmem:[#allocation2 + $0xb0] sm:$0xff]
        %v360 = vld [vmem:[#allocation2 + $0xc0] sm:$0xff]
        %v361 = vld [vmem:[#allocation2 + $0xc8] sm:$0xff]
        %v362 = vld [vmem:[#allocation2 + $0xd8] sm:$0xff]
        %v363 = vld [vmem:[#allocation2 + $0xe0] sm:$0xff]
        %v364 = vld [vmem:[#allocation2 + $0xf0] sm:$0xff]
        %v365 = vld [vmem:[#allocation2 + $0xf8] sm:$0xff]
        %v366 = vld [vmem:[#allocation2 + $0x108] sm:$0xff]
        %v367 = vld [vmem:[#allocation2 + $0x110] sm:$0xff]
        %v368 = vld [vmem:[#allocation2 + $0x120] sm:$0xff]
        %v369 = vld [vmem:[#allocation2 + $0x128] sm:$0xff]
        %v370 = vld [vmem:[#allocation2 + $0x138] sm:$0xff]
        %v371 = vld [vmem:[#allocation2 + $0x140] sm:$0xff]
        %v372 = vld [vmem:[#allocation2 + $0x150] sm:$0xff]
        %v373 = vld [vmem:[#allocation2 + $0x158] sm:$0xff]
        %v374 = vld [vmem:[#allocation2 + $0x168] sm:$0xff]
        %v375 = vld [vmem:[#allocation2 + $0x170] sm:$0xff]
        %v376 = vld [vmem:[#allocation2 + $0x1] sm:$0xff]
        %v377 = vld [vmem:[#allocation2 + $0x9] sm:$0xff]
        %v378 = vld [vmem:[#allocation2 + $0x19] sm:$0xff]
        %v379 = vld [vmem:[#allocation2 + $0x21] sm:$0xff]
        %v380 = vld [vmem:[#allocation2 + $0x31] sm:$0xff]
        %v381 = vld [vmem:[#allocation2 + $0x39] sm:$0xff]
        %v382 = vld [vmem:[#allocation2 + $0x49] sm:$0xff]
        %v383 = vld [vmem:[#allocation2 + $0x51] sm:$0xff]
        %v384 = vld [vmem:[#allocation2 + $0x61] sm:$0xff]
        %v385 = vld [vmem:[#allocation2 + $0x69] sm:$0xff]
        %v386 = vld [vmem:[#allocation2 + $0x79] sm:$0xff]
        %v387 = vld [vmem:[#allocation2 + $0x81] sm:$0xff]
        %v388 = vld [vmem:[#allocation2 + $0x91] sm:$0xff]
        %v389 = vld [vmem:[#allocation2 + $0x99] sm:$0xff]
        %v390 = vld [vmem:[#allocation2 + $0xa9] sm:$0xff]
        %v391 = vld [vmem:[#allocation2 + $0xb1] sm:$0xff]
        %v392 = vld [vmem:[#allocation2 + $0xc1] sm:$0xff]
        %v393 = vld [vmem:[#allocation2 + $0xc9] sm:$0xff]
        %v394 = vld [vmem:[#allocation2 + $0xd9] sm:$0xff]
        %v395 = vld [vmem:[#allocation2 + $0xe1] sm:$0xff]
        %v396 = vld [vmem:[#allocation2 + $0xf1] sm:$0xff]
        %v397 = vld [vmem:[#allocation2 + $0xf9] sm:$0xff]
        %v398 = vld [vmem:[#allocation2 + $0x109] sm:$0xff]
        %v399 = vld [vmem:[#allocation2 + $0x111] sm:$0xff]
        %v400 = vld [vmem:[#allocation2 + $0x121] sm:$0xff]
        %v401 = vld [vmem:[#allocation2 + $0x129] sm:$0xff]
        %v402 = vld [vmem:[#allocation2 + $0x139] sm:$0xff]
        %v403 = vld [vmem:[#allocation2 + $0x141] sm:$0xff]
        %v404 = vld [vmem:[#allocation2 + $0x151] sm:$0xff]
        %v405 = vld [vmem:[#allocation2 + $0x159] sm:$0xff]
        %v406 = vld [vmem:[#allocation2 + $0x169] sm:$0xff]
        %v407 = vld [vmem:[#allocation2 + $0x171] sm:$0xff]
        %v408 = vld [vmem:[#allocation2 + $0x2] sm:$0xff]
        %v409 = vld [vmem:[#allocation2 + $0xa] sm:$0xff]
        %v410 = vld [vmem:[#allocation2 + $0x1a] sm:$0xff]
        %v411 = vld [vmem:[#allocation2 + $0x22] sm:$0xff]
        %v412 = vld [vmem:[#allocation2 + $0x32] sm:$0xff]
        %v413 = vld [vmem:[#allocation2 + $0x3a] sm:$0xff]
        %v414 = vld [vmem:[#allocation2 + $0x4a] sm:$0xff]
        %v415 = vld [vmem:[#allocation2 + $0x52] sm:$0xff]
        %v416 = vld [vmem:[#allocation2 + $0x62] sm:$0xff]
        %v417 = vld [vmem:[#allocation2 + $0x6a] sm:$0xff]
        %v418 = vld [vmem:[#allocation2 + $0x7a] sm:$0xff]
        %v419 = vld [vmem:[#allocation2 + $0x82] sm:$0xff]
        %v420 = vld [vmem:[#allocation2 + $0x92] sm:$0xff]
        %v421 = vld [vmem:[#allocation2 + $0x9a] sm:$0xff]
        %v422 = vld [vmem:[#allocation2 + $0xaa] sm:$0xff]
        %v423 = vld [vmem:[#allocation2 + $0xb2] sm:$0xff]
        %v424 = vld [vmem:[#allocation2 + $0xc2] sm:$0xff]
        %v425 = vld [vmem:[#allocation2 + $0xca] sm:$0xff]
        %v426 = vld [vmem:[#allocation2 + $0xda] sm:$0xff]
        %v427 = vld [vmem:[#allocation2 + $0xe2] sm:$0xff]
        %v428 = vld [vmem:[#allocation2 + $0xf2] sm:$0xff]
        %v429 = vld [vmem:[#allocation2 + $0xfa] sm:$0xff]
        %v430 = vld [vmem:[#allocation2 + $0x10a] sm:$0xff]
        %v431 = vld [vmem:[#allocation2 + $0x112] sm:$0xff]
        %v432 = vld [vmem:[#allocation2 + $0x122] sm:$0xff]
        %v433 = vld [vmem:[#allocation2 + $0x12a] sm:$0xff]
        %v434 = vld [vmem:[#allocation2 + $0x13a] sm:$0xff]
        %v435 = vld [vmem:[#allocation2 + $0x142] sm:$0xff]
        %v436 = vld [vmem:[#allocation2 + $0x152] sm:$0xff]
        %v437 = vld [vmem:[#allocation2 + $0x15a] sm:$0xff]
        %v438 = vld [vmem:[#allocation2 + $0x16a] sm:$0xff]
        %v439 = vld [vmem:[#allocation2 + $0x172] sm:$0xff]
        %v440 = vld [vmem:[%s311] sm:$0xff]
        %v441 = vld [vmem:[%s311 + $0x8] sm:$0xff]
        %v442 = vld [vmem:[%s311 + $0x18] sm:$0xff]
        %v443 = vld [vmem:[%s311 + $0x20] sm:$0xff]
        %v444 = vld [vmem:[%s311 + $0x30] sm:$0xff]
        %v445 = vld [vmem:[%s311 + $0x38] sm:$0xff]
        %v446 = vld [vmem:[%s311 + $0x48] sm:$0xff]
        %v447 = vld [vmem:[%s311 + $0x50] sm:$0xff]
        %v448 = vld [vmem:[%s311 + $0x60] sm:$0xff]
        %v449 = vld [vmem:[%s311 + $0x68] sm:$0xff]
        %v450 = vld [vmem:[%s311 + $0x78] sm:$0xff]
        %v451 = vld [vmem:[%s311 + $0x80] sm:$0xff]
        %v452 = vld [vmem:[%s311 + $0x90] sm:$0xff]
        %v453 = vld [vmem:[%s311 + $0x98] sm:$0xff]
        %v454 = vld [vmem:[%s311 + $0xa8] sm:$0xff]
        %v455 = vld [vmem:[%s311 + $0xb0] sm:$0xff]
        %v456 = vld [vmem:[%s311 + $0xc0] sm:$0xff]
        %v457 = vld [vmem:[%s311 + $0xc8] sm:$0xff]
        %v458 = vld [vmem:[%s311 + $0xd8] sm:$0xff]
        %v459 = vld [vmem:[%s311 + $0xe0] sm:$0xff]
        %v460 = vld [vmem:[%s311 + $0xf0] sm:$0xff]
        %v461 = vld [vmem:[%s311 + $0xf8] sm:$0xff]
        %v462 = vld [vmem:[%s311 + $0x108] sm:$0xff]
        %v463 = vld [vmem:[%s311 + $0x110] sm:$0xff]
        %v464 = vld [vmem:[%s311 + $0x120] sm:$0xff]
        %v465 = vld [vmem:[%s311 + $0x128] sm:$0xff]
        %v466 = vld [vmem:[%s311 + $0x138] sm:$0xff]
        %v467 = vld [vmem:[%s311 + $0x140] sm:$0xff]
        %v468 = vld [vmem:[%s311 + $0x150] sm:$0xff]
        %v469 = vld [vmem:[%s311 + $0x158] sm:$0xff]
        %v470 = vld [vmem:[%s311 + $0x168] sm:$0xff]
        %v471 = vld [vmem:[%s311 + $0x170] sm:$0xff]
        %v472 = vld [vmem:[%s311 + $0x1] sm:$0xff]
        %v473 = vld [vmem:[%s311 + $0x9] sm:$0xff]
        %v474 = vld [vmem:[%s311 + $0x19] sm:$0xff]
        %v475 = vld [vmem:[%s311 + $0x21] sm:$0xff]
        %v476 = vld [vmem:[%s311 + $0x31] sm:$0xff]
        %v477 = vld [vmem:[%s311 + $0x39] sm:$0xff]
        %v478 = vld [vmem:[%s311 + $0x49] sm:$0xff]
        %v479 = vld [vmem:[%s311 + $0x51] sm:$0xff]
        %v480 = vld [vmem:[%s311 + $0x61] sm:$0xff]
        %v481 = vld [vmem:[%s311 + $0x69] sm:$0xff]
        %v482 = vld [vmem:[%s311 + $0x79] sm:$0xff]
        %v483 = vld [vmem:[%s311 + $0x81] sm:$0xff]
        %v484 = vld [vmem:[%s311 + $0x91] sm:$0xff]
        %v485 = vld [vmem:[%s311 + $0x99] sm:$0xff]
        %v486 = vld [vmem:[%s311 + $0xa9] sm:$0xff]
        %v487 = vld [vmem:[%s311 + $0xb1] sm:$0xff]
        %v488 = vld [vmem:[%s311 + $0xc1] sm:$0xff]
        %v489 = vld [vmem:[%s311 + $0xc9] sm:$0xff]
        %v490 = vld [vmem:[%s311 + $0xd9] sm:$0xff]
        %v491 = vld [vmem:[%s311 + $0xe1] sm:$0xff]
        %v492 = vld [vmem:[%s311 + $0xf1] sm:$0xff]
        %v493 = vld [vmem:[%s311 + $0xf9] sm:$0xff]
        %v494 = vld [vmem:[%s311 + $0x109] sm:$0xff]
        %v495 = vld [vmem:[%s311 + $0x111] sm:$0xff]
        %v496 = vld [vmem:[%s311 + $0x121] sm:$0xff]
        %v497 = vld [vmem:[%s311 + $0x129] sm:$0xff]
        %v498 = vld [vmem:[%s311 + $0x139] sm:$0xff]
        %v499 = vld [vmem:[%s311 + $0x141] sm:$0xff]
        %v500 = vld [vmem:[%s311 + $0x151] sm:$0xff]
        %v501 = vld [vmem:[%s311 + $0x159] sm:$0xff]
        %v502 = vld [vmem:[%s311 + $0x169] sm:$0xff]
        %v503 = vld [vmem:[%s311 + $0x171] sm:$0xff]
        %v504 = vld [vmem:[%s311 + $0x2] sm:$0xff]
        %v505 = vld [vmem:[%s311 + $0xa] sm:$0xff]
        %v506 = vld [vmem:[%s311 + $0x1a] sm:$0xff]
        %v507 = vld [vmem:[%s311 + $0x22] sm:$0xff]
        %v508 = vld [vmem:[%s311 + $0x32] sm:$0xff]
        %v509 = vld [vmem:[%s311 + $0x3a] sm:$0xff]
        %v510 = vld [vmem:[%s311 + $0x4a] sm:$0xff]
        %v511 = vld [vmem:[%s311 + $0x52] sm:$0xff]
        %v512 = vld [vmem:[%s311 + $0x62] sm:$0xff]
        %v513 = vld [vmem:[%s311 + $0x6a] sm:$0xff]
        %v514 = vld [vmem:[%s311 + $0x7a] sm:$0xff]
        %v515 = vld [vmem:[%s311 + $0x82] sm:$0xff]
        %v516 = vld [vmem:[%s311 + $0x92] sm:$0xff]
        %v517 = vld [vmem:[%s311 + $0x9a] sm:$0xff]
        %v518 = vld [vmem:[%s311 + $0xaa] sm:$0xff]
        %v519 = vld [vmem:[%s311 + $0xb2] sm:$0xff]
        %v520 = vld [vmem:[%s311 + $0xc2] sm:$0xff]
        %v521 = vld [vmem:[%s311 + $0xca] sm:$0xff]
        %v522 = vld [vmem:[%s311 + $0xda] sm:$0xff]
        %v523 = vld [vmem:[%s311 + $0xe2] sm:$0xff]
        %v524 = vld [vmem:[%s311 + $0xf2] sm:$0xff]
        %v525 = vld [vmem:[%s311 + $0xfa] sm:$0xff]
        %v526 = vld [vmem:[%s311 + $0x10a] sm:$0xff]
        %v527 = vld [vmem:[%s311 + $0x112] sm:$0xff]
        %v528 = vld [vmem:[%s311 + $0x122] sm:$0xff]
        %v529 = vld [vmem:[%s311 + $0x12a] sm:$0xff]
        %v530 = vld [vmem:[%s311 + $0x13a] sm:$0xff]
        %v531 = vld [vmem:[%s311 + $0x142] sm:$0xff]
        %v532 = vld [vmem:[%s311 + $0x152] sm:$0xff]
        %v533 = vld [vmem:[%s311 + $0x15a] sm:$0xff]
        %v534 = vld [vmem:[%s311 + $0x16a] sm:$0xff]
        %v535 = vld [vmem:[%s311 + $0x172] sm:$0xff]
        %s536 = scalar_lea.vmem [#allocation2], 48
        %v537 = vld [vmem:[%s536] sm:$0xff]
        %v538 = vld [vmem:[%s536 + $0x8] sm:$0xff]
        %v539 = vld [vmem:[%s536 + $0x18] sm:$0xff]
        %v540 = vld [vmem:[%s536 + $0x20] sm:$0xff]
        %v541 = vld [vmem:[%s536 + $0x30] sm:$0xff]
        %v542 = vld [vmem:[%s536 + $0x38] sm:$0xff]
        %v543 = vld [vmem:[%s536 + $0x48] sm:$0xff]
        %v544 = vld [vmem:[%s536 + $0x50] sm:$0xff]
        %v545 = vld [vmem:[%s536 + $0x60] sm:$0xff]
        %v546 = vld [vmem:[%s536 + $0x68] sm:$0xff]
        %v547 = vld [vmem:[%s536 + $0x78] sm:$0xff]
        %v548 = vld [vmem:[%s536 + $0x80] sm:$0xff]
        %v549 = vld [vmem:[%s536 + $0x90] sm:$0xff]
        %v550 = vld [vmem:[%s536 + $0x98] sm:$0xff]
        %v551 = vld [vmem:[%s536 + $0xa8] sm:$0xff]
        %v552 = vld [vmem:[%s536 + $0xb0] sm:$0xff]
        %v553 = vld [vmem:[%s536 + $0xc0] sm:$0xff]
        %v554 = vld [vmem:[%s536 + $0xc8] sm:$0xff]
        %v555 = vld [vmem:[%s536 + $0xd8] sm:$0xff]
        %v556 = vld [vmem:[%s536 + $0xe0] sm:$0xff]
        %v557 = vld [vmem:[%s536 + $0xf0] sm:$0xff]
        %v558 = vld [vmem:[%s536 + $0xf8] sm:$0xff]
        %v559 = vld [vmem:[%s536 + $0x108] sm:$0xff]
        %v560 = vld [vmem:[%s536 + $0x110] sm:$0xff]
        %v561 = vld [vmem:[%s536 + $0x120] sm:$0xff]
        %v562 = vld [vmem:[%s536 + $0x128] sm:$0xff]
        %v563 = vld [vmem:[%s536 + $0x138] sm:$0xff]
        %v564 = vld [vmem:[%s536 + $0x140] sm:$0xff]
        %v565 = vld [vmem:[%s536 + $0x150] sm:$0xff]
        %v566 = vld [vmem:[%s536 + $0x158] sm:$0xff]
        %v567 = vld [vmem:[%s536 + $0x168] sm:$0xff]
        %v568 = vld [vmem:[%s536 + $0x170] sm:$0xff]
        %v569 = vld [vmem:[%s536 + $0x1] sm:$0xff]
        %v570 = vld [vmem:[%s536 + $0x9] sm:$0xff]
        %v571 = vld [vmem:[%s536 + $0x19] sm:$0xff]
        %v572 = vld [vmem:[%s536 + $0x21] sm:$0xff]
        %v573 = vld [vmem:[%s536 + $0x31] sm:$0xff]
        %v574 = vld [vmem:[%s536 + $0x39] sm:$0xff]
        %v575 = vld [vmem:[%s536 + $0x49] sm:$0xff]
        %v576 = vld [vmem:[%s536 + $0x51] sm:$0xff]
        %v577 = vld [vmem:[%s536 + $0x61] sm:$0xff]
        %v578 = vld [vmem:[%s536 + $0x69] sm:$0xff]
        %v579 = vld [vmem:[%s536 + $0x79] sm:$0xff]
        %v580 = vld [vmem:[%s536 + $0x81] sm:$0xff]
        %v581 = vld [vmem:[%s536 + $0x91] sm:$0xff]
        %v582 = vld [vmem:[%s536 + $0x99] sm:$0xff]
        %v583 = vld [vmem:[%s536 + $0xa9] sm:$0xff]
        %v584 = vld [vmem:[%s536 + $0xb1] sm:$0xff]
        %v585 = vld [vmem:[%s536 + $0xc1] sm:$0xff]
        %v586 = vld [vmem:[%s536 + $0xc9] sm:$0xff]
        %v587 = vld [vmem:[%s536 + $0xd9] sm:$0xff]
        %v588 = vld [vmem:[%s536 + $0xe1] sm:$0xff]
        %v589 = vld [vmem:[%s536 + $0xf1] sm:$0xff]
        %v590 = vld [vmem:[%s536 + $0xf9] sm:$0xff]
        %v591 = vld [vmem:[%s536 + $0x109] sm:$0xff]
        %v592 = vld [vmem:[%s536 + $0x111] sm:$0xff]
        %v593 = vld [vmem:[%s536 + $0x121] sm:$0xff]
        %v594 = vld [vmem:[%s536 + $0x129] sm:$0xff]
        %v595 = vld [vmem:[%s536 + $0x139] sm:$0xff]
        %v596 = vld [vmem:[%s536 + $0x141] sm:$0xff]
        %v597 = vld [vmem:[%s536 + $0x151] sm:$0xff]
        %v598 = vld [vmem:[%s536 + $0x159] sm:$0xff]
        %v599 = vld [vmem:[%s536 + $0x169] sm:$0xff]
        %v600 = vld [vmem:[%s536 + $0x171] sm:$0xff]
        %v601 = vld [vmem:[%s536 + $0x2] sm:$0xff]
        %v602 = vld [vmem:[%s536 + $0xa] sm:$0xff]
        %v603 = vld [vmem:[%s536 + $0x1a] sm:$0xff]
        %v604 = vld [vmem:[%s536 + $0x22] sm:$0xff]
        %v605 = vld [vmem:[%s536 + $0x32] sm:$0xff]
        %v606 = vld [vmem:[%s536 + $0x3a] sm:$0xff]
        %v607 = vld [vmem:[%s536 + $0x4a] sm:$0xff]
        %v608 = vld [vmem:[%s536 + $0x52] sm:$0xff]
        %v609 = vld [vmem:[%s536 + $0x62] sm:$0xff]
        %v610 = vld [vmem:[%s536 + $0x6a] sm:$0xff]
        %v611 = vld [vmem:[%s536 + $0x7a] sm:$0xff]
        %v612 = vld [vmem:[%s536 + $0x82] sm:$0xff]
        %v613 = vld [vmem:[%s536 + $0x92] sm:$0xff]
        %v614 = vld [vmem:[%s536 + $0x9a] sm:$0xff]
        %v615 = vld [vmem:[%s536 + $0xaa] sm:$0xff]
        %v616 = vld [vmem:[%s536 + $0xb2] sm:$0xff]
        %v617 = vld [vmem:[%s536 + $0xc2] sm:$0xff]
        %v618 = vld [vmem:[%s536 + $0xca] sm:$0xff]
        %v619 = vld [vmem:[%s536 + $0xda] sm:$0xff]
        %v620 = vld [vmem:[%s536 + $0xe2] sm:$0xff]
        %v621 = vld [vmem:[%s536 + $0xf2] sm:$0xff]
        %v622 = vld [vmem:[%s536 + $0xfa] sm:$0xff]
        %v623 = vld [vmem:[%s536 + $0x10a] sm:$0xff]
        %v624 = vld [vmem:[%s536 + $0x112] sm:$0xff]
        %v625 = vld [vmem:[%s536 + $0x122] sm:$0xff]
        %v626 = vld [vmem:[%s536 + $0x12a] sm:$0xff]
        %v627 = vld [vmem:[%s536 + $0x13a] sm:$0xff]
        %v628 = vld [vmem:[%s536 + $0x142] sm:$0xff]
        %v629 = vld [vmem:[%s536 + $0x152] sm:$0xff]
        %v630 = vld [vmem:[%s536 + $0x15a] sm:$0xff]
        %v631 = vld [vmem:[%s536 + $0x16a] sm:$0xff]
        %v632 = vld [vmem:[%s536 + $0x172] sm:$0xff]
        %665 = vrot.lane.b32.xlu0 %v376, 4
        %v666 = vpop.permute.xlu0 %665
        %667 = vrot.lane.b32.xlu0 %v377, 4
        %v668 = vpop.permute.xlu0 %667
        %669 = vrot.lane.b32.xlu0 %v378, 4
        %v670 = vpop.permute.xlu0 %669
        %671 = vrot.lane.b32.xlu0 %v379, 4
        %v672 = vpop.permute.xlu0 %671
        %673 = vrot.lane.b32.xlu0 %v380, 4
        %v674 = vpop.permute.xlu0 %673
        %675 = vrot.lane.b32.xlu0 %v381, 4
        %v676 = vpop.permute.xlu0 %675
        %677 = vrot.lane.b32.xlu0 %v382, 4
        %v678 = vpop.permute.xlu0 %677
        %679 = vrot.lane.b32.xlu0 %v383, 4
        %v680 = vpop.permute.xlu0 %679
        %681 = vrot.lane.b32.xlu0 %v384, 4
        %v682 = vpop.permute.xlu0 %681
        %683 = vrot.lane.b32.xlu0 %v385, 4
        %v684 = vpop.permute.xlu0 %683
        %685 = vrot.lane.b32.xlu0 %v386, 4
        %v686 = vpop.permute.xlu0 %685
        %687 = vrot.lane.b32.xlu0 %v387, 4
        %v688 = vpop.permute.xlu0 %687
        %689 = vrot.lane.b32.xlu0 %v388, 4
        %v690 = vpop.permute.xlu0 %689
        %691 = vrot.lane.b32.xlu0 %v389, 4
        %v692 = vpop.permute.xlu0 %691
        %693 = vrot.lane.b32.xlu0 %v390, 4
        %v694 = vpop.permute.xlu0 %693
        %695 = vrot.lane.b32.xlu0 %v391, 4
        %v696 = vpop.permute.xlu0 %695
        %697 = vrot.lane.b32.xlu0 %v392, 4
        %v698 = vpop.permute.xlu0 %697
        %699 = vrot.lane.b32.xlu0 %v393, 4
        %v700 = vpop.permute.xlu0 %699
        %701 = vrot.lane.b32.xlu0 %v394, 4
        %v702 = vpop.permute.xlu0 %701
        %703 = vrot.lane.b32.xlu0 %v395, 4
        %v704 = vpop.permute.xlu0 %703
        %705 = vrot.lane.b32.xlu0 %v396, 4
        %v706 = vpop.permute.xlu0 %705
        %707 = vrot.lane.b32.xlu0 %v397, 4
        %v708 = vpop.permute.xlu0 %707
        %709 = vrot.lane.b32.xlu0 %v398, 4
        %v710 = vpop.permute.xlu0 %709
        %711 = vrot.lane.b32.xlu0 %v399, 4
        %v712 = vpop.permute.xlu0 %711
        %713 = vrot.lane.b32.xlu0 %v400, 4
        %v714 = vpop.permute.xlu0 %713
        %715 = vrot.lane.b32.xlu0 %v401, 4
        %v716 = vpop.permute.xlu0 %715
        %717 = vrot.lane.b32.xlu0 %v402, 4
        %v718 = vpop.permute.xlu0 %717
        %719 = vrot.lane.b32.xlu0 %v403, 4
        %v720 = vpop.permute.xlu0 %719
        %721 = vrot.lane.b32.xlu0 %v404, 4
        %v722 = vpop.permute.xlu0 %721
        %723 = vrot.lane.b32.xlu0 %v405, 4
        %v724 = vpop.permute.xlu0 %723
        %725 = vrot.lane.b32.xlu0 %v406, 4
        %v726 = vpop.permute.xlu0 %725
        %727 = vrot.lane.b32.xlu0 %v407, 4
        %v728 = vpop.permute.xlu0 %727
        %793 = vrot.lane.b32.xlu0 %v408, 8
        %v794 = vpop.permute.xlu0 %793
        %795 = vrot.lane.b32.xlu0 %v409, 8
        %v796 = vpop.permute.xlu0 %795
        %797 = vrot.lane.b32.xlu0 %v410, 8
        %v798 = vpop.permute.xlu0 %797
        %799 = vrot.lane.b32.xlu0 %v411, 8
        %v800 = vpop.permute.xlu0 %799
        %801 = vrot.lane.b32.xlu0 %v412, 8
        %v802 = vpop.permute.xlu0 %801
        %803 = vrot.lane.b32.xlu0 %v413, 8
        %v804 = vpop.permute.xlu0 %803
        %805 = vrot.lane.b32.xlu0 %v414, 8
        %v806 = vpop.permute.xlu0 %805
        %807 = vrot.lane.b32.xlu0 %v415, 8
        %v808 = vpop.permute.xlu0 %807
        %809 = vrot.lane.b32.xlu0 %v416, 8
        %v810 = vpop.permute.xlu0 %809
        %811 = vrot.lane.b32.xlu0 %v417, 8
        %v812 = vpop.permute.xlu0 %811
        %813 = vrot.lane.b32.xlu0 %v418, 8
        %v814 = vpop.permute.xlu0 %813
        %815 = vrot.lane.b32.xlu0 %v419, 8
        %v816 = vpop.permute.xlu0 %815
        %817 = vrot.lane.b32.xlu0 %v420, 8
        %v818 = vpop.permute.xlu0 %817
        %819 = vrot.lane.b32.xlu0 %v421, 8
        %v820 = vpop.permute.xlu0 %819
        %821 = vrot.lane.b32.xlu0 %v422, 8
        %v822 = vpop.permute.xlu0 %821
        %823 = vrot.lane.b32.xlu0 %v423, 8
        %v824 = vpop.permute.xlu0 %823
        %825 = vrot.lane.b32.xlu0 %v424, 8
        %v826 = vpop.permute.xlu0 %825
        %827 = vrot.lane.b32.xlu0 %v425, 8
        %v828 = vpop.permute.xlu0 %827
        %829 = vrot.lane.b32.xlu0 %v426, 8
        %v830 = vpop.permute.xlu0 %829
        %831 = vrot.lane.b32.xlu0 %v427, 8
        %v832 = vpop.permute.xlu0 %831
        %833 = vrot.lane.b32.xlu0 %v428, 8
        %v834 = vpop.permute.xlu0 %833
        %835 = vrot.lane.b32.xlu0 %v429, 8
        %v836 = vpop.permute.xlu0 %835
        %837 = vrot.lane.b32.xlu0 %v430, 8
        %v838 = vpop.permute.xlu0 %837
        %839 = vrot.lane.b32.xlu0 %v431, 8
        %v840 = vpop.permute.xlu0 %839
        %841 = vrot.lane.b32.xlu0 %v432, 8
        %v842 = vpop.permute.xlu0 %841
        %843 = vrot.lane.b32.xlu0 %v433, 8
        %v844 = vpop.permute.xlu0 %843
        %845 = vrot.lane.b32.xlu0 %v434, 8
        %v846 = vpop.permute.xlu0 %845
        %847 = vrot.lane.b32.xlu0 %v435, 8
        %v848 = vpop.permute.xlu0 %847
        %849 = vrot.lane.b32.xlu0 %v436, 8
        %v850 = vpop.permute.xlu0 %849
        %851 = vrot.lane.b32.xlu0 %v437, 8
        %v852 = vpop.permute.xlu0 %851
        %853 = vrot.lane.b32.xlu0 %v438, 8
        %v854 = vpop.permute.xlu0 %853
        %855 = vrot.lane.b32.xlu0 %v439, 8
        %v856 = vpop.permute.xlu0 %855
        %921 = vrot.lane.b32.xlu0 %v440, 12
        %v922 = vpop.permute.xlu0 %921
        %923 = vrot.lane.b32.xlu0 %v441, 12
        %v924 = vpop.permute.xlu0 %923
        %925 = vrot.lane.b32.xlu0 %v442, 12
        %v926 = vpop.permute.xlu0 %925
        %927 = vrot.lane.b32.xlu0 %v443, 12
        %v928 = vpop.permute.xlu0 %927
        %929 = vrot.lane.b32.xlu0 %v444, 12
        %v930 = vpop.permute.xlu0 %929
        %931 = vrot.lane.b32.xlu0 %v445, 12
        %v932 = vpop.permute.xlu0 %931
        %933 = vrot.lane.b32.xlu0 %v446, 12
        %v934 = vpop.permute.xlu0 %933
        %935 = vrot.lane.b32.xlu0 %v447, 12
        %v936 = vpop.permute.xlu0 %935
        %937 = vrot.lane.b32.xlu0 %v448, 12
        %v938 = vpop.permute.xlu0 %937
        %939 = vrot.lane.b32.xlu0 %v449, 12
        %v940 = vpop.permute.xlu0 %939
        %941 = vrot.lane.b32.xlu0 %v450, 12
        %v942 = vpop.permute.xlu0 %941
        %943 = vrot.lane.b32.xlu0 %v451, 12
        %v944 = vpop.permute.xlu0 %943
        %945 = vrot.lane.b32.xlu0 %v452, 12
        %v946 = vpop.permute.xlu0 %945
        %947 = vrot.lane.b32.xlu0 %v453, 12
        %v948 = vpop.permute.xlu0 %947
        %949 = vrot.lane.b32.xlu0 %v454, 12
        %v950 = vpop.permute.xlu0 %949
        %951 = vrot.lane.b32.xlu0 %v455, 12
        %v952 = vpop.permute.xlu0 %951
        %953 = vrot.lane.b32.xlu0 %v456, 12
        %v954 = vpop.permute.xlu0 %953
        %955 = vrot.lane.b32.xlu0 %v457, 12
        %v956 = vpop.permute.xlu0 %955
        %957 = vrot.lane.b32.xlu0 %v458, 12
        %v958 = vpop.permute.xlu0 %957
        %959 = vrot.lane.b32.xlu0 %v459, 12
        %v960 = vpop.permute.xlu0 %959
        %961 = vrot.lane.b32.xlu0 %v460, 12
        %v962 = vpop.permute.xlu0 %961
        %963 = vrot.lane.b32.xlu0 %v461, 12
        %v964 = vpop.permute.xlu0 %963
        %965 = vrot.lane.b32.xlu0 %v462, 12
        %v966 = vpop.permute.xlu0 %965
        %967 = vrot.lane.b32.xlu0 %v463, 12
        %v968 = vpop.permute.xlu0 %967
        %969 = vrot.lane.b32.xlu0 %v464, 12
        %v970 = vpop.permute.xlu0 %969
        %971 = vrot.lane.b32.xlu0 %v465, 12
        %v972 = vpop.permute.xlu0 %971
        %973 = vrot.lane.b32.xlu0 %v466, 12
        %v974 = vpop.permute.xlu0 %973
        %975 = vrot.lane.b32.xlu0 %v467, 12
        %v976 = vpop.permute.xlu0 %975
        %977 = vrot.lane.b32.xlu0 %v468, 12
        %v978 = vpop.permute.xlu0 %977
        %979 = vrot.lane.b32.xlu0 %v469, 12
        %v980 = vpop.permute.xlu0 %979
        %981 = vrot.lane.b32.xlu0 %v470, 12
        %v982 = vpop.permute.xlu0 %981
        %983 = vrot.lane.b32.xlu0 %v471, 12
        %v984 = vpop.permute.xlu0 %983
        %1049 = vrot.lane.b32.xlu0 %v472, 16
        %v1050 = vpop.permute.xlu0 %1049
        %1051 = vrot.lane.b32.xlu0 %v473, 16
        %v1052 = vpop.permute.xlu0 %1051
        %1053 = vrot.lane.b32.xlu0 %v474, 16
        %v1054 = vpop.permute.xlu0 %1053
        %1055 = vrot.lane.b32.xlu0 %v475, 16
        %v1056 = vpop.permute.xlu0 %1055
        %1057 = vrot.lane.b32.xlu0 %v476, 16
        %v1058 = vpop.permute.xlu0 %1057
        %1059 = vrot.lane.b32.xlu0 %v477, 16
        %v1060 = vpop.permute.xlu0 %1059
        %1061 = vrot.lane.b32.xlu0 %v478, 16
        %v1062 = vpop.permute.xlu0 %1061
        %1063 = vrot.lane.b32.xlu0 %v479, 16
        %v1064 = vpop.permute.xlu0 %1063
        %1065 = vrot.lane.b32.xlu0 %v480, 16
        %v1066 = vpop.permute.xlu0 %1065
        %1067 = vrot.lane.b32.xlu0 %v481, 16
        %v1068 = vpop.permute.xlu0 %1067
        %1069 = vrot.lane.b32.xlu0 %v482, 16
        %v1070 = vpop.permute.xlu0 %1069
        %1071 = vrot.lane.b32.xlu0 %v483, 16
        %v1072 = vpop.permute.xlu0 %1071
        %1073 = vrot.lane.b32.xlu0 %v484, 16
        %v1074 = vpop.permute.xlu0 %1073
        %1075 = vrot.lane.b32.xlu0 %v485, 16
        %v1076 = vpop.permute.xlu0 %1075
        %1077 = vrot.lane.b32.xlu0 %v486, 16
        %v1078 = vpop.permute.xlu0 %1077
        %1079 = vrot.lane.b32.xlu0 %v487, 16
        %v1080 = vpop.permute.xlu0 %1079
        %1081 = vrot.lane.b32.xlu0 %v488, 16
        %v1082 = vpop.permute.xlu0 %1081
        %1083 = vrot.lane.b32.xlu0 %v489, 16
        %v1084 = vpop.permute.xlu0 %1083
        %1085 = vrot.lane.b32.xlu0 %v490, 16
        %v1086 = vpop.permute.xlu0 %1085
        %1087 = vrot.lane.b32.xlu0 %v491, 16
        %v1088 = vpop.permute.xlu0 %1087
        %1089 = vrot.lane.b32.xlu0 %v492, 16
        %v1090 = vpop.permute.xlu0 %1089
        %1091 = vrot.lane.b32.xlu0 %v493, 16
        %v1092 = vpop.permute.xlu0 %1091
        %1093 = vrot.lane.b32.xlu0 %v494, 16
        %v1094 = vpop.permute.xlu0 %1093
        %1095 = vrot.lane.b32.xlu0 %v495, 16
        %v1096 = vpop.permute.xlu0 %1095
        %1097 = vrot.lane.b32.xlu0 %v496, 16
        %v1098 = vpop.permute.xlu0 %1097
        %1099 = vrot.lane.b32.xlu0 %v497, 16
        %v1100 = vpop.permute.xlu0 %1099
        %1101 = vrot.lane.b32.xlu0 %v498, 16
        %v1102 = vpop.permute.xlu0 %1101
        %1103 = vrot.lane.b32.xlu0 %v499, 16
        %v1104 = vpop.permute.xlu0 %1103
        %1105 = vrot.lane.b32.xlu0 %v500, 16
        %v1106 = vpop.permute.xlu0 %1105
        %1107 = vrot.lane.b32.xlu0 %v501, 16
        %v1108 = vpop.permute.xlu0 %1107
        %1109 = vrot.lane.b32.xlu0 %v502, 16
        %v1110 = vpop.permute.xlu0 %1109
        %1111 = vrot.lane.b32.xlu0 %v503, 16
        %v1112 = vpop.permute.xlu0 %1111
        %1177 = vrot.lane.b32.xlu0 %v504, 20
        %v1178 = vpop.permute.xlu0 %1177
        %1179 = vrot.lane.b32.xlu0 %v505, 20
        %v1180 = vpop.permute.xlu0 %1179
        %1181 = vrot.lane.b32.xlu0 %v506, 20
        %v1182 = vpop.permute.xlu0 %1181
        %1183 = vrot.lane.b32.xlu0 %v507, 20
        %v1184 = vpop.permute.xlu0 %1183
        %1185 = vrot.lane.b32.xlu0 %v508, 20
        %v1186 = vpop.permute.xlu0 %1185
        %1187 = vrot.lane.b32.xlu0 %v509, 20
        %v1188 = vpop.permute.xlu0 %1187
        %1189 = vrot.lane.b32.xlu0 %v510, 20
        %v1190 = vpop.permute.xlu0 %1189
        %1191 = vrot.lane.b32.xlu0 %v511, 20
        %v1192 = vpop.permute.xlu0 %1191
        %1193 = vrot.lane.b32.xlu0 %v512, 20
        %v1194 = vpop.permute.xlu0 %1193
        %1195 = vrot.lane.b32.xlu0 %v513, 20
        %v1196 = vpop.permute.xlu0 %1195
        %1197 = vrot.lane.b32.xlu0 %v514, 20
        %v1198 = vpop.permute.xlu0 %1197
        %1199 = vrot.lane.b32.xlu0 %v515, 20
        %v1200 = vpop.permute.xlu0 %1199
        %1201 = vrot.lane.b32.xlu0 %v516, 20
        %v1202 = vpop.permute.xlu0 %1201
        %1203 = vrot.lane.b32.xlu0 %v517, 20
        %v1204 = vpop.permute.xlu0 %1203
        %1205 = vrot.lane.b32.xlu0 %v518, 20
        %v1206 = vpop.permute.xlu0 %1205
        %1207 = vrot.lane.b32.xlu0 %v519, 20
        %v1208 = vpop.permute.xlu0 %1207
        %1209 = vrot.lane.b32.xlu0 %v520, 20
        %v1210 = vpop.permute.xlu0 %1209
        %1211 = vrot.lane.b32.xlu0 %v521, 20
        %v1212 = vpop.permute.xlu0 %1211
        %1213 = vrot.lane.b32.xlu0 %v522, 20
        %v1214 = vpop.permute.xlu0 %1213
        %1215 = vrot.lane.b32.xlu0 %v523, 20
        %v1216 = vpop.permute.xlu0 %1215
        %1217 = vrot.lane.b32.xlu0 %v524, 20
        %v1218 = vpop.permute.xlu0 %1217
        %1219 = vrot.lane.b32.xlu0 %v525, 20
        %v1220 = vpop.permute.xlu0 %1219
        %1221 = vrot.lane.b32.xlu0 %v526, 20
        %v1222 = vpop.permute.xlu0 %1221
        %1223 = vrot.lane.b32.xlu0 %v527, 20
        %v1224 = vpop.permute.xlu0 %1223
        %1225 = vrot.lane.b32.xlu0 %v528, 20
        %v1226 = vpop.permute.xlu0 %1225
        %1227 = vrot.lane.b32.xlu0 %v529, 20
        %v1228 = vpop.permute.xlu0 %1227
        %1229 = vrot.lane.b32.xlu0 %v530, 20
        %v1230 = vpop.permute.xlu0 %1229
        %1231 = vrot.lane.b32.xlu0 %v531, 20
        %v1232 = vpop.permute.xlu0 %1231
        %1233 = vrot.lane.b32.xlu0 %v532, 20
        %v1234 = vpop.permute.xlu0 %1233
        %1235 = vrot.lane.b32.xlu0 %v533, 20
        %v1236 = vpop.permute.xlu0 %1235
        %1237 = vrot.lane.b32.xlu0 %v534, 20
        %v1238 = vpop.permute.xlu0 %1237
        %1239 = vrot.lane.b32.xlu0 %v535, 20
        %v1240 = vpop.permute.xlu0 %1239
        %1305 = vrot.lane.b32.xlu0 %v537, 24
        %v1306 = vpop.permute.xlu0 %1305
        %1307 = vrot.lane.b32.xlu0 %v538, 24
        %v1308 = vpop.permute.xlu0 %1307
        %1309 = vrot.lane.b32.xlu0 %v539, 24
        %v1310 = vpop.permute.xlu0 %1309
        %1311 = vrot.lane.b32.xlu0 %v540, 24
        %v1312 = vpop.permute.xlu0 %1311
        %1313 = vrot.lane.b32.xlu0 %v541, 24
        %v1314 = vpop.permute.xlu0 %1313
        %1315 = vrot.lane.b32.xlu0 %v542, 24
        %v1316 = vpop.permute.xlu0 %1315
        %1317 = vrot.lane.b32.xlu0 %v543, 24
        %v1318 = vpop.permute.xlu0 %1317
        %1319 = vrot.lane.b32.xlu0 %v544, 24
        %v1320 = vpop.permute.xlu0 %1319
        %1321 = vrot.lane.b32.xlu0 %v545, 24
        %v1322 = vpop.permute.xlu0 %1321
        %1323 = vrot.lane.b32.xlu0 %v546, 24
        %v1324 = vpop.permute.xlu0 %1323
        %1325 = vrot.lane.b32.xlu0 %v547, 24
        %v1326 = vpop.permute.xlu0 %1325
        %1327 = vrot.lane.b32.xlu0 %v548, 24
        %v1328 = vpop.permute.xlu0 %1327
        %1329 = vrot.lane.b32.xlu0 %v549, 24
        %v1330 = vpop.permute.xlu0 %1329
        %1331 = vrot.lane.b32.xlu0 %v550, 24
        %v1332 = vpop.permute.xlu0 %1331
        %1333 = vrot.lane.b32.xlu0 %v551, 24
        %v1334 = vpop.permute.xlu0 %1333
        %1335 = vrot.lane.b32.xlu0 %v552, 24
        %v1336 = vpop.permute.xlu0 %1335
        %1337 = vrot.lane.b32.xlu0 %v553, 24
        %v1338 = vpop.permute.xlu0 %1337
        %1339 = vrot.lane.b32.xlu0 %v554, 24
        %v1340 = vpop.permute.xlu0 %1339
        %1341 = vrot.lane.b32.xlu0 %v555, 24
        %v1342 = vpop.permute.xlu0 %1341
        %1343 = vrot.lane.b32.xlu0 %v556, 24
        %v1344 = vpop.permute.xlu0 %1343
        %1345 = vrot.lane.b32.xlu0 %v557, 24
        %v1346 = vpop.permute.xlu0 %1345
        %1347 = vrot.lane.b32.xlu0 %v558, 24
        %v1348 = vpop.permute.xlu0 %1347
        %1349 = vrot.lane.b32.xlu0 %v559, 24
        %v1350 = vpop.permute.xlu0 %1349
        %1351 = vrot.lane.b32.xlu0 %v560, 24
        %v1352 = vpop.permute.xlu0 %1351
        %1353 = vrot.lane.b32.xlu0 %v561, 24
        %v1354 = vpop.permute.xlu0 %1353
        %1355 = vrot.lane.b32.xlu0 %v562, 24
        %v1356 = vpop.permute.xlu0 %1355
        %1357 = vrot.lane.b32.xlu0 %v563, 24
        %v1358 = vpop.permute.xlu0 %1357
        %1359 = vrot.lane.b32.xlu0 %v564, 24
        %v1360 = vpop.permute.xlu0 %1359
        %1361 = vrot.lane.b32.xlu0 %v565, 24
        %v1362 = vpop.permute.xlu0 %1361
        %1363 = vrot.lane.b32.xlu0 %v566, 24
        %v1364 = vpop.permute.xlu0 %1363
        %1365 = vrot.lane.b32.xlu0 %v567, 24
        %v1366 = vpop.permute.xlu0 %1365
        %1367 = vrot.lane.b32.xlu0 %v568, 24
        %v1368 = vpop.permute.xlu0 %1367
        %1433 = vrot.lane.b32.xlu0 %v569, 28
        %v1434 = vpop.permute.xlu0 %1433
        %1435 = vrot.lane.b32.xlu0 %v570, 28
        %v1436 = vpop.permute.xlu0 %1435
        %1437 = vrot.lane.b32.xlu0 %v571, 28
        %v1438 = vpop.permute.xlu0 %1437
        %1439 = vrot.lane.b32.xlu0 %v572, 28
        %v1440 = vpop.permute.xlu0 %1439
        %1441 = vrot.lane.b32.xlu0 %v573, 28
        %v1442 = vpop.permute.xlu0 %1441
        %1443 = vrot.lane.b32.xlu0 %v574, 28
        %v1444 = vpop.permute.xlu0 %1443
        %1445 = vrot.lane.b32.xlu0 %v575, 28
        %v1446 = vpop.permute.xlu0 %1445
        %1447 = vrot.lane.b32.xlu0 %v576, 28
        %v1448 = vpop.permute.xlu0 %1447
        %1449 = vrot.lane.b32.xlu0 %v577, 28
        %v1450 = vpop.permute.xlu0 %1449
        %1451 = vrot.lane.b32.xlu0 %v578, 28
        %v1452 = vpop.permute.xlu0 %1451
        %1453 = vrot.lane.b32.xlu0 %v579, 28
        %v1454 = vpop.permute.xlu0 %1453
        %1455 = vrot.lane.b32.xlu0 %v580, 28
        %v1456 = vpop.permute.xlu0 %1455
        %1457 = vrot.lane.b32.xlu0 %v581, 28
        %v1458 = vpop.permute.xlu0 %1457
        %1459 = vrot.lane.b32.xlu0 %v582, 28
        %v1460 = vpop.permute.xlu0 %1459
        %1461 = vrot.lane.b32.xlu0 %v583, 28
        %v1462 = vpop.permute.xlu0 %1461
        %1463 = vrot.lane.b32.xlu0 %v584, 28
        %v1464 = vpop.permute.xlu0 %1463
        %1465 = vrot.lane.b32.xlu0 %v585, 28
        %v1466 = vpop.permute.xlu0 %1465
        %1467 = vrot.lane.b32.xlu0 %v586, 28
        %v1468 = vpop.permute.xlu0 %1467
        %1469 = vrot.lane.b32.xlu0 %v587, 28
        %v1470 = vpop.permute.xlu0 %1469
        %1471 = vrot.lane.b32.xlu0 %v588, 28
        %v1472 = vpop.permute.xlu0 %1471
        %1473 = vrot.lane.b32.xlu0 %v589, 28
        %v1474 = vpop.permute.xlu0 %1473
        %1475 = vrot.lane.b32.xlu0 %v590, 28
        %v1476 = vpop.permute.xlu0 %1475
        %1477 = vrot.lane.b32.xlu0 %v591, 28
        %v1478 = vpop.permute.xlu0 %1477
        %1479 = vrot.lane.b32.xlu0 %v592, 28
        %v1480 = vpop.permute.xlu0 %1479
        %1481 = vrot.lane.b32.xlu0 %v593, 28
        %v1482 = vpop.permute.xlu0 %1481
        %1483 = vrot.lane.b32.xlu0 %v594, 28
        %v1484 = vpop.permute.xlu0 %1483
        %1485 = vrot.lane.b32.xlu0 %v595, 28
        %v1486 = vpop.permute.xlu0 %1485
        %1487 = vrot.lane.b32.xlu0 %v596, 28
        %v1488 = vpop.permute.xlu0 %1487
        %1489 = vrot.lane.b32.xlu0 %v597, 28
        %v1490 = vpop.permute.xlu0 %1489
        %1491 = vrot.lane.b32.xlu0 %v598, 28
        %v1492 = vpop.permute.xlu0 %1491
        %1493 = vrot.lane.b32.xlu0 %v599, 28
        %v1494 = vpop.permute.xlu0 %1493
        %1495 = vrot.lane.b32.xlu0 %v600, 28
        %v1496 = vpop.permute.xlu0 %1495
        %1561 = vrot.lane.b32.xlu0 %v601, 32
        %v1562 = vpop.permute.xlu0 %1561
        %1563 = vrot.lane.b32.xlu0 %v602, 32
        %v1564 = vpop.permute.xlu0 %1563
        %1565 = vrot.lane.b32.xlu0 %v603, 32
        %v1566 = vpop.permute.xlu0 %1565
        %1567 = vrot.lane.b32.xlu0 %v604, 32
        %v1568 = vpop.permute.xlu0 %1567
        %1569 = vrot.lane.b32.xlu0 %v605, 32
        %v1570 = vpop.permute.xlu0 %1569
        %1571 = vrot.lane.b32.xlu0 %v606, 32
        %v1572 = vpop.permute.xlu0 %1571
        %1573 = vrot.lane.b32.xlu0 %v607, 32
        %v1574 = vpop.permute.xlu0 %1573
        %1575 = vrot.lane.b32.xlu0 %v608, 32
        %v1576 = vpop.permute.xlu0 %1575
        %1577 = vrot.lane.b32.xlu0 %v609, 32
        %v1578 = vpop.permute.xlu0 %1577
        %1579 = vrot.lane.b32.xlu0 %v610, 32
        %v1580 = vpop.permute.xlu0 %1579
        %1581 = vrot.lane.b32.xlu0 %v611, 32
        %v1582 = vpop.permute.xlu0 %1581
        %1583 = vrot.lane.b32.xlu0 %v612, 32
        %v1584 = vpop.permute.xlu0 %1583
        %1585 = vrot.lane.b32.xlu0 %v613, 32
        %v1586 = vpop.permute.xlu0 %1585
        %1587 = vrot.lane.b32.xlu0 %v614, 32
        %v1588 = vpop.permute.xlu0 %1587
        %1589 = vrot.lane.b32.xlu0 %v615, 32
        %v1590 = vpop.permute.xlu0 %1589
        %1591 = vrot.lane.b32.xlu0 %v616, 32
        %v1592 = vpop.permute.xlu0 %1591
        %1593 = vrot.lane.b32.xlu0 %v617, 32
        %v1594 = vpop.permute.xlu0 %1593
        %1595 = vrot.lane.b32.xlu0 %v618, 32
        %v1596 = vpop.permute.xlu0 %1595
        %1597 = vrot.lane.b32.xlu0 %v619, 32
        %v1598 = vpop.permute.xlu0 %1597
        %1599 = vrot.lane.b32.xlu0 %v620, 32
        %v1600 = vpop.permute.xlu0 %1599
        %1601 = vrot.lane.b32.xlu0 %v621, 32
        %v1602 = vpop.permute.xlu0 %1601
        %1603 = vrot.lane.b32.xlu0 %v622, 32
        %v1604 = vpop.permute.xlu0 %1603
        %1605 = vrot.lane.b32.xlu0 %v623, 32
        %v1606 = vpop.permute.xlu0 %1605
        %1607 = vrot.lane.b32.xlu0 %v624, 32
        %v1608 = vpop.permute.xlu0 %1607
        %1609 = vrot.lane.b32.xlu0 %v625, 32
        %v1610 = vpop.permute.xlu0 %1609
        %1611 = vrot.lane.b32.xlu0 %v626, 32
        %v1612 = vpop.permute.xlu0 %1611
        %1613 = vrot.lane.b32.xlu0 %v627, 32
        %v1614 = vpop.permute.xlu0 %1613
        %1615 = vrot.lane.b32.xlu0 %v628, 32
        %v1616 = vpop.permute.xlu0 %1615
        %1617 = vrot.lane.b32.xlu0 %v629, 32
        %v1618 = vpop.permute.xlu0 %1617
        %1619 = vrot.lane.b32.xlu0 %v630, 32
        %v1620 = vpop.permute.xlu0 %1619
        %1621 = vrot.lane.b32.xlu0 %v631, 32
        %v1622 = vpop.permute.xlu0 %1621
        %1623 = vrot.lane.b32.xlu0 %v632, 32
        %v1624 = vpop.permute.xlu0 %1623
        %v1657 = vsel %vm223, %v344, %v666
        %v1658 = vsel %vm223, %v345, %v668
        %v1659 = vsel %vm223, %v346, %v670
        %v1660 = vsel %vm223, %v347, %v672
        %v1661 = vsel %vm223, %v348, %v674
        %v1662 = vsel %vm223, %v349, %v676
        %v1663 = vsel %vm223, %v350, %v678
        %v1664 = vsel %vm223, %v351, %v680
        %v1665 = vsel %vm223, %v352, %v682
        %v1666 = vsel %vm223, %v353, %v684
        %v1667 = vsel %vm223, %v354, %v686
        %v1668 = vsel %vm223, %v355, %v688
        %v1669 = vsel %vm223, %v356, %v690
        %v1670 = vsel %vm223, %v357, %v692
        %v1671 = vsel %vm223, %v358, %v694
        %v1672 = vsel %vm223, %v359, %v696
        %v1673 = vsel %vm223, %v360, %v698
        %v1674 = vsel %vm223, %v361, %v700
        %v1675 = vsel %vm223, %v362, %v702
        %v1676 = vsel %vm223, %v363, %v704
        %v1677 = vsel %vm223, %v364, %v706
        %v1678 = vsel %vm223, %v365, %v708
        %v1679 = vsel %vm223, %v366, %v710
        %v1680 = vsel %vm223, %v367, %v712
        %v1681 = vsel %vm223, %v368, %v714
        %v1682 = vsel %vm223, %v369, %v716
        %v1683 = vsel %vm223, %v370, %v718
        %v1684 = vsel %vm223, %v371, %v720
        %v1685 = vsel %vm223, %v372, %v722
        %v1686 = vsel %vm223, %v373, %v724
        %v1687 = vsel %vm223, %v374, %v726
        %v1688 = vsel %vm223, %v375, %v728
        %vm1689 = vcmask 64512
        %v1690 = vsel %vm1689, %v1657, %v794
        %v1691 = vsel %vm1689, %v1658, %v796
        %v1692 = vsel %vm1689, %v1659, %v798
        %v1693 = vsel %vm1689, %v1660, %v800
        %v1694 = vsel %vm1689, %v1661, %v802
        %v1695 = vsel %vm1689, %v1662, %v804
        %v1696 = vsel %vm1689, %v1663, %v806
        %v1697 = vsel %vm1689, %v1664, %v808
        %v1698 = vsel %vm1689, %v1665, %v810
        %v1699 = vsel %vm1689, %v1666, %v812
        %v1700 = vsel %vm1689, %v1667, %v814
        %v1701 = vsel %vm1689, %v1668, %v816
        %v1702 = vsel %vm1689, %v1669, %v818
        %v1703 = vsel %vm1689, %v1670, %v820
        %v1704 = vsel %vm1689, %v1671, %v822
        %v1705 = vsel %vm1689, %v1672, %v824
        %v1706 = vsel %vm1689, %v1673, %v826
        %v1707 = vsel %vm1689, %v1674, %v828
        %v1708 = vsel %vm1689, %v1675, %v830
        %v1709 = vsel %vm1689, %v1676, %v832
        %v1710 = vsel %vm1689, %v1677, %v834
        %v1711 = vsel %vm1689, %v1678, %v836
        %v1712 = vsel %vm1689, %v1679, %v838
        %v1713 = vsel %vm1689, %v1680, %v840
        %v1714 = vsel %vm1689, %v1681, %v842
        %v1715 = vsel %vm1689, %v1682, %v844
        %v1716 = vsel %vm1689, %v1683, %v846
        %v1717 = vsel %vm1689, %v1684, %v848
        %v1718 = vsel %vm1689, %v1685, %v850
        %v1719 = vsel %vm1689, %v1686, %v852
        %v1720 = vsel %vm1689, %v1687, %v854
        %v1721 = vsel %vm1689, %v1688, %v856
        %vm1722 = vcmask 97280
        %v1723 = vsel %vm1722, %v1690, %v922
        %v1724 = vsel %vm1722, %v1691, %v924
        %v1725 = vsel %vm1722, %v1692, %v926
        %v1726 = vsel %vm1722, %v1693, %v928
        %v1727 = vsel %vm1722, %v1694, %v930
        %v1728 = vsel %vm1722, %v1695, %v932
        %v1729 = vsel %vm1722, %v1696, %v934
        %v1730 = vsel %vm1722, %v1697, %v936
        %v1731 = vsel %vm1722, %v1698, %v938
        %v1732 = vsel %vm1722, %v1699, %v940
        %v1733 = vsel %vm1722, %v1700, %v942
        %v1734 = vsel %vm1722, %v1701, %v944
        %v1735 = vsel %vm1722, %v1702, %v946
        %v1736 = vsel %vm1722, %v1703, %v948
        %v1737 = vsel %vm1722, %v1704, %v950
        %v1738 = vsel %vm1722, %v1705, %v952
        %v1739 = vsel %vm1722, %v1706, %v954
        %v1740 = vsel %vm1722, %v1707, %v956
        %v1741 = vsel %vm1722, %v1708, %v958
        %v1742 = vsel %vm1722, %v1709, %v960
        %v1743 = vsel %vm1722, %v1710, %v962
        %v1744 = vsel %vm1722, %v1711, %v964
        %v1745 = vsel %vm1722, %v1712, %v966
        %v1746 = vsel %vm1722, %v1713, %v968
        %v1747 = vsel %vm1722, %v1714, %v970
        %v1748 = vsel %vm1722, %v1715, %v972
        %v1749 = vsel %vm1722, %v1716, %v974
        %v1750 = vsel %vm1722, %v1717, %v976
        %v1751 = vsel %vm1722, %v1718, %v978
        %v1752 = vsel %vm1722, %v1719, %v980
        %v1753 = vsel %vm1722, %v1720, %v982
        %v1754 = vsel %vm1722, %v1721, %v984
        %vm1755 = vcmask 130048
        %v1756 = vsel %vm1755, %v1723, %v1050
        %v1757 = vsel %vm1755, %v1724, %v1052
        %v1758 = vsel %vm1755, %v1725, %v1054
        %v1759 = vsel %vm1755, %v1726, %v1056
        %v1760 = vsel %vm1755, %v1727, %v1058
        %v1761 = vsel %vm1755, %v1728, %v1060
        %v1762 = vsel %vm1755, %v1729, %v1062
        %v1763 = vsel %vm1755, %v1730, %v1064
        %v1764 = vsel %vm1755, %v1731, %v1066
        %v1765 = vsel %vm1755, %v1732, %v1068
        %v1766 = vsel %vm1755, %v1733, %v1070
        %v1767 = vsel %vm1755, %v1734, %v1072
        %v1768 = vsel %vm1755, %v1735, %v1074
        %v1769 = vsel %vm1755, %v1736, %v1076
        %v1770 = vsel %vm1755, %v1737, %v1078
        %v1771 = vsel %vm1755, %v1738, %v1080
        %v1772 = vsel %vm1755, %v1739, %v1082
        %v1773 = vsel %vm1755, %v1740, %v1084
        %v1774 = vsel %vm1755, %v1741, %v1086
        %v1775 = vsel %vm1755, %v1742, %v1088
        %v1776 = vsel %vm1755, %v1743, %v1090
        %v1777 = vsel %vm1755, %v1744, %v1092
        %v1778 = vsel %vm1755, %v1745, %v1094
        %v1779 = vsel %vm1755, %v1746, %v1096
        %v1780 = vsel %vm1755, %v1747, %v1098
        %v1781 = vsel %vm1755, %v1748, %v1100
        %v1782 = vsel %vm1755, %v1749, %v1102
        %v1783 = vsel %vm1755, %v1750, %v1104
        %v1784 = vsel %vm1755, %v1751, %v1106
        %v1785 = vsel %vm1755, %v1752, %v1108
        %v1786 = vsel %vm1755, %v1753, %v1110
        %v1787 = vsel %vm1755, %v1754, %v1112
        %vm1788 = vcmask 162816
        %v1789 = vsel %vm1788, %v1756, %v1178
        %v1790 = vsel %vm1788, %v1757, %v1180
        %v1791 = vsel %vm1788, %v1758, %v1182
        %v1792 = vsel %vm1788, %v1759, %v1184
        %v1793 = vsel %vm1788, %v1760, %v1186
        %v1794 = vsel %vm1788, %v1761, %v1188
        %v1795 = vsel %vm1788, %v1762, %v1190
        %v1796 = vsel %vm1788, %v1763, %v1192
        %v1797 = vsel %vm1788, %v1764, %v1194
        %v1798 = vsel %vm1788, %v1765, %v1196
        %v1799 = vsel %vm1788, %v1766, %v1198
        %v1800 = vsel %vm1788, %v1767, %v1200
        %v1801 = vsel %vm1788, %v1768, %v1202
        %v1802 = vsel %vm1788, %v1769, %v1204
        %v1803 = vsel %vm1788, %v1770, %v1206
        %v1804 = vsel %vm1788, %v1771, %v1208
        %v1805 = vsel %vm1788, %v1772, %v1210
        %v1806 = vsel %vm1788, %v1773, %v1212
        %v1807 = vsel %vm1788, %v1774, %v1214
        %v1808 = vsel %vm1788, %v1775, %v1216
        %v1809 = vsel %vm1788, %v1776, %v1218
        %v1810 = vsel %vm1788, %v1777, %v1220
        %v1811 = vsel %vm1788, %v1778, %v1222
        %v1812 = vsel %vm1788, %v1779, %v1224
        %v1813 = vsel %vm1788, %v1780, %v1226
        %v1814 = vsel %vm1788, %v1781, %v1228
        %v1815 = vsel %vm1788, %v1782, %v1230
        %v1816 = vsel %vm1788, %v1783, %v1232
        %v1817 = vsel %vm1788, %v1784, %v1234
        %v1818 = vsel %vm1788, %v1785, %v1236
        %v1819 = vsel %vm1788, %v1786, %v1238
        %v1820 = vsel %vm1788, %v1787, %v1240
        %vm1821 = vcmask 195584
        %v1822 = vsel %vm1821, %v1789, %v1306
        %v1823 = vsel %vm1821, %v1790, %v1308
        %v1824 = vsel %vm1821, %v1791, %v1310
        %v1825 = vsel %vm1821, %v1792, %v1312
        %v1826 = vsel %vm1821, %v1793, %v1314
        %v1827 = vsel %vm1821, %v1794, %v1316
        %v1828 = vsel %vm1821, %v1795, %v1318
        %v1829 = vsel %vm1821, %v1796, %v1320
        %v1830 = vsel %vm1821, %v1797, %v1322
        %v1831 = vsel %vm1821, %v1798, %v1324
        %v1832 = vsel %vm1821, %v1799, %v1326
        %v1833 = vsel %vm1821, %v1800, %v1328
        %v1834 = vsel %vm1821, %v1801, %v1330
        %v1835 = vsel %vm1821, %v1802, %v1332
        %v1836 = vsel %vm1821, %v1803, %v1334
        %v1837 = vsel %vm1821, %v1804, %v1336
        %v1838 = vsel %vm1821, %v1805, %v1338
        %v1839 = vsel %vm1821, %v1806, %v1340
        %v1840 = vsel %vm1821, %v1807, %v1342
        %v1841 = vsel %vm1821, %v1808, %v1344
        %v1842 = vsel %vm1821, %v1809, %v1346
        %v1843 = vsel %vm1821, %v1810, %v1348
        %v1844 = vsel %vm1821, %v1811, %v1350
        %v1845 = vsel %vm1821, %v1812, %v1352
        %v1846 = vsel %vm1821, %v1813, %v1354
        %v1847 = vsel %vm1821, %v1814, %v1356
        %v1848 = vsel %vm1821, %v1815, %v1358
        %v1849 = vsel %vm1821, %v1816, %v1360
        %v1850 = vsel %vm1821, %v1817, %v1362
        %v1851 = vsel %vm1821, %v1818, %v1364
        %v1852 = vsel %vm1821, %v1819, %v1366
        %v1853 = vsel %vm1821, %v1820, %v1368
        %vm1854 = vcmask 228352
        %v1855 = vsel %vm1854, %v1822, %v1434
        %v1856 = vsel %vm1854, %v1823, %v1436
        %v1857 = vsel %vm1854, %v1824, %v1438
        %v1858 = vsel %vm1854, %v1825, %v1440
        %v1859 = vsel %vm1854, %v1826, %v1442
        %v1860 = vsel %vm1854, %v1827, %v1444
        %v1861 = vsel %vm1854, %v1828, %v1446
        %v1862 = vsel %vm1854, %v1829, %v1448
        %v1863 = vsel %vm1854, %v1830, %v1450
        %v1864 = vsel %vm1854, %v1831, %v1452
        %v1865 = vsel %vm1854, %v1832, %v1454
        %v1866 = vsel %vm1854, %v1833, %v1456
        %v1867 = vsel %vm1854, %v1834, %v1458
        %v1868 = vsel %vm1854, %v1835, %v1460
        %v1869 = vsel %vm1854, %v1836, %v1462
        %v1870 = vsel %vm1854, %v1837, %v1464
        %v1871 = vsel %vm1854, %v1838, %v1466
        %v1872 = vsel %vm1854, %v1839, %v1468
        %v1873 = vsel %vm1854, %v1840, %v1470
        %v1874 = vsel %vm1854, %v1841, %v1472
        %v1875 = vsel %vm1854, %v1842, %v1474
        %v1876 = vsel %vm1854, %v1843, %v1476
        %v1877 = vsel %vm1854, %v1844, %v1478
        %v1878 = vsel %vm1854, %v1845, %v1480
        %v1879 = vsel %vm1854, %v1846, %v1482
        %v1880 = vsel %vm1854, %v1847, %v1484
        %v1881 = vsel %vm1854, %v1848, %v1486
        %v1882 = vsel %vm1854, %v1849, %v1488
        %v1883 = vsel %vm1854, %v1850, %v1490
        %v1884 = vsel %vm1854, %v1851, %v1492
        %v1885 = vsel %vm1854, %v1852, %v1494
        %v1886 = vsel %vm1854, %v1853, %v1496
        %vm1887 = vcmask 261120
        %v1888 = vsel %vm1887, %v1855, %v1562
        %v1889 = vsel %vm1887, %v1856, %v1564
        %v1890 = vsel %vm1887, %v1857, %v1566
        %v1891 = vsel %vm1887, %v1858, %v1568
        %v1892 = vsel %vm1887, %v1859, %v1570
        %v1893 = vsel %vm1887, %v1860, %v1572
        %v1894 = vsel %vm1887, %v1861, %v1574
        %v1895 = vsel %vm1887, %v1862, %v1576
        %v1896 = vsel %vm1887, %v1863, %v1578
        %v1897 = vsel %vm1887, %v1864, %v1580
        %v1898 = vsel %vm1887, %v1865, %v1582
        %v1899 = vsel %vm1887, %v1866, %v1584
        %v1900 = vsel %vm1887, %v1867, %v1586
        %v1901 = vsel %vm1887, %v1868, %v1588
        %v1902 = vsel %vm1887, %v1869, %v1590
        %v1903 = vsel %vm1887, %v1870, %v1592
        %v1904 = vsel %vm1887, %v1871, %v1594
        %v1905 = vsel %vm1887, %v1872, %v1596
        %v1906 = vsel %vm1887, %v1873, %v1598
        %v1907 = vsel %vm1887, %v1874, %v1600
        %v1908 = vsel %vm1887, %v1875, %v1602
        %v1909 = vsel %vm1887, %v1876, %v1604
        %v1910 = vsel %vm1887, %v1877, %v1606
        %v1911 = vsel %vm1887, %v1878, %v1608
        %v1912 = vsel %vm1887, %v1879, %v1610
        %v1913 = vsel %vm1887, %v1880, %v1612
        %v1914 = vsel %vm1887, %v1881, %v1614
        %v1915 = vsel %vm1887, %v1882, %v1616
        %v1916 = vsel %vm1887, %v1883, %v1618
        %v1917 = vsel %vm1887, %v1884, %v1620
        %v1918 = vsel %vm1887, %v1885, %v1622
        %v1919 = vsel %vm1887, %v1886, %v1624
        %v1920 = vld [vmem:[%s1] sm:$0xff]
        %v1921 = vld [vmem:[%s1 + $0x8] sm:$0xff]
        %v1922 = vld [vmem:[%s1 + $0x10] sm:$0xff]
        %v1923 = vld [vmem:[%s1 + $0x18] sm:$0xff]
        %v1924 = vld [vmem:[%s1 + $0x20] sm:$0xf]
        %v1925 = vld [vmem:[%s2] sm:$0x1]
        %v1927 = vlaneseq
        %v1928 = vshrl.u32 %v1927, 7
        %v1929 = vsub.s32 0, %v1928
        %v1930 = vrot.slane %v1925, %v1929
        %vm1932 = vcmask 293888
        %v1934 = vsel %vm1932, %v1888, 0
        %v1937 = vsel %vm1932, %v1889, 0
        %v1940 = vsel %vm1932, %v1890, 0
        %v1943 = vsel %vm1932, %v1891, 0
        %v1946 = vsel %vm1932, %v1892, 0
        %v1949 = vsel %vm1932, %v1893, 0
        %v1952 = vsel %vm1932, %v1894, 0
        %v1955 = vsel %vm1932, %v1895, 0
        %v1958 = vsel %vm1932, %v1896, 0
        %v1961 = vsel %vm1932, %v1897, 0
        %v1964 = vsel %vm1932, %v1898, 0
        %v1967 = vsel %vm1932, %v1899, 0
        %v1970 = vsel %vm1932, %v1900, 0
        %v1973 = vsel %vm1932, %v1901, 0
        %v1976 = vsel %vm1932, %v1902, 0
        %v1979 = vsel %vm1932, %v1903, 0
        %v1982 = vsel %vm1932, %v1904, 0
        %v1985 = vsel %vm1932, %v1905, 0
        %v1988 = vsel %vm1932, %v1906, 0
        %v1991 = vsel %vm1932, %v1907, 0
        %v1994 = vsel %vm1932, %v1908, 0
        %v1997 = vsel %vm1932, %v1909, 0
        %v2000 = vsel %vm1932, %v1910, 0
        %v2003 = vsel %vm1932, %v1911, 0
        %v2006 = vsel %vm1932, %v1912, 0
        %v2009 = vsel %vm1932, %v1913, 0
        %v2012 = vsel %vm1932, %v1914, 0
        %v2015 = vsel %vm1932, %v1915, 0
        %v2018 = vsel %vm1932, %v1916, 0
        %v2021 = vsel %vm1932, %v1917, 0
        %v2024 = vsel %vm1932, %v1918, 0
        %v2027 = vsel %vm1932, %v1919, 0
        %vm2029 = vcmask 1043456
        %v2031 = vsel %vm2029, %v1924, 0
        %2033 = vmatprep.subr.mxu0 0.0
        %2034 = vmatpush1.msra.mxu0 0.0
        %2035 = vmatprep.subr.mxu0 0.0
        %2036 = vmatpush1.msra.mxu0 0.0
        %2037 = vmatprep.subr.mxu0 0.0
        %2038 = vmatpush1.msra.mxu0 0.0
        %2039 = vmatprep.subr.mxu0 0.0
        %2040 = vmatpush1.msra.mxu0 0.0
        %2041 = vmatprep.subr.mxu0 0.0
        %2042 = vmatpush1.msra.mxu0 0.0
        %2043 = vmatprep.subr.mxu0 0.0
        %2044 = vmatpush1.msra.mxu0 0.0
        %2045 = vmatprep.subr.mxu0 0.0
        %2046 = vmatpush1.msra.mxu0 0.0
        %2047 = vmatprep.subr.mxu0 0.0
        %2048 = vmatpush1.msra.mxu0 0.0
        %2049 = vmatprep.subr.mxu0 0.0
        %2050 = vmatpush1.msra.mxu0 0.0
        %2051 = vmatprep.subr.mxu0 0.0
        %2052 = vmatpush1.msra.mxu0 0.0
        %2053 = vmatprep.subr.mxu0 0.0
        %2054 = vmatpush1.msra.mxu0 0.0
        %2055 = vmatprep.subr.mxu0 0.0
        %2056 = vmatpush1.msra.mxu0 %v2031
        %2057 = vmatprep.subr.mxu0 0.0
        %2058 = vmatpush1.msra.mxu0 %v1923
        %2059 = vmatprep.subr.mxu0 0.0
        %2060 = vmatpush1.msra.mxu0 %v1922
        %2061 = vmatprep.subr.mxu0 0.0
        %2062 = vmatpush1.msra.mxu0 %v1921
        %2063 = vmatprep.subr.mxu0 0.0
        %2064 = vmatpush1.msra.mxu0 %v1920
        %2065 = vmatprep.subr.mxu0 0.0
        %2066 = vmatpush2.msra.mxu0 0.0
        %2067 = vmatprep.subr.mxu0 0.0
        %2068 = vmatpush2.msra.mxu0 0.0
        %2069 = vmatprep.subr.mxu0 0.0
        %2070 = vmatpush2.msra.mxu0 0.0
        %2071 = vmatprep.subr.mxu0 0.0
        %2072 = vmatpush2.msra.mxu0 0.0
        %2073 = vmatprep.subr.mxu0 0.0
        %2074 = vmatpush2.msra.mxu0 0.0
        %2075 = vmatprep.subr.mxu0 0.0
        %2076 = vmatpush2.msra.mxu0 0.0
        %2077 = vmatprep.subr.mxu0 0.0
        %2078 = vmatpush2.msra.mxu0 0.0
        %2079 = vmatprep.subr.mxu0 0.0
        %2080 = vmatpush2.msra.mxu0 0.0
        %2081 = vmatprep.subr.mxu0 0.0
        %2082 = vmatpush2.msra.mxu0 0.0
        %2083 = vmatprep.subr.mxu0 0.0
        %2084 = vmatpush2.msra.mxu0 0.0
        %2085 = vmatprep.subr.mxu0 0.0
        %2086 = vmatpush2.msra.mxu0 0.0
        %2087 = vmatprep.subr.mxu0 0.0
        %2088 = vmatpush2.msra.mxu0 0.0
        %2089 = vmatprep.subr.mxu0 0.0
        %2090 = vmatpush2.msra.mxu0 0.0
        %2091 = vmatprep.subr.mxu0 0.0
        %2092 = vmatpush2.msra.mxu0 0.0
        %2093 = vmatprep.subr.mxu0 0.0
        %2094 = vmatpush2.msra.mxu0 0.0
        %2095 = vmatprep.subr.mxu0 0.0
        %2096 = vmatpush2.msra.mxu0 0.0
        %2097 = vmatprep.mubr.f32.mxu0 0.0
        %2098 = vmatmul.mubr.f32.gmra.mxu0 %v1934
        %v2099 = vpop.f32.mrf.mxu0
        %v2100 = vadd.f32 %v1930, %v2099
        %v2101 = vpop.f32.mrf.mxu0
        %2102 = vmatprep.mubr.f32.mxu0 0.0
        %2103 = vmatmul.mubr.f32.gmra.mxu0 %v1937
        %v2104 = vpop.f32.mrf.mxu0
        %v2105 = vadd.f32 %v1930, %v2104
        %v2106 = vpop.f32.mrf.mxu0
        %2107 = vmatprep.mubr.f32.mxu0 0.0
        %2108 = vmatmul.mubr.f32.gmra.mxu0 %v1940
        %v2109 = vpop.f32.mrf.mxu0
        %v2110 = vadd.f32 %v1930, %v2109
        %v2111 = vpop.f32.mrf.mxu0
        %2112 = vmatprep.mubr.f32.mxu0 0.0
        %2113 = vmatmul.mubr.f32.gmra.mxu0 %v1943
        %v2114 = vpop.f32.mrf.mxu0
        %v2115 = vadd.f32 %v1930, %v2114
        %v2116 = vpop.f32.mrf.mxu0
        %2117 = vmatprep.mubr.f32.mxu0 0.0
        %2118 = vmatmul.mubr.f32.gmra.mxu0 %v1946
        %v2119 = vpop.f32.mrf.mxu0
        %v2120 = vadd.f32 %v1930, %v2119
        %v2121 = vpop.f32.mrf.mxu0
        %2122 = vmatprep.mubr.f32.mxu0 0.0
        %2123 = vmatmul.mubr.f32.gmra.mxu0 %v1949
        %v2124 = vpop.f32.mrf.mxu0
        %v2125 = vadd.f32 %v1930, %v2124
        %v2126 = vpop.f32.mrf.mxu0
        %2127 = vmatprep.mubr.f32.mxu0 0.0
        %2128 = vmatmul.mubr.f32.gmra.mxu0 %v1952
        %v2129 = vpop.f32.mrf.mxu0
        %v2130 = vadd.f32 %v1930, %v2129
        %v2131 = vpop.f32.mrf.mxu0
        %2132 = vmatprep.mubr.f32.mxu0 0.0
        %2133 = vmatmul.mubr.f32.gmra.mxu0 %v1955
        %v2134 = vpop.f32.mrf.mxu0
        %v2135 = vadd.f32 %v1930, %v2134
        %v2136 = vpop.f32.mrf.mxu0
        %2137 = vmatprep.mubr.f32.mxu0 0.0
        %2138 = vmatmul.mubr.f32.gmra.mxu0 %v1958
        %v2139 = vpop.f32.mrf.mxu0
        %v2140 = vadd.f32 %v1930, %v2139
        %v2141 = vpop.f32.mrf.mxu0
        %2142 = vmatprep.mubr.f32.mxu0 0.0
        %2143 = vmatmul.mubr.f32.gmra.mxu0 %v1961
        %v2144 = vpop.f32.mrf.mxu0
        %v2145 = vadd.f32 %v1930, %v2144
        %v2146 = vpop.f32.mrf.mxu0
        %2147 = vmatprep.mubr.f32.mxu0 0.0
        %2148 = vmatmul.mubr.f32.gmra.mxu0 %v1964
        %v2149 = vpop.f32.mrf.mxu0
        %v2150 = vadd.f32 %v1930, %v2149
        %v2151 = vpop.f32.mrf.mxu0
        %2152 = vmatprep.mubr.f32.mxu0 0.0
        %2153 = vmatmul.mubr.f32.gmra.mxu0 %v1967
        %v2154 = vpop.f32.mrf.mxu0
        %v2155 = vadd.f32 %v1930, %v2154
        %v2156 = vpop.f32.mrf.mxu0
        %2157 = vmatprep.mubr.f32.mxu0 0.0
        %2158 = vmatmul.mubr.f32.gmra.mxu0 %v1970
        %v2159 = vpop.f32.mrf.mxu0
        %v2160 = vadd.f32 %v1930, %v2159
        %v2161 = vpop.f32.mrf.mxu0
        %2162 = vmatprep.mubr.f32.mxu0 0.0
        %2163 = vmatmul.mubr.f32.gmra.mxu0 %v1973
        %v2164 = vpop.f32.mrf.mxu0
        %v2165 = vadd.f32 %v1930, %v2164
        %v2166 = vpop.f32.mrf.mxu0
        %2167 = vmatprep.mubr.f32.mxu0 0.0
        %2168 = vmatmul.mubr.f32.gmra.mxu0 %v1976
        %v2169 = vpop.f32.mrf.mxu0
        %v2170 = vadd.f32 %v1930, %v2169
        %v2171 = vpop.f32.mrf.mxu0
        %2172 = vmatprep.mubr.f32.mxu0 0.0
        %2173 = vmatmul.mubr.f32.gmra.mxu0 %v1979
        %v2174 = vpop.f32.mrf.mxu0
        %v2175 = vadd.f32 %v1930, %v2174
        %v2176 = vpop.f32.mrf.mxu0
        %2177 = vmatprep.mubr.f32.mxu0 0.0
        %2178 = vmatmul.mubr.f32.gmra.mxu0 %v1982
        %v2179 = vpop.f32.mrf.mxu0
        %v2180 = vadd.f32 %v1930, %v2179
        %v2181 = vpop.f32.mrf.mxu0
        %2182 = vmatprep.mubr.f32.mxu0 0.0
        %2183 = vmatmul.mubr.f32.gmra.mxu0 %v1985
        %v2184 = vpop.f32.mrf.mxu0
        %v2185 = vadd.f32 %v1930, %v2184
        %v2186 = vpop.f32.mrf.mxu0
        %2187 = vmatprep.mubr.f32.mxu0 0.0
        %2188 = vmatmul.mubr.f32.gmra.mxu0 %v1988
        %v2189 = vpop.f32.mrf.mxu0
        %v2190 = vadd.f32 %v1930, %v2189
        %v2191 = vpop.f32.mrf.mxu0
        %2192 = vmatprep.mubr.f32.mxu0 0.0
        %2193 = vmatmul.mubr.f32.gmra.mxu0 %v1991
        %v2194 = vpop.f32.mrf.mxu0
        %v2195 = vadd.f32 %v1930, %v2194
        %v2196 = vpop.f32.mrf.mxu0
        %2197 = vmatprep.mubr.f32.mxu0 0.0
        %2198 = vmatmul.mubr.f32.gmra.mxu0 %v1994
        %v2199 = vpop.f32.mrf.mxu0
        %v2200 = vadd.f32 %v1930, %v2199
        %v2201 = vpop.f32.mrf.mxu0
        %2202 = vmatprep.mubr.f32.mxu0 0.0
        %2203 = vmatmul.mubr.f32.gmra.mxu0 %v1997
        %v2204 = vpop.f32.mrf.mxu0
        %v2205 = vadd.f32 %v1930, %v2204
        %v2206 = vpop.f32.mrf.mxu0
        %2207 = vmatprep.mubr.f32.mxu0 0.0
        %2208 = vmatmul.mubr.f32.gmra.mxu0 %v2000
        %v2209 = vpop.f32.mrf.mxu0
        %v2210 = vadd.f32 %v1930, %v2209
        %v2211 = vpop.f32.mrf.mxu0
        %2212 = vmatprep.mubr.f32.mxu0 0.0
        %2213 = vmatmul.mubr.f32.gmra.mxu0 %v2003
        %v2214 = vpop.f32.mrf.mxu0
        %v2215 = vadd.f32 %v1930, %v2214
        %v2216 = vpop.f32.mrf.mxu0
        %2217 = vmatprep.mubr.f32.mxu0 0.0
        %2218 = vmatmul.mubr.f32.gmra.mxu0 %v2006
        %v2219 = vpop.f32.mrf.mxu0
        %v2220 = vadd.f32 %v1930, %v2219
        %v2221 = vpop.f32.mrf.mxu0
        %2222 = vmatprep.mubr.f32.mxu0 0.0
        %2223 = vmatmul.mubr.f32.gmra.mxu0 %v2009
        %v2224 = vpop.f32.mrf.mxu0
        %v2225 = vadd.f32 %v1930, %v2224
        %v2226 = vpop.f32.mrf.mxu0
        %2227 = vmatprep.mubr.f32.mxu0 0.0
        %2228 = vmatmul.mubr.f32.gmra.mxu0 %v2012
        %v2229 = vpop.f32.mrf.mxu0
        %v2230 = vadd.f32 %v1930, %v2229
        %v2231 = vpop.f32.mrf.mxu0
        %2232 = vmatprep.mubr.f32.mxu0 0.0
        %2233 = vmatmul.mubr.f32.gmra.mxu0 %v2015
        %v2234 = vpop.f32.mrf.mxu0
        %v2235 = vadd.f32 %v1930, %v2234
        %v2236 = vpop.f32.mrf.mxu0
        %2237 = vmatprep.mubr.f32.mxu0 0.0
        %2238 = vmatmul.mubr.f32.gmra.mxu0 %v2018
        %v2239 = vpop.f32.mrf.mxu0
        %v2240 = vadd.f32 %v1930, %v2239
        %v2241 = vpop.f32.mrf.mxu0
        %2242 = vmatprep.mubr.f32.mxu0 0.0
        %2243 = vmatmul.mubr.f32.gmra.mxu0 %v2021
        %v2244 = vpop.f32.mrf.mxu0
        %v2245 = vadd.f32 %v1930, %v2244
        %v2246 = vpop.f32.mrf.mxu0
        %2247 = vmatprep.mubr.f32.mxu0 0.0
        %2248 = vmatmul.mubr.f32.gmra.mxu0 %v2024
        %v2249 = vpop.f32.mrf.mxu0
        %v2250 = vadd.f32 %v1930, %v2249
        %v2251 = vpop.f32.mrf.mxu0
        %2252 = vmatprep.mubr.f32.mxu0 0.0
        %2253 = vmatmul.mubr.f32.gmra.mxu0 %v2027
        %v2254 = vpop.f32.mrf.mxu0
        %v2255 = vadd.f32 %v1930, %v2254
        %v2256 = vpop.f32.mrf.mxu0
        %2257 = vdwg.mxu0
        %v2258 = vmax.f32 %v2100, 0.0
        %v2259 = vmax.f32 %v2105, 0.0
        %v2260 = vmax.f32 %v2110, 0.0
        %v2261 = vmax.f32 %v2115, 0.0
        %v2262 = vmax.f32 %v2120, 0.0
        %v2263 = vmax.f32 %v2125, 0.0
        %v2264 = vmax.f32 %v2130, 0.0
        %v2265 = vmax.f32 %v2135, 0.0
        %v2266 = vmax.f32 %v2140, 0.0
        %v2267 = vmax.f32 %v2145, 0.0
        %v2268 = vmax.f32 %v2150, 0.0
        %v2269 = vmax.f32 %v2155, 0.0
        %v2270 = vmax.f32 %v2160, 0.0
        %v2271 = vmax.f32 %v2165, 0.0
        %v2272 = vmax.f32 %v2170, 0.0
        %v2273 = vmax.f32 %v2175, 0.0
        %v2274 = vmax.f32 %v2180, 0.0
        %v2275 = vmax.f32 %v2185, 0.0
        %v2276 = vmax.f32 %v2190, 0.0
        %v2277 = vmax.f32 %v2195, 0.0
        %v2278 = vmax.f32 %v2200, 0.0
        %v2279 = vmax.f32 %v2205, 0.0
        %v2280 = vmax.f32 %v2210, 0.0
        %v2281 = vmax.f32 %v2215, 0.0
        %v2282 = vmax.f32 %v2220, 0.0
        %v2283 = vmax.f32 %v2225, 0.0
        %v2284 = vmax.f32 %v2230, 0.0
        %v2285 = vmax.f32 %v2235, 0.0
        %v2286 = vmax.f32 %v2240, 0.0
        %v2287 = vmax.f32 %v2245, 0.0
        %v2288 = vmax.f32 %v2250, 0.0
        %v2289 = vmax.f32 %v2255, 0.0
        %2290 = vst.msk [vmem:[#allocation3] sm:$0xff] %vm1689, 0.0
        %2291 = vst.msk [vmem:[#allocation3 + $0x8] sm:$0xff] %vm1689, 0.0
        %vm2292 = vcmask 58368
        %2293 = vst.msk [vmem:[#allocation3 + $0x10] sm:$0x3] %vm2292, 0.0
        %2294 = vst.msk [vmem:[#allocation3 + $0x18] sm:$0xff] %vm1689, 0.0
        %2295 = vst.msk [vmem:[#allocation3 + $0x20] sm:$0xff] %vm1689, 0.0
        %2296 = vst.msk [vmem:[#allocation3 + $0x28] sm:$0x3] %vm2292, 0.0
        %2297 = vst.msk [vmem:[#allocation3 + $0x30] sm:$0xff] %vm1689, 0.0
        %2298 = vst.msk [vmem:[#allocation3 + $0x38] sm:$0xff] %vm1689, 0.0
        %2299 = vst.msk [vmem:[#allocation3 + $0x40] sm:$0x3] %vm2292, 0.0
        %2300 = vst.msk [vmem:[#allocation3 + $0x48] sm:$0xff] %vm1689, 0.0
        %2301 = vst.msk [vmem:[#allocation3 + $0x50] sm:$0xff] %vm1689, 0.0
        %2302 = vst.msk [vmem:[#allocation3 + $0x58] sm:$0x3] %vm2292, 0.0
        %2303 = vst.msk [vmem:[#allocation3 + $0x60] sm:$0xff] %vm1689, 0.0
        %2304 = vst.msk [vmem:[#allocation3 + $0x68] sm:$0xff] %vm1689, 0.0
        %2305 = vst.msk [vmem:[#allocation3 + $0x70] sm:$0x3] %vm2292, 0.0
        %2306 = vst.msk [vmem:[#allocation3 + $0x78] sm:$0xff] %vm1689, 0.0
        %2307 = vst.msk [vmem:[#allocation3 + $0x80] sm:$0xff] %vm1689, 0.0
        %2308 = vst.msk [vmem:[#allocation3 + $0x88] sm:$0x3] %vm2292, 0.0
        %2309 = vst.msk [vmem:[#allocation3 + $0x90] sm:$0xff] %vm1689, 0.0
        %2310 = vst.msk [vmem:[#allocation3 + $0x98] sm:$0xff] %vm1689, 0.0
        %2311 = vst.msk [vmem:[#allocation3 + $0xa0] sm:$0x3] %vm2292, 0.0
        %2312 = vst.msk [vmem:[#allocation3 + $0xa8] sm:$0xff] %vm1689, 0.0
        %2313 = vst.msk [vmem:[#allocation3 + $0xb0] sm:$0xff] %vm1689, 0.0
        %2314 = vst.msk [vmem:[#allocation3 + $0xb8] sm:$0x3] %vm2292, 0.0
        %2315 = vst.msk [vmem:[#allocation3 + $0xc0] sm:$0xff] %vm1689, 0.0
        %2316 = vst.msk [vmem:[#allocation3 + $0xc8] sm:$0xff] %vm1689, 0.0
        %2317 = vst.msk [vmem:[#allocation3 + $0xd0] sm:$0x3] %vm2292, 0.0
        %2318 = vst.msk [vmem:[#allocation3 + $0xd8] sm:$0xff] %vm1689, 0.0
        %2319 = vst.msk [vmem:[#allocation3 + $0xe0] sm:$0xff] %vm1689, 0.0
        %2320 = vst.msk [vmem:[#allocation3 + $0xe8] sm:$0x3] %vm2292, 0.0
        %2321 = vst.msk [vmem:[#allocation3 + $0xf0] sm:$0xff] %vm1689, 0.0
        %2322 = vst.msk [vmem:[#allocation3 + $0xf8] sm:$0xff] %vm1689, 0.0
        %2323 = vst.msk [vmem:[#allocation3 + $0x100] sm:$0x3] %vm2292, 0.0
        %2324 = vst.msk [vmem:[#allocation3 + $0x108] sm:$0xff] %vm1689, 0.0
        %2325 = vst.msk [vmem:[#allocation3 + $0x110] sm:$0xff] %vm1689, 0.0
        %2326 = vst.msk [vmem:[#allocation3 + $0x118] sm:$0x3] %vm2292, 0.0
        %2327 = vst.msk [vmem:[#allocation3 + $0x120] sm:$0xff] %vm1689, 0.0
        %2328 = vst.msk [vmem:[#allocation3 + $0x128] sm:$0xff] %vm1689, 0.0
        %2329 = vst.msk [vmem:[#allocation3 + $0x130] sm:$0x3] %vm2292, 0.0
        %2330 = vst.msk [vmem:[#allocation3 + $0x138] sm:$0xff] %vm1689, 0.0
        %2331 = vst.msk [vmem:[#allocation3 + $0x140] sm:$0xff] %vm1689, 0.0
        %2332 = vst.msk [vmem:[#allocation3 + $0x148] sm:$0x3] %vm2292, 0.0
        %2333 = vst.msk [vmem:[#allocation3 + $0x150] sm:$0xff] %vm1689, 0.0
        %2334 = vst.msk [vmem:[#allocation3 + $0x158] sm:$0xff] %vm1689, 0.0
        %2335 = vst.msk [vmem:[#allocation3 + $0x160] sm:$0x3] %vm2292, 0.0
        %2336 = vst.msk [vmem:[#allocation3 + $0x168] sm:$0xff] %vm1689, 0.0
        %2337 = vst.msk [vmem:[#allocation3 + $0x170] sm:$0xff] %vm1689, 0.0
        %2338 = vst.msk [vmem:[#allocation3 + $0x178] sm:$0x3] %vm2292, 0.0
        %2339 = vst.msk [vmem:[#allocation3 + $0x180] sm:$0xff] %vm1689, 0.0
        %2340 = vst.msk [vmem:[#allocation3 + $0x188] sm:$0xff] %vm1689, 0.0
        %2341 = vst.msk [vmem:[#allocation3 + $0x190] sm:$0x3] %vm2292, 0.0
        %2342 = vst.msk [vmem:[#allocation3 + $0x198] sm:$0xff] %vm1689, 0.0
        %2343 = vst.msk [vmem:[#allocation3 + $0x1a0] sm:$0xff] %vm1689, 0.0
        %2344 = vst.msk [vmem:[#allocation3 + $0x1a8] sm:$0x3] %vm2292, 0.0
        %s2345 = scalar_lea.vmem [#allocation3], 24
        %2346 = vst.msk [vmem:[%s2345 + $0x1] sm:$0xff] %vm1689, %v2258
        %2347 = vst.msk [vmem:[%s2345 + $0x9] sm:$0xff] %vm1689, %v2259
        %2348 = vst.msk [vmem:[%s2345 + $0x19] sm:$0xff] %vm1689, %v2260
        %2349 = vst.msk [vmem:[%s2345 + $0x21] sm:$0xff] %vm1689, %v2261
        %2350 = vst.msk [vmem:[%s2345 + $0x31] sm:$0xff] %vm1689, %v2262
        %2351 = vst.msk [vmem:[%s2345 + $0x39] sm:$0xff] %vm1689, %v2263
        %2352 = vst.msk [vmem:[%s2345 + $0x49] sm:$0xff] %vm1689, %v2264
        %2353 = vst.msk [vmem:[%s2345 + $0x51] sm:$0xff] %vm1689, %v2265
        %2354 = vst.msk [vmem:[%s2345 + $0x61] sm:$0xff] %vm1689, %v2266
        %2355 = vst.msk [vmem:[%s2345 + $0x69] sm:$0xff] %vm1689, %v2267
        %2356 = vst.msk [vmem:[%s2345 + $0x79] sm:$0xff] %vm1689, %v2268
        %2357 = vst.msk [vmem:[%s2345 + $0x81] sm:$0xff] %vm1689, %v2269
        %2358 = vst.msk [vmem:[%s2345 + $0x91] sm:$0xff] %vm1689, %v2270
        %2359 = vst.msk [vmem:[%s2345 + $0x99] sm:$0xff] %vm1689, %v2271
        %2360 = vst.msk [vmem:[%s2345 + $0xa9] sm:$0xff] %vm1689, %v2272
        %2361 = vst.msk [vmem:[%s2345 + $0xb1] sm:$0xff] %vm1689, %v2273
        %2362 = vst.msk [vmem:[%s2345 + $0xc1] sm:$0xff] %vm1689, %v2274
        %2363 = vst.msk [vmem:[%s2345 + $0xc9] sm:$0xff] %vm1689, %v2275
        %2364 = vst.msk [vmem:[%s2345 + $0xd9] sm:$0xff] %vm1689, %v2276
        %2365 = vst.msk [vmem:[%s2345 + $0xe1] sm:$0xff] %vm1689, %v2277
        %2366 = vst.msk [vmem:[%s2345 + $0xf1] sm:$0xff] %vm1689, %v2278
        %2367 = vst.msk [vmem:[%s2345 + $0xf9] sm:$0xff] %vm1689, %v2279
        %2368 = vst.msk [vmem:[%s2345 + $0x109] sm:$0xff] %vm1689, %v2280
        %2369 = vst.msk [vmem:[%s2345 + $0x111] sm:$0xff] %vm1689, %v2281
        %2370 = vst.msk [vmem:[%s2345 + $0x121] sm:$0xff] %vm1689, %v2282
        %2371 = vst.msk [vmem:[%s2345 + $0x129] sm:$0xff] %vm1689, %v2283
        %2372 = vst.msk [vmem:[%s2345 + $0x139] sm:$0xff] %vm1689, %v2284
        %2373 = vst.msk [vmem:[%s2345 + $0x141] sm:$0xff] %vm1689, %v2285
        %2374 = vst.msk [vmem:[%s2345 + $0x151] sm:$0xff] %vm1689, %v2286
        %2375 = vst.msk [vmem:[%s2345 + $0x159] sm:$0xff] %vm1689, %v2287
        %2376 = vst.msk [vmem:[%s2345 + $0x169] sm:$0xff] %vm1689, %v2288
        %2377 = vst.msk [vmem:[%s2345 + $0x171] sm:$0xff] %vm1689, %v2289
        %v2378 = vld [vmem:[#allocation3] sm:$0xff]
        %v2379 = vld [vmem:[#allocation3 + $0x8] sm:$0xff]
        %v2380 = vld [vmem:[#allocation3 + $0x18] sm:$0xff]
        %v2381 = vld [vmem:[#allocation3 + $0x20] sm:$0xff]
        %v2382 = vld [vmem:[#allocation3 + $0x30] sm:$0xff]
        %v2383 = vld [vmem:[#allocation3 + $0x38] sm:$0xff]
        %v2384 = vld [vmem:[#allocation3 + $0x48] sm:$0xff]
        %v2385 = vld [vmem:[#allocation3 + $0x50] sm:$0xff]
        %v2386 = vld [vmem:[#allocation3 + $0x60] sm:$0xff]
        %v2387 = vld [vmem:[#allocation3 + $0x68] sm:$0xff]
        %v2388 = vld [vmem:[#allocation3 + $0x78] sm:$0xff]
        %v2389 = vld [vmem:[#allocation3 + $0x80] sm:$0xff]
        %v2390 = vld [vmem:[#allocation3 + $0x90] sm:$0xff]
        %v2391 = vld [vmem:[#allocation3 + $0x98] sm:$0xff]
        %v2392 = vld [vmem:[#allocation3 + $0xa8] sm:$0xff]
        %v2393 = vld [vmem:[#allocation3 + $0xb0] sm:$0xff]
        %v2394 = vld [vmem:[#allocation3 + $0xc0] sm:$0xff]
        %v2395 = vld [vmem:[#allocation3 + $0xc8] sm:$0xff]
        %v2396 = vld [vmem:[#allocation3 + $0xd8] sm:$0xff]
        %v2397 = vld [vmem:[#allocation3 + $0xe0] sm:$0xff]
        %v2398 = vld [vmem:[#allocation3 + $0xf0] sm:$0xff]
        %v2399 = vld [vmem:[#allocation3 + $0xf8] sm:$0xff]
        %v2400 = vld [vmem:[#allocation3 + $0x108] sm:$0xff]
        %v2401 = vld [vmem:[#allocation3 + $0x110] sm:$0xff]
        %v2402 = vld [vmem:[#allocation3 + $0x120] sm:$0xff]
        %v2403 = vld [vmem:[#allocation3 + $0x128] sm:$0xff]
        %v2404 = vld [vmem:[#allocation3 + $0x138] sm:$0xff]
        %v2405 = vld [vmem:[#allocation3 + $0x140] sm:$0xff]
        %v2406 = vld [vmem:[#allocation3 + $0x150] sm:$0xff]
        %v2407 = vld [vmem:[#allocation3 + $0x158] sm:$0xff]
        %v2408 = vld [vmem:[#allocation3 + $0x168] sm:$0xff]
        %v2409 = vld [vmem:[#allocation3 + $0x170] sm:$0xff]
        %v2410 = vld [vmem:[#allocation3 + $0x1] sm:$0xff]
        %v2411 = vld [vmem:[#allocation3 + $0x9] sm:$0xff]
        %v2412 = vld [vmem:[#allocation3 + $0x19] sm:$0xff]
        %v2413 = vld [vmem:[#allocation3 + $0x21] sm:$0xff]
        %v2414 = vld [vmem:[#allocation3 + $0x31] sm:$0xff]
        %v2415 = vld [vmem:[#allocation3 + $0x39] sm:$0xff]
        %v2416 = vld [vmem:[#allocation3 + $0x49] sm:$0xff]
        %v2417 = vld [vmem:[#allocation3 + $0x51] sm:$0xff]
        %v2418 = vld [vmem:[#allocation3 + $0x61] sm:$0xff]
        %v2419 = vld [vmem:[#allocation3 + $0x69] sm:$0xff]
        %v2420 = vld [vmem:[#allocation3 + $0x79] sm:$0xff]
        %v2421 = vld [vmem:[#allocation3 + $0x81] sm:$0xff]
        %v2422 = vld [vmem:[#allocation3 + $0x91] sm:$0xff]
        %v2423 = vld [vmem:[#allocation3 + $0x99] sm:$0xff]
        %v2424 = vld [vmem:[#allocation3 + $0xa9] sm:$0xff]
        %v2425 = vld [vmem:[#allocation3 + $0xb1] sm:$0xff]
        %v2426 = vld [vmem:[#allocation3 + $0xc1] sm:$0xff]
        %v2427 = vld [vmem:[#allocation3 + $0xc9] sm:$0xff]
        %v2428 = vld [vmem:[#allocation3 + $0xd9] sm:$0xff]
        %v2429 = vld [vmem:[#allocation3 + $0xe1] sm:$0xff]
        %v2430 = vld [vmem:[#allocation3 + $0xf1] sm:$0xff]
        %v2431 = vld [vmem:[#allocation3 + $0xf9] sm:$0xff]
        %v2432 = vld [vmem:[#allocation3 + $0x109] sm:$0xff]
        %v2433 = vld [vmem:[#allocation3 + $0x111] sm:$0xff]
        %v2434 = vld [vmem:[#allocation3 + $0x121] sm:$0xff]
        %v2435 = vld [vmem:[#allocation3 + $0x129] sm:$0xff]
        %v2436 = vld [vmem:[#allocation3 + $0x139] sm:$0xff]
        %v2437 = vld [vmem:[#allocation3 + $0x141] sm:$0xff]
        %v2438 = vld [vmem:[#allocation3 + $0x151] sm:$0xff]
        %v2439 = vld [vmem:[#allocation3 + $0x159] sm:$0xff]
        %v2440 = vld [vmem:[#allocation3 + $0x169] sm:$0xff]
        %v2441 = vld [vmem:[#allocation3 + $0x171] sm:$0xff]
        %v2442 = vld [vmem:[#allocation3 + $0x2] sm:$0xff]
        %v2443 = vld [vmem:[#allocation3 + $0xa] sm:$0xff]
        %v2444 = vld [vmem:[#allocation3 + $0x1a] sm:$0xff]
        %v2445 = vld [vmem:[#allocation3 + $0x22] sm:$0xff]
        %v2446 = vld [vmem:[#allocation3 + $0x32] sm:$0xff]
        %v2447 = vld [vmem:[#allocation3 + $0x3a] sm:$0xff]
        %v2448 = vld [vmem:[#allocation3 + $0x4a] sm:$0xff]
        %v2449 = vld [vmem:[#allocation3 + $0x52] sm:$0xff]
        %v2450 = vld [vmem:[#allocation3 + $0x62] sm:$0xff]
        %v2451 = vld [vmem:[#allocation3 + $0x6a] sm:$0xff]
        %v2452 = vld [vmem:[#allocation3 + $0x7a] sm:$0xff]
        %v2453 = vld [vmem:[#allocation3 + $0x82] sm:$0xff]
        %v2454 = vld [vmem:[#allocation3 + $0x92] sm:$0xff]
        %v2455 = vld [vmem:[#allocation3 + $0x9a] sm:$0xff]
        %v2456 = vld [vmem:[#allocation3 + $0xaa] sm:$0xff]
        %v2457 = vld [vmem:[#allocation3 + $0xb2] sm:$0xff]
        %v2458 = vld [vmem:[#allocation3 + $0xc2] sm:$0xff]
        %v2459 = vld [vmem:[#allocation3 + $0xca] sm:$0xff]
        %v2460 = vld [vmem:[#allocation3 + $0xda] sm:$0xff]
        %v2461 = vld [vmem:[#allocation3 + $0xe2] sm:$0xff]
        %v2462 = vld [vmem:[#allocation3 + $0xf2] sm:$0xff]
        %v2463 = vld [vmem:[#allocation3 + $0xfa] sm:$0xff]
        %v2464 = vld [vmem:[#allocation3 + $0x10a] sm:$0xff]
        %v2465 = vld [vmem:[#allocation3 + $0x112] sm:$0xff]
        %v2466 = vld [vmem:[#allocation3 + $0x122] sm:$0xff]
        %v2467 = vld [vmem:[#allocation3 + $0x12a] sm:$0xff]
        %v2468 = vld [vmem:[#allocation3 + $0x13a] sm:$0xff]
        %v2469 = vld [vmem:[#allocation3 + $0x142] sm:$0xff]
        %v2470 = vld [vmem:[#allocation3 + $0x152] sm:$0xff]
        %v2471 = vld [vmem:[#allocation3 + $0x15a] sm:$0xff]
        %v2472 = vld [vmem:[#allocation3 + $0x16a] sm:$0xff]
        %v2473 = vld [vmem:[#allocation3 + $0x172] sm:$0xff]
        %v2474 = vld [vmem:[%s2345] sm:$0xff]
        %v2475 = vld [vmem:[%s2345 + $0x8] sm:$0xff]
        %v2476 = vld [vmem:[%s2345 + $0x18] sm:$0xff]
        %v2477 = vld [vmem:[%s2345 + $0x20] sm:$0xff]
        %v2478 = vld [vmem:[%s2345 + $0x30] sm:$0xff]
        %v2479 = vld [vmem:[%s2345 + $0x38] sm:$0xff]
        %v2480 = vld [vmem:[%s2345 + $0x48] sm:$0xff]
        %v2481 = vld [vmem:[%s2345 + $0x50] sm:$0xff]
        %v2482 = vld [vmem:[%s2345 + $0x60] sm:$0xff]
        %v2483 = vld [vmem:[%s2345 + $0x68] sm:$0xff]
        %v2484 = vld [vmem:[%s2345 + $0x78] sm:$0xff]
        %v2485 = vld [vmem:[%s2345 + $0x80] sm:$0xff]
        %v2486 = vld [vmem:[%s2345 + $0x90] sm:$0xff]
        %v2487 = vld [vmem:[%s2345 + $0x98] sm:$0xff]
        %v2488 = vld [vmem:[%s2345 + $0xa8] sm:$0xff]
        %v2489 = vld [vmem:[%s2345 + $0xb0] sm:$0xff]
        %v2490 = vld [vmem:[%s2345 + $0xc0] sm:$0xff]
        %v2491 = vld [vmem:[%s2345 + $0xc8] sm:$0xff]
        %v2492 = vld [vmem:[%s2345 + $0xd8] sm:$0xff]
        %v2493 = vld [vmem:[%s2345 + $0xe0] sm:$0xff]
        %v2494 = vld [vmem:[%s2345 + $0xf0] sm:$0xff]
        %v2495 = vld [vmem:[%s2345 + $0xf8] sm:$0xff]
        %v2496 = vld [vmem:[%s2345 + $0x108] sm:$0xff]
        %v2497 = vld [vmem:[%s2345 + $0x110] sm:$0xff]
        %v2498 = vld [vmem:[%s2345 + $0x120] sm:$0xff]
        %v2499 = vld [vmem:[%s2345 + $0x128] sm:$0xff]
        %v2500 = vld [vmem:[%s2345 + $0x138] sm:$0xff]
        %v2501 = vld [vmem:[%s2345 + $0x140] sm:$0xff]
        %v2502 = vld [vmem:[%s2345 + $0x150] sm:$0xff]
        %v2503 = vld [vmem:[%s2345 + $0x158] sm:$0xff]
        %v2504 = vld [vmem:[%s2345 + $0x168] sm:$0xff]
        %v2505 = vld [vmem:[%s2345 + $0x170] sm:$0xff]
        %v2506 = vld [vmem:[%s2345 + $0x1] sm:$0xff]
        %v2507 = vld [vmem:[%s2345 + $0x9] sm:$0xff]
        %v2508 = vld [vmem:[%s2345 + $0x19] sm:$0xff]
        %v2509 = vld [vmem:[%s2345 + $0x21] sm:$0xff]
        %v2510 = vld [vmem:[%s2345 + $0x31] sm:$0xff]
        %v2511 = vld [vmem:[%s2345 + $0x39] sm:$0xff]
        %v2512 = vld [vmem:[%s2345 + $0x49] sm:$0xff]
        %v2513 = vld [vmem:[%s2345 + $0x51] sm:$0xff]
        %v2514 = vld [vmem:[%s2345 + $0x61] sm:$0xff]
        %v2515 = vld [vmem:[%s2345 + $0x69] sm:$0xff]
        %v2516 = vld [vmem:[%s2345 + $0x79] sm:$0xff]
        %v2517 = vld [vmem:[%s2345 + $0x81] sm:$0xff]
        %v2518 = vld [vmem:[%s2345 + $0x91] sm:$0xff]
        %v2519 = vld [vmem:[%s2345 + $0x99] sm:$0xff]
        %v2520 = vld [vmem:[%s2345 + $0xa9] sm:$0xff]
        %v2521 = vld [vmem:[%s2345 + $0xb1] sm:$0xff]
        %v2522 = vld [vmem:[%s2345 + $0xc1] sm:$0xff]
        %v2523 = vld [vmem:[%s2345 + $0xc9] sm:$0xff]
        %v2524 = vld [vmem:[%s2345 + $0xd9] sm:$0xff]
        %v2525 = vld [vmem:[%s2345 + $0xe1] sm:$0xff]
        %v2526 = vld [vmem:[%s2345 + $0xf1] sm:$0xff]
        %v2527 = vld [vmem:[%s2345 + $0xf9] sm:$0xff]
        %v2528 = vld [vmem:[%s2345 + $0x109] sm:$0xff]
        %v2529 = vld [vmem:[%s2345 + $0x111] sm:$0xff]
        %v2530 = vld [vmem:[%s2345 + $0x121] sm:$0xff]
        %v2531 = vld [vmem:[%s2345 + $0x129] sm:$0xff]
        %v2532 = vld [vmem:[%s2345 + $0x139] sm:$0xff]
        %v2533 = vld [vmem:[%s2345 + $0x141] sm:$0xff]
        %v2534 = vld [vmem:[%s2345 + $0x151] sm:$0xff]
        %v2535 = vld [vmem:[%s2345 + $0x159] sm:$0xff]
        %v2536 = vld [vmem:[%s2345 + $0x169] sm:$0xff]
        %v2537 = vld [vmem:[%s2345 + $0x171] sm:$0xff]
        %v2538 = vld [vmem:[%s2345 + $0x2] sm:$0xff]
        %v2539 = vld [vmem:[%s2345 + $0xa] sm:$0xff]
        %v2540 = vld [vmem:[%s2345 + $0x1a] sm:$0xff]
        %v2541 = vld [vmem:[%s2345 + $0x22] sm:$0xff]
        %v2542 = vld [vmem:[%s2345 + $0x32] sm:$0xff]
        %v2543 = vld [vmem:[%s2345 + $0x3a] sm:$0xff]
        %v2544 = vld [vmem:[%s2345 + $0x4a] sm:$0xff]
        %v2545 = vld [vmem:[%s2345 + $0x52] sm:$0xff]
        %v2546 = vld [vmem:[%s2345 + $0x62] sm:$0xff]
        %v2547 = vld [vmem:[%s2345 + $0x6a] sm:$0xff]
        %v2548 = vld [vmem:[%s2345 + $0x7a] sm:$0xff]
        %v2549 = vld [vmem:[%s2345 + $0x82] sm:$0xff]
        %v2550 = vld [vmem:[%s2345 + $0x92] sm:$0xff]
        %v2551 = vld [vmem:[%s2345 + $0x9a] sm:$0xff]
        %v2552 = vld [vmem:[%s2345 + $0xaa] sm:$0xff]
        %v2553 = vld [vmem:[%s2345 + $0xb2] sm:$0xff]
        %v2554 = vld [vmem:[%s2345 + $0xc2] sm:$0xff]
        %v2555 = vld [vmem:[%s2345 + $0xca] sm:$0xff]
        %v2556 = vld [vmem:[%s2345 + $0xda] sm:$0xff]
        %v2557 = vld [vmem:[%s2345 + $0xe2] sm:$0xff]
        %v2558 = vld [vmem:[%s2345 + $0xf2] sm:$0xff]
        %v2559 = vld [vmem:[%s2345 + $0xfa] sm:$0xff]
        %v2560 = vld [vmem:[%s2345 + $0x10a] sm:$0xff]
        %v2561 = vld [vmem:[%s2345 + $0x112] sm:$0xff]
        %v2562 = vld [vmem:[%s2345 + $0x122] sm:$0xff]
        %v2563 = vld [vmem:[%s2345 + $0x12a] sm:$0xff]
        %v2564 = vld [vmem:[%s2345 + $0x13a] sm:$0xff]
        %v2565 = vld [vmem:[%s2345 + $0x142] sm:$0xff]
        %v2566 = vld [vmem:[%s2345 + $0x152] sm:$0xff]
        %v2567 = vld [vmem:[%s2345 + $0x15a] sm:$0xff]
        %v2568 = vld [vmem:[%s2345 + $0x16a] sm:$0xff]
        %v2569 = vld [vmem:[%s2345 + $0x172] sm:$0xff]
        %s2570 = scalar_lea.vmem [#allocation3], 48
        %v2571 = vld [vmem:[%s2570] sm:$0xff]
        %v2572 = vld [vmem:[%s2570 + $0x8] sm:$0xff]
        %v2573 = vld [vmem:[%s2570 + $0x18] sm:$0xff]
        %v2574 = vld [vmem:[%s2570 + $0x20] sm:$0xff]
        %v2575 = vld [vmem:[%s2570 + $0x30] sm:$0xff]
        %v2576 = vld [vmem:[%s2570 + $0x38] sm:$0xff]
        %v2577 = vld [vmem:[%s2570 + $0x48] sm:$0xff]
        %v2578 = vld [vmem:[%s2570 + $0x50] sm:$0xff]
        %v2579 = vld [vmem:[%s2570 + $0x60] sm:$0xff]
        %v2580 = vld [vmem:[%s2570 + $0x68] sm:$0xff]
        %v2581 = vld [vmem:[%s2570 + $0x78] sm:$0xff]
        %v2582 = vld [vmem:[%s2570 + $0x80] sm:$0xff]
        %v2583 = vld [vmem:[%s2570 + $0x90] sm:$0xff]
        %v2584 = vld [vmem:[%s2570 + $0x98] sm:$0xff]
        %v2585 = vld [vmem:[%s2570 + $0xa8] sm:$0xff]
        %v2586 = vld [vmem:[%s2570 + $0xb0] sm:$0xff]
        %v2587 = vld [vmem:[%s2570 + $0xc0] sm:$0xff]
        %v2588 = vld [vmem:[%s2570 + $0xc8] sm:$0xff]
        %v2589 = vld [vmem:[%s2570 + $0xd8] sm:$0xff]
        %v2590 = vld [vmem:[%s2570 + $0xe0] sm:$0xff]
        %v2591 = vld [vmem:[%s2570 + $0xf0] sm:$0xff]
        %v2592 = vld [vmem:[%s2570 + $0xf8] sm:$0xff]
        %v2593 = vld [vmem:[%s2570 + $0x108] sm:$0xff]
        %v2594 = vld [vmem:[%s2570 + $0x110] sm:$0xff]
        %v2595 = vld [vmem:[%s2570 + $0x120] sm:$0xff]
        %v2596 = vld [vmem:[%s2570 + $0x128] sm:$0xff]
        %v2597 = vld [vmem:[%s2570 + $0x138] sm:$0xff]
        %v2598 = vld [vmem:[%s2570 + $0x140] sm:$0xff]
        %v2599 = vld [vmem:[%s2570 + $0x150] sm:$0xff]
        %v2600 = vld [vmem:[%s2570 + $0x158] sm:$0xff]
        %v2601 = vld [vmem:[%s2570 + $0x168] sm:$0xff]
        %v2602 = vld [vmem:[%s2570 + $0x170] sm:$0xff]
        %v2603 = vld [vmem:[%s2570 + $0x1] sm:$0xff]
        %v2604 = vld [vmem:[%s2570 + $0x9] sm:$0xff]
        %v2605 = vld [vmem:[%s2570 + $0x19] sm:$0xff]
        %v2606 = vld [vmem:[%s2570 + $0x21] sm:$0xff]
        %v2607 = vld [vmem:[%s2570 + $0x31] sm:$0xff]
        %v2608 = vld [vmem:[%s2570 + $0x39] sm:$0xff]
        %v2609 = vld [vmem:[%s2570 + $0x49] sm:$0xff]
        %v2610 = vld [vmem:[%s2570 + $0x51] sm:$0xff]
        %v2611 = vld [vmem:[%s2570 + $0x61] sm:$0xff]
        %v2612 = vld [vmem:[%s2570 + $0x69] sm:$0xff]
        %v2613 = vld [vmem:[%s2570 + $0x79] sm:$0xff]
        %v2614 = vld [vmem:[%s2570 + $0x81] sm:$0xff]
        %v2615 = vld [vmem:[%s2570 + $0x91] sm:$0xff]
        %v2616 = vld [vmem:[%s2570 + $0x99] sm:$0xff]
        %v2617 = vld [vmem:[%s2570 + $0xa9] sm:$0xff]
        %v2618 = vld [vmem:[%s2570 + $0xb1] sm:$0xff]
        %v2619 = vld [vmem:[%s2570 + $0xc1] sm:$0xff]
        %v2620 = vld [vmem:[%s2570 + $0xc9] sm:$0xff]
        %v2621 = vld [vmem:[%s2570 + $0xd9] sm:$0xff]
        %v2622 = vld [vmem:[%s2570 + $0xe1] sm:$0xff]
        %v2623 = vld [vmem:[%s2570 + $0xf1] sm:$0xff]
        %v2624 = vld [vmem:[%s2570 + $0xf9] sm:$0xff]
        %v2625 = vld [vmem:[%s2570 + $0x109] sm:$0xff]
        %v2626 = vld [vmem:[%s2570 + $0x111] sm:$0xff]
        %v2627 = vld [vmem:[%s2570 + $0x121] sm:$0xff]
        %v2628 = vld [vmem:[%s2570 + $0x129] sm:$0xff]
        %v2629 = vld [vmem:[%s2570 + $0x139] sm:$0xff]
        %v2630 = vld [vmem:[%s2570 + $0x141] sm:$0xff]
        %v2631 = vld [vmem:[%s2570 + $0x151] sm:$0xff]
        %v2632 = vld [vmem:[%s2570 + $0x159] sm:$0xff]
        %v2633 = vld [vmem:[%s2570 + $0x169] sm:$0xff]
        %v2634 = vld [vmem:[%s2570 + $0x171] sm:$0xff]
        %v2635 = vld [vmem:[%s2570 + $0x2] sm:$0xff]
        %v2636 = vld [vmem:[%s2570 + $0xa] sm:$0xff]
        %v2637 = vld [vmem:[%s2570 + $0x1a] sm:$0xff]
        %v2638 = vld [vmem:[%s2570 + $0x22] sm:$0xff]
        %v2639 = vld [vmem:[%s2570 + $0x32] sm:$0xff]
        %v2640 = vld [vmem:[%s2570 + $0x3a] sm:$0xff]
        %v2641 = vld [vmem:[%s2570 + $0x4a] sm:$0xff]
        %v2642 = vld [vmem:[%s2570 + $0x52] sm:$0xff]
        %v2643 = vld [vmem:[%s2570 + $0x62] sm:$0xff]
        %v2644 = vld [vmem:[%s2570 + $0x6a] sm:$0xff]
        %v2645 = vld [vmem:[%s2570 + $0x7a] sm:$0xff]
        %v2646 = vld [vmem:[%s2570 + $0x82] sm:$0xff]
        %v2647 = vld [vmem:[%s2570 + $0x92] sm:$0xff]
        %v2648 = vld [vmem:[%s2570 + $0x9a] sm:$0xff]
        %v2649 = vld [vmem:[%s2570 + $0xaa] sm:$0xff]
        %v2650 = vld [vmem:[%s2570 + $0xb2] sm:$0xff]
        %v2651 = vld [vmem:[%s2570 + $0xc2] sm:$0xff]
        %v2652 = vld [vmem:[%s2570 + $0xca] sm:$0xff]
        %v2653 = vld [vmem:[%s2570 + $0xda] sm:$0xff]
        %v2654 = vld [vmem:[%s2570 + $0xe2] sm:$0xff]
        %v2655 = vld [vmem:[%s2570 + $0xf2] sm:$0xff]
        %v2656 = vld [vmem:[%s2570 + $0xfa] sm:$0xff]
        %v2657 = vld [vmem:[%s2570 + $0x10a] sm:$0xff]
        %v2658 = vld [vmem:[%s2570 + $0x112] sm:$0xff]
        %v2659 = vld [vmem:[%s2570 + $0x122] sm:$0xff]
        %v2660 = vld [vmem:[%s2570 + $0x12a] sm:$0xff]
        %v2661 = vld [vmem:[%s2570 + $0x13a] sm:$0xff]
        %v2662 = vld [vmem:[%s2570 + $0x142] sm:$0xff]
        %v2663 = vld [vmem:[%s2570 + $0x152] sm:$0xff]
        %v2664 = vld [vmem:[%s2570 + $0x15a] sm:$0xff]
        %v2665 = vld [vmem:[%s2570 + $0x16a] sm:$0xff]
        %v2666 = vld [vmem:[%s2570 + $0x172] sm:$0xff]
        %2699 = vrot.lane.b32.xlu0 %v2410, 8
        %v2700 = vpop.permute.xlu0 %2699
        %2701 = vrot.lane.b32.xlu0 %v2411, 8
        %v2702 = vpop.permute.xlu0 %2701
        %2703 = vrot.lane.b32.xlu0 %v2412, 8
        %v2704 = vpop.permute.xlu0 %2703
        %2705 = vrot.lane.b32.xlu0 %v2413, 8
        %v2706 = vpop.permute.xlu0 %2705
        %2707 = vrot.lane.b32.xlu0 %v2414, 8
        %v2708 = vpop.permute.xlu0 %2707
        %2709 = vrot.lane.b32.xlu0 %v2415, 8
        %v2710 = vpop.permute.xlu0 %2709
        %2711 = vrot.lane.b32.xlu0 %v2416, 8
        %v2712 = vpop.permute.xlu0 %2711
        %2713 = vrot.lane.b32.xlu0 %v2417, 8
        %v2714 = vpop.permute.xlu0 %2713
        %2715 = vrot.lane.b32.xlu0 %v2418, 8
        %v2716 = vpop.permute.xlu0 %2715
        %2717 = vrot.lane.b32.xlu0 %v2419, 8
        %v2718 = vpop.permute.xlu0 %2717
        %2719 = vrot.lane.b32.xlu0 %v2420, 8
        %v2720 = vpop.permute.xlu0 %2719
        %2721 = vrot.lane.b32.xlu0 %v2421, 8
        %v2722 = vpop.permute.xlu0 %2721
        %2723 = vrot.lane.b32.xlu0 %v2422, 8
        %v2724 = vpop.permute.xlu0 %2723
        %2725 = vrot.lane.b32.xlu0 %v2423, 8
        %v2726 = vpop.permute.xlu0 %2725
        %2727 = vrot.lane.b32.xlu0 %v2424, 8
        %v2728 = vpop.permute.xlu0 %2727
        %2729 = vrot.lane.b32.xlu0 %v2425, 8
        %v2730 = vpop.permute.xlu0 %2729
        %2731 = vrot.lane.b32.xlu0 %v2426, 8
        %v2732 = vpop.permute.xlu0 %2731
        %2733 = vrot.lane.b32.xlu0 %v2427, 8
        %v2734 = vpop.permute.xlu0 %2733
        %2735 = vrot.lane.b32.xlu0 %v2428, 8
        %v2736 = vpop.permute.xlu0 %2735
        %2737 = vrot.lane.b32.xlu0 %v2429, 8
        %v2738 = vpop.permute.xlu0 %2737
        %2739 = vrot.lane.b32.xlu0 %v2430, 8
        %v2740 = vpop.permute.xlu0 %2739
        %2741 = vrot.lane.b32.xlu0 %v2431, 8
        %v2742 = vpop.permute.xlu0 %2741
        %2743 = vrot.lane.b32.xlu0 %v2432, 8
        %v2744 = vpop.permute.xlu0 %2743
        %2745 = vrot.lane.b32.xlu0 %v2433, 8
        %v2746 = vpop.permute.xlu0 %2745
        %2747 = vrot.lane.b32.xlu0 %v2434, 8
        %v2748 = vpop.permute.xlu0 %2747
        %2749 = vrot.lane.b32.xlu0 %v2435, 8
        %v2750 = vpop.permute.xlu0 %2749
        %2751 = vrot.lane.b32.xlu0 %v2436, 8
        %v2752 = vpop.permute.xlu0 %2751
        %2753 = vrot.lane.b32.xlu0 %v2437, 8
        %v2754 = vpop.permute.xlu0 %2753
        %2755 = vrot.lane.b32.xlu0 %v2438, 8
        %v2756 = vpop.permute.xlu0 %2755
        %2757 = vrot.lane.b32.xlu0 %v2439, 8
        %v2758 = vpop.permute.xlu0 %2757
        %2759 = vrot.lane.b32.xlu0 %v2440, 8
        %v2760 = vpop.permute.xlu0 %2759
        %2761 = vrot.lane.b32.xlu0 %v2441, 8
        %v2762 = vpop.permute.xlu0 %2761
        %2827 = vrot.lane.b32.xlu0 %v2442, 16
        %v2828 = vpop.permute.xlu0 %2827
        %2829 = vrot.lane.b32.xlu0 %v2443, 16
        %v2830 = vpop.permute.xlu0 %2829
        %2831 = vrot.lane.b32.xlu0 %v2444, 16
        %v2832 = vpop.permute.xlu0 %2831
        %2833 = vrot.lane.b32.xlu0 %v2445, 16
        %v2834 = vpop.permute.xlu0 %2833
        %2835 = vrot.lane.b32.xlu0 %v2446, 16
        %v2836 = vpop.permute.xlu0 %2835
        %2837 = vrot.lane.b32.xlu0 %v2447, 16
        %v2838 = vpop.permute.xlu0 %2837
        %2839 = vrot.lane.b32.xlu0 %v2448, 16
        %v2840 = vpop.permute.xlu0 %2839
        %2841 = vrot.lane.b32.xlu0 %v2449, 16
        %v2842 = vpop.permute.xlu0 %2841
        %2843 = vrot.lane.b32.xlu0 %v2450, 16
        %v2844 = vpop.permute.xlu0 %2843
        %2845 = vrot.lane.b32.xlu0 %v2451, 16
        %v2846 = vpop.permute.xlu0 %2845
        %2847 = vrot.lane.b32.xlu0 %v2452, 16
        %v2848 = vpop.permute.xlu0 %2847
        %2849 = vrot.lane.b32.xlu0 %v2453, 16
        %v2850 = vpop.permute.xlu0 %2849
        %2851 = vrot.lane.b32.xlu0 %v2454, 16
        %v2852 = vpop.permute.xlu0 %2851
        %2853 = vrot.lane.b32.xlu0 %v2455, 16
        %v2854 = vpop.permute.xlu0 %2853
        %2855 = vrot.lane.b32.xlu0 %v2456, 16
        %v2856 = vpop.permute.xlu0 %2855
        %2857 = vrot.lane.b32.xlu0 %v2457, 16
        %v2858 = vpop.permute.xlu0 %2857
        %2859 = vrot.lane.b32.xlu0 %v2458, 16
        %v2860 = vpop.permute.xlu0 %2859
        %2861 = vrot.lane.b32.xlu0 %v2459, 16
        %v2862 = vpop.permute.xlu0 %2861
        %2863 = vrot.lane.b32.xlu0 %v2460, 16
        %v2864 = vpop.permute.xlu0 %2863
        %2865 = vrot.lane.b32.xlu0 %v2461, 16
        %v2866 = vpop.permute.xlu0 %2865
        %2867 = vrot.lane.b32.xlu0 %v2462, 16
        %v2868 = vpop.permute.xlu0 %2867
        %2869 = vrot.lane.b32.xlu0 %v2463, 16
        %v2870 = vpop.permute.xlu0 %2869
        %2871 = vrot.lane.b32.xlu0 %v2464, 16
        %v2872 = vpop.permute.xlu0 %2871
        %2873 = vrot.lane.b32.xlu0 %v2465, 16
        %v2874 = vpop.permute.xlu0 %2873
        %2875 = vrot.lane.b32.xlu0 %v2466, 16
        %v2876 = vpop.permute.xlu0 %2875
        %2877 = vrot.lane.b32.xlu0 %v2467, 16
        %v2878 = vpop.permute.xlu0 %2877
        %2879 = vrot.lane.b32.xlu0 %v2468, 16
        %v2880 = vpop.permute.xlu0 %2879
        %2881 = vrot.lane.b32.xlu0 %v2469, 16
        %v2882 = vpop.permute.xlu0 %2881
        %2883 = vrot.lane.b32.xlu0 %v2470, 16
        %v2884 = vpop.permute.xlu0 %2883
        %2885 = vrot.lane.b32.xlu0 %v2471, 16
        %v2886 = vpop.permute.xlu0 %2885
        %2887 = vrot.lane.b32.xlu0 %v2472, 16
        %v2888 = vpop.permute.xlu0 %2887
        %2889 = vrot.lane.b32.xlu0 %v2473, 16
        %v2890 = vpop.permute.xlu0 %2889
        %2955 = vrot.lane.b32.xlu0 %v2474, 24
        %v2956 = vpop.permute.xlu0 %2955
        %2957 = vrot.lane.b32.xlu0 %v2475, 24
        %v2958 = vpop.permute.xlu0 %2957
        %2959 = vrot.lane.b32.xlu0 %v2476, 24
        %v2960 = vpop.permute.xlu0 %2959
        %2961 = vrot.lane.b32.xlu0 %v2477, 24
        %v2962 = vpop.permute.xlu0 %2961
        %2963 = vrot.lane.b32.xlu0 %v2478, 24
        %v2964 = vpop.permute.xlu0 %2963
        %2965 = vrot.lane.b32.xlu0 %v2479, 24
        %v2966 = vpop.permute.xlu0 %2965
        %2967 = vrot.lane.b32.xlu0 %v2480, 24
        %v2968 = vpop.permute.xlu0 %2967
        %2969 = vrot.lane.b32.xlu0 %v2481, 24
        %v2970 = vpop.permute.xlu0 %2969
        %2971 = vrot.lane.b32.xlu0 %v2482, 24
        %v2972 = vpop.permute.xlu0 %2971
        %2973 = vrot.lane.b32.xlu0 %v2483, 24
        %v2974 = vpop.permute.xlu0 %2973
        %2975 = vrot.lane.b32.xlu0 %v2484, 24
        %v2976 = vpop.permute.xlu0 %2975
        %2977 = vrot.lane.b32.xlu0 %v2485, 24
        %v2978 = vpop.permute.xlu0 %2977
        %2979 = vrot.lane.b32.xlu0 %v2486, 24
        %v2980 = vpop.permute.xlu0 %2979
        %2981 = vrot.lane.b32.xlu0 %v2487, 24
        %v2982 = vpop.permute.xlu0 %2981
        %2983 = vrot.lane.b32.xlu0 %v2488, 24
        %v2984 = vpop.permute.xlu0 %2983
        %2985 = vrot.lane.b32.xlu0 %v2489, 24
        %v2986 = vpop.permute.xlu0 %2985
        %2987 = vrot.lane.b32.xlu0 %v2490, 24
        %v2988 = vpop.permute.xlu0 %2987
        %2989 = vrot.lane.b32.xlu0 %v2491, 24
        %v2990 = vpop.permute.xlu0 %2989
        %2991 = vrot.lane.b32.xlu0 %v2492, 24
        %v2992 = vpop.permute.xlu0 %2991
        %2993 = vrot.lane.b32.xlu0 %v2493, 24
        %v2994 = vpop.permute.xlu0 %2993
        %2995 = vrot.lane.b32.xlu0 %v2494, 24
        %v2996 = vpop.permute.xlu0 %2995
        %2997 = vrot.lane.b32.xlu0 %v2495, 24
        %v2998 = vpop.permute.xlu0 %2997
        %2999 = vrot.lane.b32.xlu0 %v2496, 24
        %v3000 = vpop.permute.xlu0 %2999
        %3001 = vrot.lane.b32.xlu0 %v2497, 24
        %v3002 = vpop.permute.xlu0 %3001
        %3003 = vrot.lane.b32.xlu0 %v2498, 24
        %v3004 = vpop.permute.xlu0 %3003
        %3005 = vrot.lane.b32.xlu0 %v2499, 24
        %v3006 = vpop.permute.xlu0 %3005
        %3007 = vrot.lane.b32.xlu0 %v2500, 24
        %v3008 = vpop.permute.xlu0 %3007
        %3009 = vrot.lane.b32.xlu0 %v2501, 24
        %v3010 = vpop.permute.xlu0 %3009
        %3011 = vrot.lane.b32.xlu0 %v2502, 24
        %v3012 = vpop.permute.xlu0 %3011
        %3013 = vrot.lane.b32.xlu0 %v2503, 24
        %v3014 = vpop.permute.xlu0 %3013
        %3015 = vrot.lane.b32.xlu0 %v2504, 24
        %v3016 = vpop.permute.xlu0 %3015
        %3017 = vrot.lane.b32.xlu0 %v2505, 24
        %v3018 = vpop.permute.xlu0 %3017
        %3083 = vrot.lane.b32.xlu0 %v2506, 32
        %v3084 = vpop.permute.xlu0 %3083
        %3085 = vrot.lane.b32.xlu0 %v2507, 32
        %v3086 = vpop.permute.xlu0 %3085
        %3087 = vrot.lane.b32.xlu0 %v2508, 32
        %v3088 = vpop.permute.xlu0 %3087
        %3089 = vrot.lane.b32.xlu0 %v2509, 32
        %v3090 = vpop.permute.xlu0 %3089
        %3091 = vrot.lane.b32.xlu0 %v2510, 32
        %v3092 = vpop.permute.xlu0 %3091
        %3093 = vrot.lane.b32.xlu0 %v2511, 32
        %v3094 = vpop.permute.xlu0 %3093
        %3095 = vrot.lane.b32.xlu0 %v2512, 32
        %v3096 = vpop.permute.xlu0 %3095
        %3097 = vrot.lane.b32.xlu0 %v2513, 32
        %v3098 = vpop.permute.xlu0 %3097
        %3099 = vrot.lane.b32.xlu0 %v2514, 32
        %v3100 = vpop.permute.xlu0 %3099
        %3101 = vrot.lane.b32.xlu0 %v2515, 32
        %v3102 = vpop.permute.xlu0 %3101
        %3103 = vrot.lane.b32.xlu0 %v2516, 32
        %v3104 = vpop.permute.xlu0 %3103
        %3105 = vrot.lane.b32.xlu0 %v2517, 32
        %v3106 = vpop.permute.xlu0 %3105
        %3107 = vrot.lane.b32.xlu0 %v2518, 32
        %v3108 = vpop.permute.xlu0 %3107
        %3109 = vrot.lane.b32.xlu0 %v2519, 32
        %v3110 = vpop.permute.xlu0 %3109
        %3111 = vrot.lane.b32.xlu0 %v2520, 32
        %v3112 = vpop.permute.xlu0 %3111
        %3113 = vrot.lane.b32.xlu0 %v2521, 32
        %v3114 = vpop.permute.xlu0 %3113
        %3115 = vrot.lane.b32.xlu0 %v2522, 32
        %v3116 = vpop.permute.xlu0 %3115
        %3117 = vrot.lane.b32.xlu0 %v2523, 32
        %v3118 = vpop.permute.xlu0 %3117
        %3119 = vrot.lane.b32.xlu0 %v2524, 32
        %v3120 = vpop.permute.xlu0 %3119
        %3121 = vrot.lane.b32.xlu0 %v2525, 32
        %v3122 = vpop.permute.xlu0 %3121
        %3123 = vrot.lane.b32.xlu0 %v2526, 32
        %v3124 = vpop.permute.xlu0 %3123
        %3125 = vrot.lane.b32.xlu0 %v2527, 32
        %v3126 = vpop.permute.xlu0 %3125
        %3127 = vrot.lane.b32.xlu0 %v2528, 32
        %v3128 = vpop.permute.xlu0 %3127
        %3129 = vrot.lane.b32.xlu0 %v2529, 32
        %v3130 = vpop.permute.xlu0 %3129
        %3131 = vrot.lane.b32.xlu0 %v2530, 32
        %v3132 = vpop.permute.xlu0 %3131
        %3133 = vrot.lane.b32.xlu0 %v2531, 32
        %v3134 = vpop.permute.xlu0 %3133
        %3135 = vrot.lane.b32.xlu0 %v2532, 32
        %v3136 = vpop.permute.xlu0 %3135
        %3137 = vrot.lane.b32.xlu0 %v2533, 32
        %v3138 = vpop.permute.xlu0 %3137
        %3139 = vrot.lane.b32.xlu0 %v2534, 32
        %v3140 = vpop.permute.xlu0 %3139
        %3141 = vrot.lane.b32.xlu0 %v2535, 32
        %v3142 = vpop.permute.xlu0 %3141
        %3143 = vrot.lane.b32.xlu0 %v2536, 32
        %v3144 = vpop.permute.xlu0 %3143
        %3145 = vrot.lane.b32.xlu0 %v2537, 32
        %v3146 = vpop.permute.xlu0 %3145
        %3211 = vrot.lane.b32.xlu0 %v2538, 40
        %v3212 = vpop.permute.xlu0 %3211
        %3213 = vrot.lane.b32.xlu0 %v2539, 40
        %v3214 = vpop.permute.xlu0 %3213
        %3215 = vrot.lane.b32.xlu0 %v2540, 40
        %v3216 = vpop.permute.xlu0 %3215
        %3217 = vrot.lane.b32.xlu0 %v2541, 40
        %v3218 = vpop.permute.xlu0 %3217
        %3219 = vrot.lane.b32.xlu0 %v2542, 40
        %v3220 = vpop.permute.xlu0 %3219
        %3221 = vrot.lane.b32.xlu0 %v2543, 40
        %v3222 = vpop.permute.xlu0 %3221
        %3223 = vrot.lane.b32.xlu0 %v2544, 40
        %v3224 = vpop.permute.xlu0 %3223
        %3225 = vrot.lane.b32.xlu0 %v2545, 40
        %v3226 = vpop.permute.xlu0 %3225
        %3227 = vrot.lane.b32.xlu0 %v2546, 40
        %v3228 = vpop.permute.xlu0 %3227
        %3229 = vrot.lane.b32.xlu0 %v2547, 40
        %v3230 = vpop.permute.xlu0 %3229
        %3231 = vrot.lane.b32.xlu0 %v2548, 40
        %v3232 = vpop.permute.xlu0 %3231
        %3233 = vrot.lane.b32.xlu0 %v2549, 40
        %v3234 = vpop.permute.xlu0 %3233
        %3235 = vrot.lane.b32.xlu0 %v2550, 40
        %v3236 = vpop.permute.xlu0 %3235
        %3237 = vrot.lane.b32.xlu0 %v2551, 40
        %v3238 = vpop.permute.xlu0 %3237
        %3239 = vrot.lane.b32.xlu0 %v2552, 40
        %v3240 = vpop.permute.xlu0 %3239
        %3241 = vrot.lane.b32.xlu0 %v2553, 40
        %v3242 = vpop.permute.xlu0 %3241
        %3243 = vrot.lane.b32.xlu0 %v2554, 40
        %v3244 = vpop.permute.xlu0 %3243
        %3245 = vrot.lane.b32.xlu0 %v2555, 40
        %v3246 = vpop.permute.xlu0 %3245
        %3247 = vrot.lane.b32.xlu0 %v2556, 40
        %v3248 = vpop.permute.xlu0 %3247
        %3249 = vrot.lane.b32.xlu0 %v2557, 40
        %v3250 = vpop.permute.xlu0 %3249
        %3251 = vrot.lane.b32.xlu0 %v2558, 40
        %v3252 = vpop.permute.xlu0 %3251
        %3253 = vrot.lane.b32.xlu0 %v2559, 40
        %v3254 = vpop.permute.xlu0 %3253
        %3255 = vrot.lane.b32.xlu0 %v2560, 40
        %v3256 = vpop.permute.xlu0 %3255
        %3257 = vrot.lane.b32.xlu0 %v2561, 40
        %v3258 = vpop.permute.xlu0 %3257
        %3259 = vrot.lane.b32.xlu0 %v2562, 40
        %v3260 = vpop.permute.xlu0 %3259
        %3261 = vrot.lane.b32.xlu0 %v2563, 40
        %v3262 = vpop.permute.xlu0 %3261
        %3263 = vrot.lane.b32.xlu0 %v2564, 40
        %v3264 = vpop.permute.xlu0 %3263
        %3265 = vrot.lane.b32.xlu0 %v2565, 40
        %v3266 = vpop.permute.xlu0 %3265
        %3267 = vrot.lane.b32.xlu0 %v2566, 40
        %v3268 = vpop.permute.xlu0 %3267
        %3269 = vrot.lane.b32.xlu0 %v2567, 40
        %v3270 = vpop.permute.xlu0 %3269
        %3271 = vrot.lane.b32.xlu0 %v2568, 40
        %v3272 = vpop.permute.xlu0 %3271
        %3273 = vrot.lane.b32.xlu0 %v2569, 40
        %v3274 = vpop.permute.xlu0 %3273
        %3339 = vrot.lane.b32.xlu0 %v2571, 48
        %v3340 = vpop.permute.xlu0 %3339
        %3341 = vrot.lane.b32.xlu0 %v2572, 48
        %v3342 = vpop.permute.xlu0 %3341
        %3343 = vrot.lane.b32.xlu0 %v2573, 48
        %v3344 = vpop.permute.xlu0 %3343
        %3345 = vrot.lane.b32.xlu0 %v2574, 48
        %v3346 = vpop.permute.xlu0 %3345
        %3347 = vrot.lane.b32.xlu0 %v2575, 48
        %v3348 = vpop.permute.xlu0 %3347
        %3349 = vrot.lane.b32.xlu0 %v2576, 48
        %v3350 = vpop.permute.xlu0 %3349
        %3351 = vrot.lane.b32.xlu0 %v2577, 48
        %v3352 = vpop.permute.xlu0 %3351
        %3353 = vrot.lane.b32.xlu0 %v2578, 48
        %v3354 = vpop.permute.xlu0 %3353
        %3355 = vrot.lane.b32.xlu0 %v2579, 48
        %v3356 = vpop.permute.xlu0 %3355
        %3357 = vrot.lane.b32.xlu0 %v2580, 48
        %v3358 = vpop.permute.xlu0 %3357
        %3359 = vrot.lane.b32.xlu0 %v2581, 48
        %v3360 = vpop.permute.xlu0 %3359
        %3361 = vrot.lane.b32.xlu0 %v2582, 48
        %v3362 = vpop.permute.xlu0 %3361
        %3363 = vrot.lane.b32.xlu0 %v2583, 48
        %v3364 = vpop.permute.xlu0 %3363
        %3365 = vrot.lane.b32.xlu0 %v2584, 48
        %v3366 = vpop.permute.xlu0 %3365
        %3367 = vrot.lane.b32.xlu0 %v2585, 48
        %v3368 = vpop.permute.xlu0 %3367
        %3369 = vrot.lane.b32.xlu0 %v2586, 48
        %v3370 = vpop.permute.xlu0 %3369
        %3371 = vrot.lane.b32.xlu0 %v2587, 48
        %v3372 = vpop.permute.xlu0 %3371
        %3373 = vrot.lane.b32.xlu0 %v2588, 48
        %v3374 = vpop.permute.xlu0 %3373
        %3375 = vrot.lane.b32.xlu0 %v2589, 48
        %v3376 = vpop.permute.xlu0 %3375
        %3377 = vrot.lane.b32.xlu0 %v2590, 48
        %v3378 = vpop.permute.xlu0 %3377
        %3379 = vrot.lane.b32.xlu0 %v2591, 48
        %v3380 = vpop.permute.xlu0 %3379
        %3381 = vrot.lane.b32.xlu0 %v2592, 48
        %v3382 = vpop.permute.xlu0 %3381
        %3383 = vrot.lane.b32.xlu0 %v2593, 48
        %v3384 = vpop.permute.xlu0 %3383
        %3385 = vrot.lane.b32.xlu0 %v2594, 48
        %v3386 = vpop.permute.xlu0 %3385
        %3387 = vrot.lane.b32.xlu0 %v2595, 48
        %v3388 = vpop.permute.xlu0 %3387
        %3389 = vrot.lane.b32.xlu0 %v2596, 48
        %v3390 = vpop.permute.xlu0 %3389
        %3391 = vrot.lane.b32.xlu0 %v2597, 48
        %v3392 = vpop.permute.xlu0 %3391
        %3393 = vrot.lane.b32.xlu0 %v2598, 48
        %v3394 = vpop.permute.xlu0 %3393
        %3395 = vrot.lane.b32.xlu0 %v2599, 48
        %v3396 = vpop.permute.xlu0 %3395
        %3397 = vrot.lane.b32.xlu0 %v2600, 48
        %v3398 = vpop.permute.xlu0 %3397
        %3399 = vrot.lane.b32.xlu0 %v2601, 48
        %v3400 = vpop.permute.xlu0 %3399
        %3401 = vrot.lane.b32.xlu0 %v2602, 48
        %v3402 = vpop.permute.xlu0 %3401
        %3467 = vrot.lane.b32.xlu0 %v2603, 56
        %v3468 = vpop.permute.xlu0 %3467
        %3469 = vrot.lane.b32.xlu0 %v2604, 56
        %v3470 = vpop.permute.xlu0 %3469
        %3471 = vrot.lane.b32.xlu0 %v2605, 56
        %v3472 = vpop.permute.xlu0 %3471
        %3473 = vrot.lane.b32.xlu0 %v2606, 56
        %v3474 = vpop.permute.xlu0 %3473
        %3475 = vrot.lane.b32.xlu0 %v2607, 56
        %v3476 = vpop.permute.xlu0 %3475
        %3477 = vrot.lane.b32.xlu0 %v2608, 56
        %v3478 = vpop.permute.xlu0 %3477
        %3479 = vrot.lane.b32.xlu0 %v2609, 56
        %v3480 = vpop.permute.xlu0 %3479
        %3481 = vrot.lane.b32.xlu0 %v2610, 56
        %v3482 = vpop.permute.xlu0 %3481
        %3483 = vrot.lane.b32.xlu0 %v2611, 56
        %v3484 = vpop.permute.xlu0 %3483
        %3485 = vrot.lane.b32.xlu0 %v2612, 56
        %v3486 = vpop.permute.xlu0 %3485
        %3487 = vrot.lane.b32.xlu0 %v2613, 56
        %v3488 = vpop.permute.xlu0 %3487
        %3489 = vrot.lane.b32.xlu0 %v2614, 56
        %v3490 = vpop.permute.xlu0 %3489
        %3491 = vrot.lane.b32.xlu0 %v2615, 56
        %v3492 = vpop.permute.xlu0 %3491
        %3493 = vrot.lane.b32.xlu0 %v2616, 56
        %v3494 = vpop.permute.xlu0 %3493
        %3495 = vrot.lane.b32.xlu0 %v2617, 56
        %v3496 = vpop.permute.xlu0 %3495
        %3497 = vrot.lane.b32.xlu0 %v2618, 56
        %v3498 = vpop.permute.xlu0 %3497
        %3499 = vrot.lane.b32.xlu0 %v2619, 56
        %v3500 = vpop.permute.xlu0 %3499
        %3501 = vrot.lane.b32.xlu0 %v2620, 56
        %v3502 = vpop.permute.xlu0 %3501
        %3503 = vrot.lane.b32.xlu0 %v2621, 56
        %v3504 = vpop.permute.xlu0 %3503
        %3505 = vrot.lane.b32.xlu0 %v2622, 56
        %v3506 = vpop.permute.xlu0 %3505
        %3507 = vrot.lane.b32.xlu0 %v2623, 56
        %v3508 = vpop.permute.xlu0 %3507
        %3509 = vrot.lane.b32.xlu0 %v2624, 56
        %v3510 = vpop.permute.xlu0 %3509
        %3511 = vrot.lane.b32.xlu0 %v2625, 56
        %v3512 = vpop.permute.xlu0 %3511
        %3513 = vrot.lane.b32.xlu0 %v2626, 56
        %v3514 = vpop.permute.xlu0 %3513
        %3515 = vrot.lane.b32.xlu0 %v2627, 56
        %v3516 = vpop.permute.xlu0 %3515
        %3517 = vrot.lane.b32.xlu0 %v2628, 56
        %v3518 = vpop.permute.xlu0 %3517
        %3519 = vrot.lane.b32.xlu0 %v2629, 56
        %v3520 = vpop.permute.xlu0 %3519
        %3521 = vrot.lane.b32.xlu0 %v2630, 56
        %v3522 = vpop.permute.xlu0 %3521
        %3523 = vrot.lane.b32.xlu0 %v2631, 56
        %v3524 = vpop.permute.xlu0 %3523
        %3525 = vrot.lane.b32.xlu0 %v2632, 56
        %v3526 = vpop.permute.xlu0 %3525
        %3527 = vrot.lane.b32.xlu0 %v2633, 56
        %v3528 = vpop.permute.xlu0 %3527
        %3529 = vrot.lane.b32.xlu0 %v2634, 56
        %v3530 = vpop.permute.xlu0 %3529
        %3595 = vrot.lane.b32.xlu0 %v2635, 64
        %v3596 = vpop.permute.xlu0 %3595
        %3597 = vrot.lane.b32.xlu0 %v2636, 64
        %v3598 = vpop.permute.xlu0 %3597
        %3599 = vrot.lane.b32.xlu0 %v2637, 64
        %v3600 = vpop.permute.xlu0 %3599
        %3601 = vrot.lane.b32.xlu0 %v2638, 64
        %v3602 = vpop.permute.xlu0 %3601
        %3603 = vrot.lane.b32.xlu0 %v2639, 64
        %v3604 = vpop.permute.xlu0 %3603
        %3605 = vrot.lane.b32.xlu0 %v2640, 64
        %v3606 = vpop.permute.xlu0 %3605
        %3607 = vrot.lane.b32.xlu0 %v2641, 64
        %v3608 = vpop.permute.xlu0 %3607
        %3609 = vrot.lane.b32.xlu0 %v2642, 64
        %v3610 = vpop.permute.xlu0 %3609
        %3611 = vrot.lane.b32.xlu0 %v2643, 64
        %v3612 = vpop.permute.xlu0 %3611
        %3613 = vrot.lane.b32.xlu0 %v2644, 64
        %v3614 = vpop.permute.xlu0 %3613
        %3615 = vrot.lane.b32.xlu0 %v2645, 64
        %v3616 = vpop.permute.xlu0 %3615
        %3617 = vrot.lane.b32.xlu0 %v2646, 64
        %v3618 = vpop.permute.xlu0 %3617
        %3619 = vrot.lane.b32.xlu0 %v2647, 64
        %v3620 = vpop.permute.xlu0 %3619
        %3621 = vrot.lane.b32.xlu0 %v2648, 64
        %v3622 = vpop.permute.xlu0 %3621
        %3623 = vrot.lane.b32.xlu0 %v2649, 64
        %v3624 = vpop.permute.xlu0 %3623
        %3625 = vrot.lane.b32.xlu0 %v2650, 64
        %v3626 = vpop.permute.xlu0 %3625
        %3627 = vrot.lane.b32.xlu0 %v2651, 64
        %v3628 = vpop.permute.xlu0 %3627
        %3629 = vrot.lane.b32.xlu0 %v2652, 64
        %v3630 = vpop.permute.xlu0 %3629
        %3631 = vrot.lane.b32.xlu0 %v2653, 64
        %v3632 = vpop.permute.xlu0 %3631
        %3633 = vrot.lane.b32.xlu0 %v2654, 64
        %v3634 = vpop.permute.xlu0 %3633
        %3635 = vrot.lane.b32.xlu0 %v2655, 64
        %v3636 = vpop.permute.xlu0 %3635
        %3637 = vrot.lane.b32.xlu0 %v2656, 64
        %v3638 = vpop.permute.xlu0 %3637
        %3639 = vrot.lane.b32.xlu0 %v2657, 64
        %v3640 = vpop.permute.xlu0 %3639
        %3641 = vrot.lane.b32.xlu0 %v2658, 64
        %v3642 = vpop.permute.xlu0 %3641
        %3643 = vrot.lane.b32.xlu0 %v2659, 64
        %v3644 = vpop.permute.xlu0 %3643
        %3645 = vrot.lane.b32.xlu0 %v2660, 64
        %v3646 = vpop.permute.xlu0 %3645
        %3647 = vrot.lane.b32.xlu0 %v2661, 64
        %v3648 = vpop.permute.xlu0 %3647
        %3649 = vrot.lane.b32.xlu0 %v2662, 64
        %v3650 = vpop.permute.xlu0 %3649
        %3651 = vrot.lane.b32.xlu0 %v2663, 64
        %v3652 = vpop.permute.xlu0 %3651
        %3653 = vrot.lane.b32.xlu0 %v2664, 64
        %v3654 = vpop.permute.xlu0 %3653
        %3655 = vrot.lane.b32.xlu0 %v2665, 64
        %v3656 = vpop.permute.xlu0 %3655
        %3657 = vrot.lane.b32.xlu0 %v2666, 64
        %v3658 = vpop.permute.xlu0 %3657
        %v3691 = vsel %vm1689, %v2378, %v2700
        %v3692 = vsel %vm1689, %v2379, %v2702
        %v3693 = vsel %vm1689, %v2380, %v2704
        %v3694 = vsel %vm1689, %v2381, %v2706
        %v3695 = vsel %vm1689, %v2382, %v2708
        %v3696 = vsel %vm1689, %v2383, %v2710
        %v3697 = vsel %vm1689, %v2384, %v2712
        %v3698 = vsel %vm1689, %v2385, %v2714
        %v3699 = vsel %vm1689, %v2386, %v2716
        %v3700 = vsel %vm1689, %v2387, %v2718
        %v3701 = vsel %vm1689, %v2388, %v2720
        %v3702 = vsel %vm1689, %v2389, %v2722
        %v3703 = vsel %vm1689, %v2390, %v2724
        %v3704 = vsel %vm1689, %v2391, %v2726
        %v3705 = vsel %vm1689, %v2392, %v2728
        %v3706 = vsel %vm1689, %v2393, %v2730
        %v3707 = vsel %vm1689, %v2394, %v2732
        %v3708 = vsel %vm1689, %v2395, %v2734
        %v3709 = vsel %vm1689, %v2396, %v2736
        %v3710 = vsel %vm1689, %v2397, %v2738
        %v3711 = vsel %vm1689, %v2398, %v2740
        %v3712 = vsel %vm1689, %v2399, %v2742
        %v3713 = vsel %vm1689, %v2400, %v2744
        %v3714 = vsel %vm1689, %v2401, %v2746
        %v3715 = vsel %vm1689, %v2402, %v2748
        %v3716 = vsel %vm1689, %v2403, %v2750
        %v3717 = vsel %vm1689, %v2404, %v2752
        %v3718 = vsel %vm1689, %v2405, %v2754
        %v3719 = vsel %vm1689, %v2406, %v2756
        %v3720 = vsel %vm1689, %v2407, %v2758
        %v3721 = vsel %vm1689, %v2408, %v2760
        %v3722 = vsel %vm1689, %v2409, %v2762
        %v3723 = vsel %vm1755, %v3691, %v2828
        %v3724 = vsel %vm1755, %v3692, %v2830
        %v3725 = vsel %vm1755, %v3693, %v2832
        %v3726 = vsel %vm1755, %v3694, %v2834
        %v3727 = vsel %vm1755, %v3695, %v2836
        %v3728 = vsel %vm1755, %v3696, %v2838
        %v3729 = vsel %vm1755, %v3697, %v2840
        %v3730 = vsel %vm1755, %v3698, %v2842
        %v3731 = vsel %vm1755, %v3699, %v2844
        %v3732 = vsel %vm1755, %v3700, %v2846
        %v3733 = vsel %vm1755, %v3701, %v2848
        %v3734 = vsel %vm1755, %v3702, %v2850
        %v3735 = vsel %vm1755, %v3703, %v2852
        %v3736 = vsel %vm1755, %v3704, %v2854
        %v3737 = vsel %vm1755, %v3705, %v2856
        %v3738 = vsel %vm1755, %v3706, %v2858
        %v3739 = vsel %vm1755, %v3707, %v2860
        %v3740 = vsel %vm1755, %v3708, %v2862
        %v3741 = vsel %vm1755, %v3709, %v2864
        %v3742 = vsel %vm1755, %v3710, %v2866
        %v3743 = vsel %vm1755, %v3711, %v2868
        %v3744 = vsel %vm1755, %v3712, %v2870
        %v3745 = vsel %vm1755, %v3713, %v2872
        %v3746 = vsel %vm1755, %v3714, %v2874
        %v3747 = vsel %vm1755, %v3715, %v2876
        %v3748 = vsel %vm1755, %v3716, %v2878
        %v3749 = vsel %vm1755, %v3717, %v2880
        %v3750 = vsel %vm1755, %v3718, %v2882
        %v3751 = vsel %vm1755, %v3719, %v2884
        %v3752 = vsel %vm1755, %v3720, %v2886
        %v3753 = vsel %vm1755, %v3721, %v2888
        %v3754 = vsel %vm1755, %v3722, %v2890
        %v3755 = vsel %vm1821, %v3723, %v2956
        %v3756 = vsel %vm1821, %v3724, %v2958
        %v3757 = vsel %vm1821, %v3725, %v2960
        %v3758 = vsel %vm1821, %v3726, %v2962
        %v3759 = vsel %vm1821, %v3727, %v2964
        %v3760 = vsel %vm1821, %v3728, %v2966
        %v3761 = vsel %vm1821, %v3729, %v2968
        %v3762 = vsel %vm1821, %v3730, %v2970
        %v3763 = vsel %vm1821, %v3731, %v2972
        %v3764 = vsel %vm1821, %v3732, %v2974
        %v3765 = vsel %vm1821, %v3733, %v2976
        %v3766 = vsel %vm1821, %v3734, %v2978
        %v3767 = vsel %vm1821, %v3735, %v2980
        %v3768 = vsel %vm1821, %v3736, %v2982
        %v3769 = vsel %vm1821, %v3737, %v2984
        %v3770 = vsel %vm1821, %v3738, %v2986
        %v3771 = vsel %vm1821, %v3739, %v2988
        %v3772 = vsel %vm1821, %v3740, %v2990
        %v3773 = vsel %vm1821, %v3741, %v2992
        %v3774 = vsel %vm1821, %v3742, %v2994
        %v3775 = vsel %vm1821, %v3743, %v2996
        %v3776 = vsel %vm1821, %v3744, %v2998
        %v3777 = vsel %vm1821, %v3745, %v3000
        %v3778 = vsel %vm1821, %v3746, %v3002
        %v3779 = vsel %vm1821, %v3747, %v3004
        %v3780 = vsel %vm1821, %v3748, %v3006
        %v3781 = vsel %vm1821, %v3749, %v3008
        %v3782 = vsel %vm1821, %v3750, %v3010
        %v3783 = vsel %vm1821, %v3751, %v3012
        %v3784 = vsel %vm1821, %v3752, %v3014
        %v3785 = vsel %vm1821, %v3753, %v3016
        %v3786 = vsel %vm1821, %v3754, %v3018
        %v3787 = vsel %vm1887, %v3755, %v3084
        %v3788 = vsel %vm1887, %v3756, %v3086
        %v3789 = vsel %vm1887, %v3757, %v3088
        %v3790 = vsel %vm1887, %v3758, %v3090
        %v3791 = vsel %vm1887, %v3759, %v3092
        %v3792 = vsel %vm1887, %v3760, %v3094
        %v3793 = vsel %vm1887, %v3761, %v3096
        %v3794 = vsel %vm1887, %v3762, %v3098
        %v3795 = vsel %vm1887, %v3763, %v3100
        %v3796 = vsel %vm1887, %v3764, %v3102
        %v3797 = vsel %vm1887, %v3765, %v3104
        %v3798 = vsel %vm1887, %v3766, %v3106
        %v3799 = vsel %vm1887, %v3767, %v3108
        %v3800 = vsel %vm1887, %v3768, %v3110
        %v3801 = vsel %vm1887, %v3769, %v3112
        %v3802 = vsel %vm1887, %v3770, %v3114
        %v3803 = vsel %vm1887, %v3771, %v3116
        %v3804 = vsel %vm1887, %v3772, %v3118
        %v3805 = vsel %vm1887, %v3773, %v3120
        %v3806 = vsel %vm1887, %v3774, %v3122
        %v3807 = vsel %vm1887, %v3775, %v3124
        %v3808 = vsel %vm1887, %v3776, %v3126
        %v3809 = vsel %vm1887, %v3777, %v3128
        %v3810 = vsel %vm1887, %v3778, %v3130
        %v3811 = vsel %vm1887, %v3779, %v3132
        %v3812 = vsel %vm1887, %v3780, %v3134
        %v3813 = vsel %vm1887, %v3781, %v3136
        %v3814 = vsel %vm1887, %v3782, %v3138
        %v3815 = vsel %vm1887, %v3783, %v3140
        %v3816 = vsel %vm1887, %v3784, %v3142
        %v3817 = vsel %vm1887, %v3785, %v3144
        %v3818 = vsel %vm1887, %v3786, %v3146
        %vm3819 = vcmask 326656
        %v3820 = vsel %vm3819, %v3787, %v3212
        %v3821 = vsel %vm3819, %v3788, %v3214
        %v3822 = vsel %vm3819, %v3789, %v3216
        %v3823 = vsel %vm3819, %v3790, %v3218
        %v3824 = vsel %vm3819, %v3791, %v3220
        %v3825 = vsel %vm3819, %v3792, %v3222
        %v3826 = vsel %vm3819, %v3793, %v3224
        %v3827 = vsel %vm3819, %v3794, %v3226
        %v3828 = vsel %vm3819, %v3795, %v3228
        %v3829 = vsel %vm3819, %v3796, %v3230
        %v3830 = vsel %vm3819, %v3797, %v3232
        %v3831 = vsel %vm3819, %v3798, %v3234
        %v3832 = vsel %vm3819, %v3799, %v3236
        %v3833 = vsel %vm3819, %v3800, %v3238
        %v3834 = vsel %vm3819, %v3801, %v3240
        %v3835 = vsel %vm3819, %v3802, %v3242
        %v3836 = vsel %vm3819, %v3803, %v3244
        %v3837 = vsel %vm3819, %v3804, %v3246
        %v3838 = vsel %vm3819, %v3805, %v3248
        %v3839 = vsel %vm3819, %v3806, %v3250
        %v3840 = vsel %vm3819, %v3807, %v3252
        %v3841 = vsel %vm3819, %v3808, %v3254
        %v3842 = vsel %vm3819, %v3809, %v3256
        %v3843 = vsel %vm3819, %v3810, %v3258
        %v3844 = vsel %vm3819, %v3811, %v3260
        %v3845 = vsel %vm3819, %v3812, %v3262
        %v3846 = vsel %vm3819, %v3813, %v3264
        %v3847 = vsel %vm3819, %v3814, %v3266
        %v3848 = vsel %vm3819, %v3815, %v3268
        %v3849 = vsel %vm3819, %v3816, %v3270
        %v3850 = vsel %vm3819, %v3817, %v3272
        %v3851 = vsel %vm3819, %v3818, %v3274
        %vm3852 = vcmask 392192
        %v3853 = vsel %vm3852, %v3820, %v3340
        %v3854 = vsel %vm3852, %v3821, %v3342
        %v3855 = vsel %vm3852, %v3822, %v3344
        %v3856 = vsel %vm3852, %v3823, %v3346
        %v3857 = vsel %vm3852, %v3824, %v3348
        %v3858 = vsel %vm3852, %v3825, %v3350
        %v3859 = vsel %vm3852, %v3826, %v3352
        %v3860 = vsel %vm3852, %v3827, %v3354
        %v3861 = vsel %vm3852, %v3828, %v3356
        %v3862 = vsel %vm3852, %v3829, %v3358
        %v3863 = vsel %vm3852, %v3830, %v3360
        %v3864 = vsel %vm3852, %v3831, %v3362
        %v3865 = vsel %vm3852, %v3832, %v3364
        %v3866 = vsel %vm3852, %v3833, %v3366
        %v3867 = vsel %vm3852, %v3834, %v3368
        %v3868 = vsel %vm3852, %v3835, %v3370
        %v3869 = vsel %vm3852, %v3836, %v3372
        %v3870 = vsel %vm3852, %v3837, %v3374
        %v3871 = vsel %vm3852, %v3838, %v3376
        %v3872 = vsel %vm3852, %v3839, %v3378
        %v3873 = vsel %vm3852, %v3840, %v3380
        %v3874 = vsel %vm3852, %v3841, %v3382
        %v3875 = vsel %vm3852, %v3842, %v3384
        %v3876 = vsel %vm3852, %v3843, %v3386
        %v3877 = vsel %vm3852, %v3844, %v3388
        %v3878 = vsel %vm3852, %v3845, %v3390
        %v3879 = vsel %vm3852, %v3846, %v3392
        %v3880 = vsel %vm3852, %v3847, %v3394
        %v3881 = vsel %vm3852, %v3848, %v3396
        %v3882 = vsel %vm3852, %v3849, %v3398
        %v3883 = vsel %vm3852, %v3850, %v3400
        %v3884 = vsel %vm3852, %v3851, %v3402
        %vm3885 = vcmask 457728
        %v3886 = vsel %vm3885, %v3853, %v3468
        %v3887 = vsel %vm3885, %v3854, %v3470
        %v3888 = vsel %vm3885, %v3855, %v3472
        %v3889 = vsel %vm3885, %v3856, %v3474
        %v3890 = vsel %vm3885, %v3857, %v3476
        %v3891 = vsel %vm3885, %v3858, %v3478
        %v3892 = vsel %vm3885, %v3859, %v3480
        %v3893 = vsel %vm3885, %v3860, %v3482
        %v3894 = vsel %vm3885, %v3861, %v3484
        %v3895 = vsel %vm3885, %v3862, %v3486
        %v3896 = vsel %vm3885, %v3863, %v3488
        %v3897 = vsel %vm3885, %v3864, %v3490
        %v3898 = vsel %vm3885, %v3865, %v3492
        %v3899 = vsel %vm3885, %v3866, %v3494
        %v3900 = vsel %vm3885, %v3867, %v3496
        %v3901 = vsel %vm3885, %v3868, %v3498
        %v3902 = vsel %vm3885, %v3869, %v3500
        %v3903 = vsel %vm3885, %v3870, %v3502
        %v3904 = vsel %vm3885, %v3871, %v3504
        %v3905 = vsel %vm3885, %v3872, %v3506
        %v3906 = vsel %vm3885, %v3873, %v3508
        %v3907 = vsel %vm3885, %v3874, %v3510
        %v3908 = vsel %vm3885, %v3875, %v3512
        %v3909 = vsel %vm3885, %v3876, %v3514
        %v3910 = vsel %vm3885, %v3877, %v3516
        %v3911 = vsel %vm3885, %v3878, %v3518
        %v3912 = vsel %vm3885, %v3879, %v3520
        %v3913 = vsel %vm3885, %v3880, %v3522
        %v3914 = vsel %vm3885, %v3881, %v3524
        %v3915 = vsel %vm3885, %v3882, %v3526
        %v3916 = vsel %vm3885, %v3883, %v3528
        %v3917 = vsel %vm3885, %v3884, %v3530
        %vm3918 = vcmask 523264
        %v3919 = vsel %vm3918, %v3886, %v3596
        %v3920 = vsel %vm3918, %v3887, %v3598
        %v3921 = vsel %vm3918, %v3888, %v3600
        %v3922 = vsel %vm3918, %v3889, %v3602
        %v3923 = vsel %vm3918, %v3890, %v3604
        %v3924 = vsel %vm3918, %v3891, %v3606
        %v3925 = vsel %vm3918, %v3892, %v3608
        %v3926 = vsel %vm3918, %v3893, %v3610
        %v3927 = vsel %vm3918, %v3894, %v3612
        %v3928 = vsel %vm3918, %v3895, %v3614
        %v3929 = vsel %vm3918, %v3896, %v3616
        %v3930 = vsel %vm3918, %v3897, %v3618
        %v3931 = vsel %vm3918, %v3898, %v3620
        %v3932 = vsel %vm3918, %v3899, %v3622
        %v3933 = vsel %vm3918, %v3900, %v3624
        %v3934 = vsel %vm3918, %v3901, %v3626
        %v3935 = vsel %vm3918, %v3902, %v3628
        %v3936 = vsel %vm3918, %v3903, %v3630
        %v3937 = vsel %vm3918, %v3904, %v3632
        %v3938 = vsel %vm3918, %v3905, %v3634
        %v3939 = vsel %vm3918, %v3906, %v3636
        %v3940 = vsel %vm3918, %v3907, %v3638
        %v3941 = vsel %vm3918, %v3908, %v3640
        %v3942 = vsel %vm3918, %v3909, %v3642
        %v3943 = vsel %vm3918, %v3910, %v3644
        %v3944 = vsel %vm3918, %v3911, %v3646
        %v3945 = vsel %vm3918, %v3912, %v3648
        %v3946 = vsel %vm3918, %v3913, %v3650
        %v3947 = vsel %vm3918, %v3914, %v3652
        %v3948 = vsel %vm3918, %v3915, %v3654
        %v3949 = vsel %vm3918, %v3916, %v3656
        %v3950 = vsel %vm3918, %v3917, %v3658
        %v3951 = vld [vmem:[%s3] sm:$0xff]
        %v3952 = vld [vmem:[%s3 + $0x8] sm:$0xff]
        %v3953 = vld [vmem:[%s3 + $0x10] sm:$0xff]
        %v3954 = vld [vmem:[%s3 + $0x18] sm:$0xff]
        %v3955 = vld [vmem:[%s3 + $0x20] sm:$0xff]
        %v3956 = vld [vmem:[%s3 + $0x28] sm:$0xff]
        %v3957 = vld [vmem:[%s3 + $0x30] sm:$0xff]
        %v3958 = vld [vmem:[%s3 + $0x38] sm:$0xff]
        %v3959 = vld [vmem:[%s3 + $0x40] sm:$0xff]
        %v3960 = vld [vmem:[%s4] sm:$0x1]
        %v3962 = vlaneseq
        %v3963 = vshrl.u32 %v3962, 7
        %v3964 = vsub.s32 0, %v3963
        %v3965 = vrot.slane %v3960, %v3964
        %vm3967 = vcmask 588800
        %v3969 = vsel %vm3967, %v3919, 0
        %v3972 = vsel %vm3967, %v3920, 0
        %v3975 = vsel %vm3967, %v3921, 0
        %v3978 = vsel %vm3967, %v3922, 0
        %v3981 = vsel %vm3967, %v3923, 0
        %v3984 = vsel %vm3967, %v3924, 0
        %v3987 = vsel %vm3967, %v3925, 0
        %v3990 = vsel %vm3967, %v3926, 0
        %v3993 = vsel %vm3967, %v3927, 0
        %v3996 = vsel %vm3967, %v3928, 0
        %v3999 = vsel %vm3967, %v3929, 0
        %v4002 = vsel %vm3967, %v3930, 0
        %v4005 = vsel %vm3967, %v3931, 0
        %v4008 = vsel %vm3967, %v3932, 0
        %v4011 = vsel %vm3967, %v3933, 0
        %v4014 = vsel %vm3967, %v3934, 0
        %v4017 = vsel %vm3967, %v3935, 0
        %v4020 = vsel %vm3967, %v3936, 0
        %v4023 = vsel %vm3967, %v3937, 0
        %v4026 = vsel %vm3967, %v3938, 0
        %v4029 = vsel %vm3967, %v3939, 0
        %v4032 = vsel %vm3967, %v3940, 0
        %v4035 = vsel %vm3967, %v3941, 0
        %v4038 = vsel %vm3967, %v3942, 0
        %v4041 = vsel %vm3967, %v3943, 0
        %v4044 = vsel %vm3967, %v3944, 0
        %v4047 = vsel %vm3967, %v3945, 0
        %v4050 = vsel %vm3967, %v3946, 0
        %v4053 = vsel %vm3967, %v3947, 0
        %v4056 = vsel %vm3967, %v3948, 0
        %v4059 = vsel %vm3967, %v3949, 0
        %v4062 = vsel %vm3967, %v3950, 0
        %4064 = vmatprep.subr.mxu0 0.0
        %4065 = vmatpush1.msra.mxu0 0.0
        %4066 = vmatprep.subr.mxu0 0.0
        %4067 = vmatpush1.msra.mxu0 0.0
        %4068 = vmatprep.subr.mxu0 0.0
        %4069 = vmatpush1.msra.mxu0 0.0
        %4070 = vmatprep.subr.mxu0 0.0
        %4071 = vmatpush1.msra.mxu0 0.0
        %4072 = vmatprep.subr.mxu0 0.0
        %4073 = vmatpush1.msra.mxu0 0.0
        %4074 = vmatprep.subr.mxu0 0.0
        %4075 = vmatpush1.msra.mxu0 0.0
        %4076 = vmatprep.subr.mxu0 0.0
        %4077 = vmatpush1.msra.mxu0 0.0
        %4078 = vmatprep.subr.mxu0 0.0
        %4079 = vmatpush1.msra.mxu0 %v3959
        %4080 = vmatprep.subr.mxu0 0.0
        %4081 = vmatpush1.msra.mxu0 %v3958
        %4082 = vmatprep.subr.mxu0 0.0
        %4083 = vmatpush1.msra.mxu0 %v3957
        %4084 = vmatprep.subr.mxu0 0.0
        %4085 = vmatpush1.msra.mxu0 %v3956
        %4086 = vmatprep.subr.mxu0 0.0
        %4087 = vmatpush1.msra.mxu0 %v3955
        %4088 = vmatprep.subr.mxu0 0.0
        %4089 = vmatpush1.msra.mxu0 %v3954
        %4090 = vmatprep.subr.mxu0 0.0
        %4091 = vmatpush1.msra.mxu0 %v3953
        %4092 = vmatprep.subr.mxu0 0.0
        %4093 = vmatpush1.msra.mxu0 %v3952
        %4094 = vmatprep.subr.mxu0 0.0
        %4095 = vmatpush1.msra.mxu0 %v3951
        %4096 = vmatprep.subr.mxu0 0.0
        %4097 = vmatpush2.msra.mxu0 0.0
        %4098 = vmatprep.subr.mxu0 0.0
        %4099 = vmatpush2.msra.mxu0 0.0
        %4100 = vmatprep.subr.mxu0 0.0
        %4101 = vmatpush2.msra.mxu0 0.0
        %4102 = vmatprep.subr.mxu0 0.0
        %4103 = vmatpush2.msra.mxu0 0.0
        %4104 = vmatprep.subr.mxu0 0.0
        %4105 = vmatpush2.msra.mxu0 0.0
        %4106 = vmatprep.subr.mxu0 0.0
        %4107 = vmatpush2.msra.mxu0 0.0
        %4108 = vmatprep.subr.mxu0 0.0
        %4109 = vmatpush2.msra.mxu0 0.0
        %4110 = vmatprep.subr.mxu0 0.0
        %4111 = vmatpush2.msra.mxu0 0.0
        %4112 = vmatprep.subr.mxu0 0.0
        %4113 = vmatpush2.msra.mxu0 0.0
        %4114 = vmatprep.subr.mxu0 0.0
        %4115 = vmatpush2.msra.mxu0 0.0
        %4116 = vmatprep.subr.mxu0 0.0
        %4117 = vmatpush2.msra.mxu0 0.0
        %4118 = vmatprep.subr.mxu0 0.0
        %4119 = vmatpush2.msra.mxu0 0.0
        %4120 = vmatprep.subr.mxu0 0.0
        %4121 = vmatpush2.msra.mxu0 0.0
        %4122 = vmatprep.subr.mxu0 0.0
        %4123 = vmatpush2.msra.mxu0 0.0
        %4124 = vmatprep.subr.mxu0 0.0
        %4125 = vmatpush2.msra.mxu0 0.0
        %4126 = vmatprep.subr.mxu0 0.0
        %4127 = vmatpush2.msra.mxu0 0.0
        %4128 = vmatprep.mubr.f32.mxu0 0.0
        %4129 = vmatmul.mubr.f32.gmra.mxu0 %v3969
        %v4130 = vpop.f32.mrf.mxu0
        %v4131 = vadd.f32 %v3965, %v4130
        %v4132 = vpop.f32.mrf.mxu0
        %4133 = vmatprep.mubr.f32.mxu0 0.0
        %4134 = vmatmul.mubr.f32.gmra.mxu0 %v3972
        %v4135 = vpop.f32.mrf.mxu0
        %v4136 = vadd.f32 %v3965, %v4135
        %v4137 = vpop.f32.mrf.mxu0
        %4138 = vmatprep.mubr.f32.mxu0 0.0
        %4139 = vmatmul.mubr.f32.gmra.mxu0 %v3975
        %v4140 = vpop.f32.mrf.mxu0
        %v4141 = vadd.f32 %v3965, %v4140
        %v4142 = vpop.f32.mrf.mxu0
        %4143 = vmatprep.mubr.f32.mxu0 0.0
        %4144 = vmatmul.mubr.f32.gmra.mxu0 %v3978
        %v4145 = vpop.f32.mrf.mxu0
        %v4146 = vadd.f32 %v3965, %v4145
        %v4147 = vpop.f32.mrf.mxu0
        %4148 = vmatprep.mubr.f32.mxu0 0.0
        %4149 = vmatmul.mubr.f32.gmra.mxu0 %v3981
        %v4150 = vpop.f32.mrf.mxu0
        %v4151 = vadd.f32 %v3965, %v4150
        %v4152 = vpop.f32.mrf.mxu0
        %4153 = vmatprep.mubr.f32.mxu0 0.0
        %4154 = vmatmul.mubr.f32.gmra.mxu0 %v3984
        %v4155 = vpop.f32.mrf.mxu0
        %v4156 = vadd.f32 %v3965, %v4155
        %v4157 = vpop.f32.mrf.mxu0
        %4158 = vmatprep.mubr.f32.mxu0 0.0
        %4159 = vmatmul.mubr.f32.gmra.mxu0 %v3987
        %v4160 = vpop.f32.mrf.mxu0
        %v4161 = vadd.f32 %v3965, %v4160
        %v4162 = vpop.f32.mrf.mxu0
        %4163 = vmatprep.mubr.f32.mxu0 0.0
        %4164 = vmatmul.mubr.f32.gmra.mxu0 %v3990
        %v4165 = vpop.f32.mrf.mxu0
        %v4166 = vadd.f32 %v3965, %v4165
        %v4167 = vpop.f32.mrf.mxu0
        %4168 = vmatprep.mubr.f32.mxu0 0.0
        %4169 = vmatmul.mubr.f32.gmra.mxu0 %v3993
        %v4170 = vpop.f32.mrf.mxu0
        %v4171 = vadd.f32 %v3965, %v4170
        %v4172 = vpop.f32.mrf.mxu0
        %4173 = vmatprep.mubr.f32.mxu0 0.0
        %4174 = vmatmul.mubr.f32.gmra.mxu0 %v3996
        %v4175 = vpop.f32.mrf.mxu0
        %v4176 = vadd.f32 %v3965, %v4175
        %v4177 = vpop.f32.mrf.mxu0
        %4178 = vmatprep.mubr.f32.mxu0 0.0
        %4179 = vmatmul.mubr.f32.gmra.mxu0 %v3999
        %v4180 = vpop.f32.mrf.mxu0
        %v4181 = vadd.f32 %v3965, %v4180
        %v4182 = vpop.f32.mrf.mxu0
        %4183 = vmatprep.mubr.f32.mxu0 0.0
        %4184 = vmatmul.mubr.f32.gmra.mxu0 %v4002
        %v4185 = vpop.f32.mrf.mxu0
        %v4186 = vadd.f32 %v3965, %v4185
        %v4187 = vpop.f32.mrf.mxu0
        %4188 = vmatprep.mubr.f32.mxu0 0.0
        %4189 = vmatmul.mubr.f32.gmra.mxu0 %v4005
        %v4190 = vpop.f32.mrf.mxu0
        %v4191 = vadd.f32 %v3965, %v4190
        %v4192 = vpop.f32.mrf.mxu0
        %4193 = vmatprep.mubr.f32.mxu0 0.0
        %4194 = vmatmul.mubr.f32.gmra.mxu0 %v4008
        %v4195 = vpop.f32.mrf.mxu0
        %v4196 = vadd.f32 %v3965, %v4195
        %v4197 = vpop.f32.mrf.mxu0
        %4198 = vmatprep.mubr.f32.mxu0 0.0
        %4199 = vmatmul.mubr.f32.gmra.mxu0 %v4011
        %v4200 = vpop.f32.mrf.mxu0
        %v4201 = vadd.f32 %v3965, %v4200
        %v4202 = vpop.f32.mrf.mxu0
        %4203 = vmatprep.mubr.f32.mxu0 0.0
        %4204 = vmatmul.mubr.f32.gmra.mxu0 %v4014
        %v4205 = vpop.f32.mrf.mxu0
        %v4206 = vadd.f32 %v3965, %v4205
        %v4207 = vpop.f32.mrf.mxu0
        %4208 = vmatprep.mubr.f32.mxu0 0.0
        %4209 = vmatmul.mubr.f32.gmra.mxu0 %v4017
        %v4210 = vpop.f32.mrf.mxu0
        %v4211 = vadd.f32 %v3965, %v4210
        %v4212 = vpop.f32.mrf.mxu0
        %4213 = vmatprep.mubr.f32.mxu0 0.0
        %4214 = vmatmul.mubr.f32.gmra.mxu0 %v4020
        %v4215 = vpop.f32.mrf.mxu0
        %v4216 = vadd.f32 %v3965, %v4215
        %v4217 = vpop.f32.mrf.mxu0
        %4218 = vmatprep.mubr.f32.mxu0 0.0
        %4219 = vmatmul.mubr.f32.gmra.mxu0 %v4023
        %v4220 = vpop.f32.mrf.mxu0
        %v4221 = vadd.f32 %v3965, %v4220
        %v4222 = vpop.f32.mrf.mxu0
        %4223 = vmatprep.mubr.f32.mxu0 0.0
        %4224 = vmatmul.mubr.f32.gmra.mxu0 %v4026
        %v4225 = vpop.f32.mrf.mxu0
        %v4226 = vadd.f32 %v3965, %v4225
        %v4227 = vpop.f32.mrf.mxu0
        %4228 = vmatprep.mubr.f32.mxu0 0.0
        %4229 = vmatmul.mubr.f32.gmra.mxu0 %v4029
        %v4230 = vpop.f32.mrf.mxu0
        %v4231 = vadd.f32 %v3965, %v4230
        %v4232 = vpop.f32.mrf.mxu0
        %4233 = vmatprep.mubr.f32.mxu0 0.0
        %4234 = vmatmul.mubr.f32.gmra.mxu0 %v4032
        %v4235 = vpop.f32.mrf.mxu0
        %v4236 = vadd.f32 %v3965, %v4235
        %v4237 = vpop.f32.mrf.mxu0
        %4238 = vmatprep.mubr.f32.mxu0 0.0
        %4239 = vmatmul.mubr.f32.gmra.mxu0 %v4035
        %v4240 = vpop.f32.mrf.mxu0
        %v4241 = vadd.f32 %v3965, %v4240
        %v4242 = vpop.f32.mrf.mxu0
        %4243 = vmatprep.mubr.f32.mxu0 0.0
        %4244 = vmatmul.mubr.f32.gmra.mxu0 %v4038
        %v4245 = vpop.f32.mrf.mxu0
        %v4246 = vadd.f32 %v3965, %v4245
        %v4247 = vpop.f32.mrf.mxu0
        %4248 = vmatprep.mubr.f32.mxu0 0.0
        %4249 = vmatmul.mubr.f32.gmra.mxu0 %v4041
        %v4250 = vpop.f32.mrf.mxu0
        %v4251 = vadd.f32 %v3965, %v4250
        %v4252 = vpop.f32.mrf.mxu0
        %4253 = vmatprep.mubr.f32.mxu0 0.0
        %4254 = vmatmul.mubr.f32.gmra.mxu0 %v4044
        %v4255 = vpop.f32.mrf.mxu0
        %v4256 = vadd.f32 %v3965, %v4255
        %v4257 = vpop.f32.mrf.mxu0
        %4258 = vmatprep.mubr.f32.mxu0 0.0
        %4259 = vmatmul.mubr.f32.gmra.mxu0 %v4047
        %v4260 = vpop.f32.mrf.mxu0
        %v4261 = vadd.f32 %v3965, %v4260
        %v4262 = vpop.f32.mrf.mxu0
        %4263 = vmatprep.mubr.f32.mxu0 0.0
        %4264 = vmatmul.mubr.f32.gmra.mxu0 %v4050
        %v4265 = vpop.f32.mrf.mxu0
        %v4266 = vadd.f32 %v3965, %v4265
        %v4267 = vpop.f32.mrf.mxu0
        %4268 = vmatprep.mubr.f32.mxu0 0.0
        %4269 = vmatmul.mubr.f32.gmra.mxu0 %v4053
        %v4270 = vpop.f32.mrf.mxu0
        %v4271 = vadd.f32 %v3965, %v4270
        %v4272 = vpop.f32.mrf.mxu0
        %4273 = vmatprep.mubr.f32.mxu0 0.0
        %4274 = vmatmul.mubr.f32.gmra.mxu0 %v4056
        %v4275 = vpop.f32.mrf.mxu0
        %v4276 = vadd.f32 %v3965, %v4275
        %v4277 = vpop.f32.mrf.mxu0
        %4278 = vmatprep.mubr.f32.mxu0 0.0
        %4279 = vmatmul.mubr.f32.gmra.mxu0 %v4059
        %v4280 = vpop.f32.mrf.mxu0
        %v4281 = vadd.f32 %v3965, %v4280
        %v4282 = vpop.f32.mrf.mxu0
        %4283 = vmatprep.mubr.f32.mxu0 0.0
        %4284 = vmatmul.mubr.f32.gmra.mxu0 %v4062
        %v4285 = vpop.f32.mrf.mxu0
        %v4286 = vadd.f32 %v3965, %v4285
        %v4287 = vpop.f32.mrf.mxu0
        %4288 = vdwg.mxu0
        %v4289 = vmax.f32 %v4131, 0.0
        %v4290 = vmax.f32 %v4136, 0.0
        %v4291 = vmax.f32 %v4141, 0.0
        %v4292 = vmax.f32 %v4146, 0.0
        %v4293 = vmax.f32 %v4151, 0.0
        %v4294 = vmax.f32 %v4156, 0.0
        %v4295 = vmax.f32 %v4161, 0.0
        %v4296 = vmax.f32 %v4166, 0.0
        %v4297 = vmax.f32 %v4171, 0.0
        %v4298 = vmax.f32 %v4176, 0.0
        %v4299 = vmax.f32 %v4181, 0.0
        %v4300 = vmax.f32 %v4186, 0.0
        %v4301 = vmax.f32 %v4191, 0.0
        %v4302 = vmax.f32 %v4196, 0.0
        %v4303 = vmax.f32 %v4201, 0.0
        %v4304 = vmax.f32 %v4206, 0.0
        %v4305 = vmax.f32 %v4211, 0.0
        %v4306 = vmax.f32 %v4216, 0.0
        %v4307 = vmax.f32 %v4221, 0.0
        %v4308 = vmax.f32 %v4226, 0.0
        %v4309 = vmax.f32 %v4231, 0.0
        %v4310 = vmax.f32 %v4236, 0.0
        %v4311 = vmax.f32 %v4241, 0.0
        %v4312 = vmax.f32 %v4246, 0.0
        %v4313 = vmax.f32 %v4251, 0.0
        %v4314 = vmax.f32 %v4256, 0.0
        %v4315 = vmax.f32 %v4261, 0.0
        %v4316 = vmax.f32 %v4266, 0.0
        %v4317 = vmax.f32 %v4271, 0.0
        %v4318 = vmax.f32 %v4276, 0.0
        %v4319 = vmax.f32 %v4281, 0.0
        %v4320 = vmax.f32 %v4286, 0.0
        %4321 = vst.msk [vmem:[#allocation4] sm:$0xff] %vm1755, %v4289
        %4322 = vst.msk [vmem:[#allocation4 + $0x8] sm:$0xff] %vm1755, %v4290
        %4323 = vst.msk [vmem:[#allocation4 + $0x10] sm:$0xff] %vm1755, %v4291
        %4324 = vst.msk [vmem:[#allocation4 + $0x18] sm:$0xff] %vm1755, %v4292
        %4325 = vst.msk [vmem:[#allocation4 + $0x20] sm:$0xff] %vm1755, %v4293
        %4326 = vst.msk [vmem:[#allocation4 + $0x28] sm:$0xff] %vm1755, %v4294
        %4327 = vst.msk [vmem:[#allocation4 + $0x30] sm:$0xff] %vm1755, %v4295
        %4328 = vst.msk [vmem:[#allocation4 + $0x38] sm:$0xff] %vm1755, %v4296
        %4329 = vst.msk [vmem:[#allocation4 + $0x40] sm:$0xff] %vm1755, %v4297
        %4330 = vst.msk [vmem:[#allocation4 + $0x48] sm:$0xff] %vm1755, %v4298
        %4331 = vst.msk [vmem:[#allocation4 + $0x50] sm:$0xff] %vm1755, %v4299
        %4332 = vst.msk [vmem:[#allocation4 + $0x58] sm:$0xff] %vm1755, %v4300
        %4333 = vst.msk [vmem:[#allocation4 + $0x60] sm:$0xff] %vm1755, %v4301
        %4334 = vst.msk [vmem:[#allocation4 + $0x68] sm:$0xff] %vm1755, %v4302
        %4335 = vst.msk [vmem:[#allocation4 + $0x70] sm:$0xff] %vm1755, %v4303
        %4336 = vst.msk [vmem:[#allocation4 + $0x78] sm:$0xff] %vm1755, %v4304
        %4337 = vst.msk [vmem:[#allocation4 + $0x80] sm:$0xff] %vm1755, %v4305
        %4338 = vst.msk [vmem:[#allocation4 + $0x88] sm:$0xff] %vm1755, %v4306
        %4339 = vst.msk [vmem:[#allocation4 + $0x90] sm:$0xff] %vm1755, %v4307
        %4340 = vst.msk [vmem:[#allocation4 + $0x98] sm:$0xff] %vm1755, %v4308
        %4341 = vst.msk [vmem:[#allocation4 + $0xa0] sm:$0xff] %vm1755, %v4309
        %4342 = vst.msk [vmem:[#allocation4 + $0xa8] sm:$0xff] %vm1755, %v4310
        %4343 = vst.msk [vmem:[#allocation4 + $0xb0] sm:$0xff] %vm1755, %v4311
        %4344 = vst.msk [vmem:[#allocation4 + $0xb8] sm:$0xff] %vm1755, %v4312
        %4345 = vst.msk [vmem:[#allocation4 + $0xc0] sm:$0xff] %vm1755, %v4313
        %4346 = vst.msk [vmem:[#allocation4 + $0xc8] sm:$0xff] %vm1755, %v4314
        %4347 = vst.msk [vmem:[#allocation4 + $0xd0] sm:$0xff] %vm1755, %v4315
        %4348 = vst.msk [vmem:[#allocation4 + $0xd8] sm:$0xff] %vm1755, %v4316
        %4349 = vst.msk [vmem:[#allocation4 + $0xe0] sm:$0xff] %vm1755, %v4317
        %4350 = vst.msk [vmem:[#allocation4 + $0xe8] sm:$0xff] %vm1755, %v4318
        %4351 = vst.msk [vmem:[#allocation4 + $0xf0] sm:$0xff] %vm1755, %v4319
        %4352 = vst.msk [vmem:[#allocation4 + $0xf8] sm:$0xff] %vm1755, %v4320
        %v4353 = vld [vmem:[#allocation4] ss:$2 sm:$0xff]
        %s4354 = scalar_lea.vmem [#allocation4], 16
        %v4355 = vld [vmem:[%s4354] ss:$2 sm:$0xff]
        %s4356 = scalar_lea.vmem [#allocation4], 32
        %v4357 = vld [vmem:[%s4356] ss:$2 sm:$0xff]
        %s4358 = scalar_lea.vmem [#allocation4], 48
        %v4359 = vld [vmem:[%s4358] ss:$2 sm:$0xff]
        %s4360 = scalar_lea.vmem [#allocation4], 64
        %v4361 = vld [vmem:[%s4360] ss:$2 sm:$0xff]
        %s4362 = scalar_lea.vmem [#allocation4], 80
        %v4363 = vld [vmem:[%s4362] ss:$2 sm:$0xff]
        %s4364 = scalar_lea.vmem [#allocation4], 96
        %v4365 = vld [vmem:[%s4364] ss:$2 sm:$0xff]
        %s4366 = scalar_lea.vmem [#allocation4], 112
        %v4367 = vld [vmem:[%s4366] ss:$2 sm:$0xff]
        %s4368 = scalar_lea.vmem [#allocation4], 128
        %v4369 = vld [vmem:[%s4368] ss:$2 sm:$0xff]
        %s4370 = scalar_lea.vmem [#allocation4], 144
        %v4371 = vld [vmem:[%s4370] ss:$2 sm:$0xff]
        %s4372 = scalar_lea.vmem [#allocation4], 160
        %v4373 = vld [vmem:[%s4372] ss:$2 sm:$0xff]
        %s4374 = scalar_lea.vmem [#allocation4], 176
        %v4375 = vld [vmem:[%s4374] ss:$2 sm:$0xff]
        %s4376 = scalar_lea.vmem [#allocation4], 192
        %v4377 = vld [vmem:[%s4376] ss:$2 sm:$0xff]
        %s4378 = scalar_lea.vmem [#allocation4], 208
        %v4379 = vld [vmem:[%s4378] ss:$2 sm:$0xff]
        %s4380 = scalar_lea.vmem [#allocation4], 224
        %v4381 = vld [vmem:[%s4380] ss:$2 sm:$0xff]
        %s4382 = scalar_lea.vmem [#allocation4], 240
        %v4383 = vld [vmem:[%s4382] ss:$2 sm:$0xff]
        %s4384 = scalar_lea.vmem [#allocation4], 1
        %v4385 = vld [vmem:[%s4384] ss:$2 sm:$0xff]
        %s4386 = scalar_lea.vmem [#allocation4], 17
        %v4387 = vld [vmem:[%s4386] ss:$2 sm:$0xff]
        %s4388 = scalar_lea.vmem [#allocation4], 33
        %v4389 = vld [vmem:[%s4388] ss:$2 sm:$0xff]
        %s4390 = scalar_lea.vmem [#allocation4], 49
        %v4391 = vld [vmem:[%s4390] ss:$2 sm:$0xff]
        %s4392 = scalar_lea.vmem [#allocation4], 65
        %v4393 = vld [vmem:[%s4392] ss:$2 sm:$0xff]
        %s4394 = scalar_lea.vmem [#allocation4], 81
        %v4395 = vld [vmem:[%s4394] ss:$2 sm:$0xff]
        %s4396 = scalar_lea.vmem [#allocation4], 97
        %v4397 = vld [vmem:[%s4396] ss:$2 sm:$0xff]
        %s4398 = scalar_lea.vmem [#allocation4], 113
        %v4399 = vld [vmem:[%s4398] ss:$2 sm:$0xff]
        %s4400 = scalar_lea.vmem [#allocation4], 129
        %v4401 = vld [vmem:[%s4400] ss:$2 sm:$0xff]
        %s4402 = scalar_lea.vmem [#allocation4], 145
        %v4403 = vld [vmem:[%s4402] ss:$2 sm:$0xff]
        %s4404 = scalar_lea.vmem [#allocation4], 161
        %v4405 = vld [vmem:[%s4404] ss:$2 sm:$0xff]
        %s4406 = scalar_lea.vmem [#allocation4], 177
        %v4407 = vld [vmem:[%s4406] ss:$2 sm:$0xff]
        %s4408 = scalar_lea.vmem [#allocation4], 193
        %v4409 = vld [vmem:[%s4408] ss:$2 sm:$0xff]
        %s4410 = scalar_lea.vmem [#allocation4], 209
        %v4411 = vld [vmem:[%s4410] ss:$2 sm:$0xff]
        %s4412 = scalar_lea.vmem [#allocation4], 225
        %v4413 = vld [vmem:[%s4412] ss:$2 sm:$0xff]
        %s4414 = scalar_lea.vmem [#allocation4], 241
        %v4415 = vld [vmem:[%s4414] ss:$2 sm:$0xff]
        %v4416 = vmax.f32 %v4353, %v4385
        %v4417 = vmax.f32 %v4355, %v4387
        %v4418 = vmax.f32 %v4357, %v4389
        %v4419 = vmax.f32 %v4359, %v4391
        %v4420 = vmax.f32 %v4361, %v4393
        %v4421 = vmax.f32 %v4363, %v4395
        %v4422 = vmax.f32 %v4365, %v4397
        %v4423 = vmax.f32 %v4367, %v4399
        %v4424 = vmax.f32 %v4369, %v4401
        %v4425 = vmax.f32 %v4371, %v4403
        %v4426 = vmax.f32 %v4373, %v4405
        %v4427 = vmax.f32 %v4375, %v4407
        %v4428 = vmax.f32 %v4377, %v4409
        %v4429 = vmax.f32 %v4379, %v4411
        %v4430 = vmax.f32 %v4381, %v4413
        %v4431 = vmax.f32 %v4383, %v4415
        %4432 = vst.msk [vmem:[#allocation5] sm:$0xff] %vm1755, %v4416
        %4433 = vst.msk [vmem:[#allocation5 + $0x8] sm:$0xff] %vm1755, %v4417
        %4434 = vst.msk [vmem:[#allocation5 + $0x10] sm:$0xff] %vm1755, %v4418
        %4435 = vst.msk [vmem:[#allocation5 + $0x18] sm:$0xff] %vm1755, %v4419
        %4436 = vst.msk [vmem:[#allocation5 + $0x20] sm:$0xff] %vm1755, %v4420
        %4437 = vst.msk [vmem:[#allocation5 + $0x28] sm:$0xff] %vm1755, %v4421
        %4438 = vst.msk [vmem:[#allocation5 + $0x30] sm:$0xff] %vm1755, %v4422
        %4439 = vst.msk [vmem:[#allocation5 + $0x38] sm:$0xff] %vm1755, %v4423
        %4440 = vst.msk [vmem:[#allocation5 + $0x40] sm:$0xff] %vm1755, %v4424
        %4441 = vst.msk [vmem:[#allocation5 + $0x48] sm:$0xff] %vm1755, %v4425
        %4442 = vst.msk [vmem:[#allocation5 + $0x50] sm:$0xff] %vm1755, %v4426
        %4443 = vst.msk [vmem:[#allocation5 + $0x58] sm:$0xff] %vm1755, %v4427
        %4444 = vst.msk [vmem:[#allocation5 + $0x60] sm:$0xff] %vm1755, %v4428
        %4445 = vst.msk [vmem:[#allocation5 + $0x68] sm:$0xff] %vm1755, %v4429
        %4446 = vst.msk [vmem:[#allocation5 + $0x70] sm:$0xff] %vm1755, %v4430
        %4447 = vst.msk [vmem:[#allocation5 + $0x78] sm:$0xff] %vm1755, %v4431
        %v4448 = vld [vmem:[#allocation5] sm:$0xff]
        %v4449 = vld [vmem:[#allocation5 + $0x10] sm:$0xff]
        %v4450 = vld [vmem:[#allocation5 + $0x20] sm:$0xff]
        %v4451 = vld [vmem:[#allocation5 + $0x30] sm:$0xff]
        %v4452 = vld [vmem:[#allocation5 + $0x40] sm:$0xff]
        %v4453 = vld [vmem:[#allocation5 + $0x50] sm:$0xff]
        %v4454 = vld [vmem:[#allocation5 + $0x60] sm:$0xff]
        %v4455 = vld [vmem:[#allocation5 + $0x70] sm:$0xff]
        %s4456 = scalar_lea.vmem [#allocation5], 8
        %v4457 = vld [vmem:[%s4456] sm:$0xff]
        %v4458 = vld [vmem:[%s4456 + $0x10] sm:$0xff]
        %v4459 = vld [vmem:[%s4456 + $0x20] sm:$0xff]
        %v4460 = vld [vmem:[%s4456 + $0x30] sm:$0xff]
        %v4461 = vld [vmem:[%s4456 + $0x40] sm:$0xff]
        %v4462 = vld [vmem:[%s4456 + $0x50] sm:$0xff]
        %v4463 = vld [vmem:[%s4456 + $0x60] sm:$0xff]
        %v4464 = vld [vmem:[%s4456 + $0x70] sm:$0xff]
        %v4465 = vmax.f32 %v4448, %v4457
        %v4466 = vmax.f32 %v4449, %v4458
        %v4467 = vmax.f32 %v4450, %v4459
        %v4468 = vmax.f32 %v4451, %v4460
        %v4469 = vmax.f32 %v4452, %v4461
        %v4470 = vmax.f32 %v4453, %v4462
        %v4471 = vmax.f32 %v4454, %v4463
        %v4472 = vmax.f32 %v4455, %v4464
        %v4481 = vrot.slane %v4466, 7
        %vm4482 = vcmask 1041409
        %v4483 = vsel %vm4482, %v4481, %v4465
        %v4484 = vrot.slane %v4467, 6
        %vm4485 = vcmask 1042434
        %v4486 = vsel %vm4485, %v4484, %v4483
        %v4487 = vrot.slane %v4468, 5
        %vm4488 = vcmask 1043459
        %v4489 = vsel %vm4488, %v4487, %v4486
        %v4490 = vrot.slane %v4469, 4
        %vm4491 = vcmask 1044484
        %v4492 = vsel %vm4491, %v4490, %v4489
        %v4493 = vrot.slane %v4470, 3
        %vm4494 = vcmask 1045509
        %v4495 = vsel %vm4494, %v4493, %v4492
        %v4496 = vrot.slane %v4471, 2
        %vm4497 = vcmask 1046534
        %v4498 = vsel %vm4497, %v4496, %v4495
        %v4499 = vrot.slane %v4472, 1
        %vm4500 = vcmask 1047559
        %v4501 = vsel %vm4500, %v4499, %v4498
        %v4503 = vrot.slane %v4465, 1
        %v4504 = vsel %vm4482, %v4466, %v4503
        %v4505 = vrot.slane %v4467, 7
        %v4506 = vsel %vm4485, %v4505, %v4504
        %v4507 = vrot.slane %v4468, 6
        %v4508 = vsel %vm4488, %v4507, %v4506
        %v4509 = vrot.slane %v4469, 5
        %v4510 = vsel %vm4491, %v4509, %v4508
        %v4511 = vrot.slane %v4470, 4
        %v4512 = vsel %vm4494, %v4511, %v4510
        %v4513 = vrot.slane %v4471, 3
        %v4514 = vsel %vm4497, %v4513, %v4512
        %v4515 = vrot.slane %v4472, 2
        %v4516 = vsel %vm4500, %v4515, %v4514
        %4517 = vrot.lane.b32.xlu0 %v4516, 16
        %v4518 = vpop.permute.xlu0 %4517
        %v4520 = vrot.slane %v4465, 2
        %v4521 = vrot.slane %v4466, 1
        %v4522 = vsel %vm4482, %v4521, %v4520
        %v4523 = vsel %vm4485, %v4467, %v4522
        %v4524 = vrot.slane %v4468, 7
        %v4525 = vsel %vm4488, %v4524, %v4523
        %v4526 = vrot.slane %v4469, 6
        %v4527 = vsel %vm4491, %v4526, %v4525
        %v4528 = vrot.slane %v4470, 5
        %v4529 = vsel %vm4494, %v4528, %v4527
        %v4530 = vrot.slane %v4471, 4
        %v4531 = vsel %vm4497, %v4530, %v4529
        %v4532 = vrot.slane %v4472, 3
        %v4533 = vsel %vm4500, %v4532, %v4531
        %4534 = vrot.lane.b32.xlu0 %v4533, 32
        %v4535 = vpop.permute.xlu0 %4534
        %v4537 = vrot.slane %v4465, 3
        %v4538 = vrot.slane %v4466, 2
        %v4539 = vsel %vm4482, %v4538, %v4537
        %v4540 = vrot.slane %v4467, 1
        %v4541 = vsel %vm4485, %v4540, %v4539
        %v4542 = vsel %vm4488, %v4468, %v4541
        %v4543 = vrot.slane %v4469, 7
        %v4544 = vsel %vm4491, %v4543, %v4542
        %v4545 = vrot.slane %v4470, 6
        %v4546 = vsel %vm4494, %v4545, %v4544
        %v4547 = vrot.slane %v4471, 5
        %v4548 = vsel %vm4497, %v4547, %v4546
        %v4549 = vrot.slane %v4472, 4
        %v4550 = vsel %vm4500, %v4549, %v4548
        %4551 = vrot.lane.b32.xlu0 %v4550, 48
        %v4552 = vpop.permute.xlu0 %4551
        %v4554 = vrot.slane %v4465, 4
        %v4555 = vrot.slane %v4466, 3
        %v4556 = vsel %vm4482, %v4555, %v4554
        %v4557 = vrot.slane %v4467, 2
        %v4558 = vsel %vm4485, %v4557, %v4556
        %v4559 = vrot.slane %v4468, 1
        %v4560 = vsel %vm4488, %v4559, %v4558
        %v4561 = vsel %vm4491, %v4469, %v4560
        %v4562 = vrot.slane %v4470, 7
        %v4563 = vsel %vm4494, %v4562, %v4561
        %v4564 = vrot.slane %v4471, 6
        %v4565 = vsel %vm4497, %v4564, %v4563
        %v4566 = vrot.slane %v4472, 5
        %v4567 = vsel %vm4500, %v4566, %v4565
        %4568 = vrot.lane.b32.xlu0 %v4567, 64
        %v4569 = vpop.permute.xlu0 %4568
        %v4571 = vrot.slane %v4465, 5
        %v4572 = vrot.slane %v4466, 4
        %v4573 = vsel %vm4482, %v4572, %v4571
        %v4574 = vrot.slane %v4467, 3
        %v4575 = vsel %vm4485, %v4574, %v4573
        %v4576 = vrot.slane %v4468, 2
        %v4577 = vsel %vm4488, %v4576, %v4575
        %v4578 = vrot.slane %v4469, 1
        %v4579 = vsel %vm4491, %v4578, %v4577
        %v4580 = vsel %vm4494, %v4470, %v4579
        %v4581 = vrot.slane %v4471, 7
        %v4582 = vsel %vm4497, %v4581, %v4580
        %v4583 = vrot.slane %v4472, 6
        %v4584 = vsel %vm4500, %v4583, %v4582
        %4585 = vrot.lane.b32.xlu0 %v4584, 80
        %v4586 = vpop.permute.xlu0 %4585
        %v4588 = vrot.slane %v4465, 6
        %v4589 = vrot.slane %v4466, 5
        %v4590 = vsel %vm4482, %v4589, %v4588
        %v4591 = vrot.slane %v4467, 4
        %v4592 = vsel %vm4485, %v4591, %v4590
        %v4593 = vrot.slane %v4468, 3
        %v4594 = vsel %vm4488, %v4593, %v4592
        %v4595 = vrot.slane %v4469, 2
        %v4596 = vsel %vm4491, %v4595, %v4594
        %v4597 = vrot.slane %v4470, 1
        %v4598 = vsel %vm4494, %v4597, %v4596
        %v4599 = vsel %vm4497, %v4471, %v4598
        %v4600 = vrot.slane %v4472, 7
        %v4601 = vsel %vm4500, %v4600, %v4599
        %4602 = vrot.lane.b32.xlu0 %v4601, 96
        %v4603 = vpop.permute.xlu0 %4602
        %v4605 = vrot.slane %v4465, 7
        %v4606 = vrot.slane %v4466, 6
        %v4607 = vsel %vm4482, %v4606, %v4605
        %v4608 = vrot.slane %v4467, 5
        %v4609 = vsel %vm4485, %v4608, %v4607
        %v4610 = vrot.slane %v4468, 4
        %v4611 = vsel %vm4488, %v4610, %v4609
        %v4612 = vrot.slane %v4469, 3
        %v4613 = vsel %vm4491, %v4612, %v4611
        %v4614 = vrot.slane %v4470, 2
        %v4615 = vsel %vm4494, %v4614, %v4613
        %v4616 = vrot.slane %v4471, 1
        %v4617 = vsel %vm4497, %v4616, %v4615
        %v4618 = vsel %vm4500, %v4472, %v4617
        %4619 = vrot.lane.b32.xlu0 %v4618, 112
        %v4620 = vpop.permute.xlu0 %4619
        %v4622 = vsel %vm1755, %v4501, %v4518
        %v4623 = vsel %vm1887, %v4622, %v4535
        %v4624 = vsel %vm3852, %v4623, %v4552
        %v4625 = vsel %vm3918, %v4624, %v4569
        %vm4626 = vcmask 654336
        %v4627 = vsel %vm4626, %v4625, %v4586
        %vm4628 = vcmask 785408
        %v4629 = vsel %vm4628, %v4627, %v4603
        %vm4630 = vcmask 916480
        %v4631 = vsel %vm4630, %v4629, %v4620
        %4632 = vst [vmem:[%s217] sm:$0xff] %v4631
        %s4633 = sand.u32 %s137, 1
        %s4634 = scalar_lea.sflag [#allocation7], %s4633
        %s4635 = sand.u32 %s137, 1
        %s4636 = smul.addr %s4635, 8
        %s4637 = scalar_lea.vmem [#allocation6], %s4636
        // Predicated region
        $region41: #{tpu_custom_call.1} parent=39 // pred_check
          %p4638 = pneg %p147
        $region42: #{tpu_custom_call.1} parent=39 // pred_check_branch
          %4640 = sbr.rel (%p4638) target = $region44
        $region43: #{tpu_custom_call.1} parent=39 // pred_region
          %s4642 = ssub.s32 128, 128
          %4643 = vsyncadd %s4634, %s4642
          %s4644 = smul.addr %s19, 128
          %s4645 = scalar_lea.hbm %s5, %s4644
          %s4647 = sshll.u32 %s4637, 4
          %s4648 = int_to_ptr.vmem [resolvable:$true] %s4647
          %4650 = dma.vmem_to_hbm [thread:$0]  %s4648, 128, %s4645, %s4634
        $region44: #{tpu_custom_call.1} parent=39 // pred_fallthru
          _
      $region40: #{tpu_custom_call.1} parent=5 // pred_fallthru
        _
      %p4651 = scmp.le.s32.totalorder 2, %s14
      // Predicated region
      $region45: #{tpu_custom_call.1} parent=5 // pred_check
        %p4652 = pneg %p4651
      $region46: #{tpu_custom_call.1} parent=5 // pred_check_branch
        %4654 = sbr.rel (%p4652) target = $region48
      $region47: #{tpu_custom_call.1} parent=5 // pred_region
        %s4655 = ssub.s32 %s14, 2
        // Predicated region
        $region49: #{tpu_custom_call.1} parent=47 // pred_check
          %p4656 = pneg %p153
        $region50: #{tpu_custom_call.1} parent=47 // pred_check_branch
          %4658 = sbr.rel (%p4656) target = $region52
        $region51: #{tpu_custom_call.1} parent=47 // pred_region
          %s4659 = sand.u32 %s138, 1
          %s4660 = scalar_lea.sflag [#allocation7], %s4659
          %s4661 = sand.u32 %s138, 1
          %s4662 = smul.addr %s4661, 8
          %s4663 = scalar_lea.vmem [#allocation6], %s4662
          %4664 = dma.done %s4660, 128
        $region52: #{tpu_custom_call.1} parent=47 // pred_fallthru
          _
      $region48: #{tpu_custom_call.1} parent=5 // pred_fallthru
        _
    $region6: #{tpu_custom_call.1} parent=1 // loop_footer
      %s18 = sadd.s32 1, %s14
    $region7: #{tpu_custom_call.1} parent=1 // loop_footer_branch
      %13 = sbr.rel target = $region3
    $region8: #{tpu_custom_call.1} parent=1 // loop_exit
      _
    %4665 = vsyncpa [#allocation7], 1
    %s4666 = scalar_lea.sflag [#allocation7], 1
    %4667 = vsyncpa %s4666, 1

</llo_original>
